<compile_context>
chip_gen: v7x
topology: tpu7x:2x2x1
jax: 0.10.0
libtpu: 0.0.40
codegen_flags: <defaults>
</compile_context>

<pallas_src>
import functools

import jax
import jax.numpy as jnp
from jax import lax
from jax.experimental import pallas as pl
from jax.experimental.pallas import tpu as pltpu


# -----------------------------------------------------------------------------
# Pallas kernel
# -----------------------------------------------------------------------------
def translator_kernel(src_ref, tgt_ref,
                      w_ih_e_ref, w_hh_e_ref, b_e_ref,
                      w_ih_d_ref, w_hh_d_ref, b_d_ref,
                      w_lin_ref, b_lin_ref,
                      w_proj_ref, b_proj_ref,
                      out_ref,
                      xe_scr, xd_scr, h_scr,
                      *, batch):
    B = batch
    SsB, H = src_ref.shape          # (Ss*B, H), time-major flattened
    StB = tgt_ref.shape[0]          # (St*B, H)
    Ss = SsB // B
    St = StB // B

    # Recurrent weights, loaded once.
    w_hh_e = w_hh_e_ref[...]        # (H, 4H)
    w_hh_d = w_hh_d_ref[...]        # (H, 4H)

    # ---- Hoisted input projections (one big MXU matmul each, biases folded) ----
    xe_scr[...] = (jnp.dot(src_ref[...], w_ih_e_ref[...],
                           preferred_element_type=jnp.float32)
                   + b_e_ref[...])                     # (Ss*B, 4H)
    xd_scr[...] = (jnp.dot(tgt_ref[...], w_ih_d_ref[...],
                           preferred_element_type=jnp.float32)
                   + b_d_ref[...])                     # (St*B, 4H)

    def step(x_gates, h, c, w_hh):
        # PyTorch gate order: i, f, g, o.  Only the (B,H)x(H,4H) hidden matmul
        # remains on the recurrent critical path.
        gates = x_gates + jnp.dot(h, w_hh, preferred_element_type=jnp.float32)
        i = jax.nn.sigmoid(gates[:, 0 * H:1 * H])
        f = jax.nn.sigmoid(gates[:, 1 * H:2 * H])
        g = jnp.tanh(gates[:, 2 * H:3 * H])
        o = jax.nn.sigmoid(gates[:, 3 * H:4 * H])
        c_new = f * c + i * g
        h_new = o * jnp.tanh(c_new)
        return h_new, c_new

    h0 = jnp.zeros((B, H), jnp.float32)
    c0 = jnp.zeros((B, H), jnp.float32)

    # ---------------- Encoder over the source sequence --------------------
    def enc_body(t, carry):
        h, c = carry
        row = pl.multiple_of(t * B, B)
        x_g = xe_scr[pl.ds(row, B), :]                 # (B, 4H)
        return step(x_g, h, c, w_hh_e)

    h_enc, c_enc = lax.fori_loop(0, Ss, enc_body, (h0, c0), unroll=True)

    # ---------------- Decoder over the target sequence --------------------
    def dec_body(t, carry):
        h, c = carry
        row = pl.multiple_of(t * B, B)
        x_g = xd_scr[pl.ds(row, B), :]                 # (B, 4H)
        h_new, c_new = step(x_g, h, c, w_hh_d)
        h_scr[pl.ds(row, B), :] = h_new                # stash hidden state
        return (h_new, c_new)

    lax.fori_loop(0, St, dec_body, (h_enc, c_enc), unroll=True)

    # -------- Output head off the recurrent path: M = St*B matmuls --------
    h_all = h_scr[...]                                 # (St*B, H)
    lin = jnp.tanh(jnp.dot(h_all, w_lin_ref[...],
                           preferred_element_type=jnp.float32)
                   + b_lin_ref[...])
    # dropout(p=0) == identity
    out_ref[...] = (jnp.dot(lin, w_proj_ref[...],
                            preferred_element_type=jnp.float32)
                    + b_proj_ref[...])                 # single dense slab store


# -----------------------------------------------------------------------------
# Wrapper: time-major embedding gathers (glue) + pallas_call
# -----------------------------------------------------------------------------
def translator_forward(source, target, params):
    B, Ss = source.shape
    St = target.shape[1]
    H = params["emb_src"].shape[1]
    V = params["w_proj"].shape[0]

    # Gather directly in time-major, flattened order (t-major, then batch).
    src_2d = params["emb_src"][source.T.reshape(-1)]   # (Ss*B, H)
    tgt_2d = params["emb_tgt"][target.T.reshape(-1)]   # (St*B, H)

    vmem = pl.BlockSpec(memory_space=pltpu.MemorySpace.VMEM)
    out_2d = pl.pallas_call(
        functools.partial(translator_kernel, batch=B),
        out_shape=jax.ShapeDtypeStruct((St * B, V), jnp.float32),
        in_specs=[vmem] * 12,
        out_specs=vmem,
        scratch_shapes=[
            pltpu.VMEM((Ss * B, 4 * H), jnp.float32),  # encoder input gates
            pltpu.VMEM((St * B, 4 * H), jnp.float32),  # decoder input gates
            pltpu.VMEM((St * B, H), jnp.float32),      # decoder hidden states
        ],
    )(
        src_2d, tgt_2d,
        params["w_ih_e"].T, params["w_hh_e"].T,
        (params["b_ih_e"] + params["b_hh_e"])[None, :],
        params["w_ih_d"].T, params["w_hh_d"].T,
        (params["b_ih_d"] + params["b_hh_d"])[None, :],
        params["w_lin"].T, params["b_lin"][None, :],
        params["w_proj"].T, params["b_proj"][None, :],
    )
    # (St*B, V) time-major -> (B, St, V) batch-first (tiny, done in XLA).
    return jnp.transpose(out_2d.reshape(St, B, V), (1, 0, 2))


# -----------------------------------------------------------------------------
# Pure-JAX reference (mirrors the PyTorch forward) for a correctness check
# -----------------------------------------------------------------------------
def translator_reference(source, target, params):
    H = params["emb_src"].shape[1]

    def cell(x, h, c, w_ih, w_hh, b_ih, b_hh):
        gates = x @ w_ih.T + b_ih + h @ w_hh.T + b_hh
        i, f, g, o = jnp.split(gates, 4, axis=-1)
        i, f, o = jax.nn.sigmoid(i), jax.nn.sigmoid(f), jax.nn.sigmoid(o)
        g = jnp.tanh(g)
        c_new = f * c + i * g
        return o * jnp.tanh(c_new), c_new

    src_emb = params["emb_src"][source]
    tgt_emb = params["emb_tgt"][target]
    B = src_emb.shape[0]
    h = jnp.zeros((B, H), jnp.float32)
    c = jnp.zeros((B, H), jnp.float32)
    for t in range(src_emb.shape[1]):
        h, c = cell(src_emb[:, t], h, c,
                    params["w_ih_e"], params["w_hh_e"],
                    params["b_ih_e"], params["b_hh_e"])
    outs = []
    for t in range(tgt_emb.shape[1]):
        h, c = cell(tgt_emb[:, t], h, c,
                    params["w_ih_d"], params["w_hh_d"],
                    params["b_ih_d"], params["b_hh_d"])
        lin = jnp.tanh(h @ params["w_lin"].T + params["b_lin"])
        outs.append(lin @ params["w_proj"].T + params["b_proj"])
    return jnp.stack(outs, axis=1)


# -----------------------------------------------------------------------------
# Deterministic parameter init + run
# -----------------------------------------------------------------------------
def make_params(key, src_vocab, tgt_vocab, hidden):
    ks = jax.random.split(key, 14)
    u = lambda k, shape, s: jax.random.uniform(k, shape, jnp.float32, -s, s)
    s = 1.0 / jnp.sqrt(hidden)
    return {
        "emb_src": jax.random.normal(ks[0], (src_vocab, hidden), jnp.float32),
        "emb_tgt": jax.random.normal(ks[1], (tgt_vocab, hidden), jnp.float32),
        "w_ih_e": u(ks[2], (4 * hidden, hidden), s),
        "w_hh_e": u(ks[3], (4 * hidden, hidden), s),
        "b_ih_e": u(ks[4], (4 * hidden,), s),
        "b_hh_e": u(ks[5], (4 * hidden,), s),
        "w_ih_d": u(ks[6], (4 * hidden, hidden), s),
        "w_hh_d": u(ks[7], (4 * hidden, hidden), s),
        "b_ih_d": u(ks[8], (4 * hidden,), s),
        "b_hh_d": u(ks[9], (4 * hidden,), s),
        "w_lin": u(ks[10], (hidden, hidden), s),
        "b_lin": u(ks[11], (hidden,), s),
        "w_proj": u(ks[12], (tgt_vocab, hidden), s),
        "b_proj": u(ks[13], (tgt_vocab,), s),
    }


if __name__ == "__main__":
    SRC_VOCAB, TGT_VOCAB, HIDDEN = 64, 128, 128
    BATCH, SRC_LEN, TGT_LEN = 8, 8, 8   # BATCH=8 keeps every slab sublane-dense

    key = jax.random.PRNGKey(0)
    kp, ksrc, ktgt = jax.random.split(key, 3)
    params = make_params(kp, SRC_VOCAB, TGT_VOCAB, HIDDEN)

    source = jax.random.randint(ksrc, (BATCH, SRC_LEN), 0, SRC_VOCAB)
    target = jax.random.randint(ktgt, (BATCH, TGT_LEN), 0, TGT_VOCAB)

    out = translator_forward(source, target, params)
    out = jax.block_until_ready(out)

    ref = translator_reference(source, target, params)
    assert out.shape == (BATCH, TGT_LEN, TGT_VOCAB)
    assert jnp.allclose(out, ref, atol=1e-4, rtol=1e-4)
    print("KERNEL_OK")
</pallas_src>

<mosaic_0001>
module attributes {stable_mosaic.version = 11 : i64} {
  func.func @translator_kernel(%arg0: memref<64x128xf32, #tpu.memory_space<vmem>>, %arg1: memref<64x128xf32, #tpu.memory_space<vmem>>, %arg2: memref<128x512xf32, #tpu.memory_space<vmem>>, %arg3: memref<128x512xf32, #tpu.memory_space<vmem>>, %arg4: memref<1x512xf32, #tpu.memory_space<vmem>>, %arg5: memref<128x512xf32, #tpu.memory_space<vmem>>, %arg6: memref<128x512xf32, #tpu.memory_space<vmem>>, %arg7: memref<1x512xf32, #tpu.memory_space<vmem>>, %arg8: memref<128x128xf32, #tpu.memory_space<vmem>>, %arg9: memref<1x128xf32, #tpu.memory_space<vmem>>, %arg10: memref<128x128xf32, #tpu.memory_space<vmem>>, %arg11: memref<1x128xf32, #tpu.memory_space<vmem>>, %arg12: memref<64x128xf32, #tpu.memory_space<vmem>>, %arg13: memref<64x512xf32, #tpu.memory_space<vmem>>, %arg14: memref<64x512xf32, #tpu.memory_space<vmem>>, %arg15: memref<64x128xf32, #tpu.memory_space<vmem>>) attributes {dimension_semantics = [], scalar_prefetch = 0 : i64, scratch_operands = 3 : i64, tpu.core_type = #tpu.core_type<tc>} {
    %c0 = arith.constant 0 : index
    %c0_0 = arith.constant 0 : index
    %0 = vector.load %arg3[%c0, %c0_0] : memref<128x512xf32, #tpu.memory_space<vmem>>, vector<128x512xf32>
    %c0_1 = arith.constant 0 : index
    %c0_2 = arith.constant 0 : index
    %1 = vector.load %arg6[%c0_1, %c0_2] : memref<128x512xf32, #tpu.memory_space<vmem>>, vector<128x512xf32>
    %c0_3 = arith.constant 0 : index
    %c0_4 = arith.constant 0 : index
    %2 = vector.load %arg0[%c0_3, %c0_4] : memref<64x128xf32, #tpu.memory_space<vmem>>, vector<64x128xf32>
    %c0_5 = arith.constant 0 : index
    %c0_6 = arith.constant 0 : index
    %3 = vector.load %arg2[%c0_5, %c0_6] : memref<128x512xf32, #tpu.memory_space<vmem>>, vector<128x512xf32>
    %cst = arith.constant dense<0.000000e+00> : vector<64x512xf32>
    %4 = tpu.matmul %2, %3, %cst {dimension_numbers = #tpu.dot_dimension_numbers<[1], [0], [0], [1], [0, 0, 1, 1], [], []>} : vector<64x128xf32>, vector<128x512xf32>, vector<64x512xf32> -> vector<64x512xf32>
    %c0_7 = arith.constant 0 : index
    %c0_8 = arith.constant 0 : index
    %5 = vector.load %arg4[%c0_7, %c0_8] : memref<1x512xf32, #tpu.memory_space<vmem>>, vector<1x512xf32>
    %6 = vector.broadcast %5 : vector<1x512xf32> to vector<64x512xf32>
    %7 = arith.addf %4, %6 : vector<64x512xf32>
    %c0_9 = arith.constant 0 : index
    %c0_10 = arith.constant 0 : index
    %8 = vector.load %arg13[%c0_9, %c0_10] : memref<64x512xf32, #tpu.memory_space<vmem>>, vector<64x512xf32>
    tpu.vector_store %arg13[%c0_9, %c0_10], %7 {strides = array<i32>} : memref<64x512xf32, #tpu.memory_space<vmem>>, vector<64x512xf32>,
    %c0_11 = arith.constant 0 : index
    %c0_12 = arith.constant 0 : index
    %9 = vector.load %arg1[%c0_11, %c0_12] : memref<64x128xf32, #tpu.memory_space<vmem>>, vector<64x128xf32>
    %c0_13 = arith.constant 0 : index
    %c0_14 = arith.constant 0 : index
    %10 = vector.load %arg5[%c0_13, %c0_14] : memref<128x512xf32, #tpu.memory_space<vmem>>, vector<128x512xf32>
    %cst_15 = arith.constant dense<0.000000e+00> : vector<64x512xf32>
    %11 = tpu.matmul %9, %10, %cst_15 {dimension_numbers = #tpu.dot_dimension_numbers<[1], [0], [0], [1], [0, 0, 1, 1], [], []>} : vector<64x128xf32>, vector<128x512xf32>, vector<64x512xf32> -> vector<64x512xf32>
    %c0_16 = arith.constant 0 : index
    %c0_17 = arith.constant 0 : index
    %12 = vector.load %arg7[%c0_16, %c0_17] : memref<1x512xf32, #tpu.memory_space<vmem>>, vector<1x512xf32>
    %13 = vector.broadcast %12 : vector<1x512xf32> to vector<64x512xf32>
    %14 = arith.addf %11, %13 : vector<64x512xf32>
    %c0_18 = arith.constant 0 : index
    %c0_19 = arith.constant 0 : index
    %15 = vector.load %arg14[%c0_18, %c0_19] : memref<64x512xf32, #tpu.memory_space<vmem>>, vector<64x512xf32>
    tpu.vector_store %arg14[%c0_18, %c0_19], %14 {strides = array<i32>} : memref<64x512xf32, #tpu.memory_space<vmem>>, vector<64x512xf32>,
    %cst_20 = arith.constant 0.000000e+00 : f32
    %16 = vector.broadcast %cst_20 : f32 to vector<8x128xf32>
    %cst_21 = arith.constant 0.000000e+00 : f32
    %17 = vector.broadcast %cst_21 : f32 to vector<8x128xf32>
    %c0_i32 = arith.constant 0 : i32
    %c8_i32 = arith.constant 8 : i32
    %18 = arith.muli %c0_i32, %c8_i32 : i32
    %19 = tpu.assume_multiple %18, 8 : i32
    %20 = arith.index_cast %19 : i32 to index
    %c0_22 = arith.constant 0 : index
    %21 = vector.load %arg13[%20, %c0_22] : memref<64x512xf32, #tpu.memory_space<vmem>>, vector<8x512xf32>
    %cst_23 = arith.constant dense<0.000000e+00> : vector<8x512xf32>
    %22 = tpu.matmul %16, %0, %cst_23 {dimension_numbers = #tpu.dot_dimension_numbers<[1], [0], [0], [1], [0, 0, 1, 1], [], []>} : vector<8x128xf32>, vector<128x512xf32>, vector<8x512xf32> -> vector<8x512xf32>
    %23 = arith.addf %21, %22 : vector<8x512xf32>
    %24 = vector.extract_strided_slice %23 {offsets = [0, 0], sizes = [8, 128], strides = [1, 1]} : vector<8x512xf32> to vector<8x128xf32>
    %25 = arith.negf %24 : vector<8x128xf32>
    %26 = math.exp %25 : vector<8x128xf32>
    %cst_24 = arith.constant 1.000000e+00 : f32
    %27 = vector.broadcast %cst_24 : f32 to vector<8x128xf32>
    %28 = arith.addf %27, %26 : vector<8x128xf32>
    %29 = arith.divf %27, %28 : vector<8x128xf32>
    %30 = vector.extract_strided_slice %23 {offsets = [0, 128], sizes = [8, 128], strides = [1, 1]} : vector<8x512xf32> to vector<8x128xf32>
    %31 = arith.negf %30 : vector<8x128xf32>
    %32 = math.exp %31 : vector<8x128xf32>
    %cst_25 = arith.constant 1.000000e+00 : f32
    %33 = vector.broadcast %cst_25 : f32 to vector<8x128xf32>
    %34 = arith.addf %33, %32 : vector<8x128xf32>
    %35 = arith.divf %33, %34 : vector<8x128xf32>
    %36 = vector.extract_strided_slice %23 {offsets = [0, 256], sizes = [8, 128], strides = [1, 1]} : vector<8x512xf32> to vector<8x128xf32>
    %37 = math.tanh %36 : vector<8x128xf32>
    %38 = vector.extract_strided_slice %23 {offsets = [0, 384], sizes = [8, 128], strides = [1, 1]} : vector<8x512xf32> to vector<8x128xf32>
    %39 = arith.negf %38 : vector<8x128xf32>
    %40 = math.exp %39 : vector<8x128xf32>
    %cst_26 = arith.constant 1.000000e+00 : f32
    %41 = vector.broadcast %cst_26 : f32 to vector<8x128xf32>
    %42 = arith.addf %41, %40 : vector<8x128xf32>
    %43 = arith.divf %41, %42 : vector<8x128xf32>
    %44 = arith.mulf %35, %17 : vector<8x128xf32>
    %45 = arith.mulf %29, %37 : vector<8x128xf32>
    %46 = arith.addf %44, %45 : vector<8x128xf32>
    %47 = math.tanh %46 : vector<8x128xf32>
    %48 = arith.mulf %43, %47 : vector<8x128xf32>
    %c1_i32 = arith.constant 1 : i32
    %c8_i32_27 = arith.constant 8 : i32
    %49 = arith.muli %c1_i32, %c8_i32_27 : i32
    %50 = tpu.assume_multiple %49, 8 : i32
    %51 = arith.index_cast %50 : i32 to index
    %c0_28 = arith.constant 0 : index
    %52 = vector.load %arg13[%51, %c0_28] : memref<64x512xf32, #tpu.memory_space<vmem>>, vector<8x512xf32>
    %cst_29 = arith.constant dense<0.000000e+00> : vector<8x512xf32>
    %53 = tpu.matmul %48, %0, %cst_29 {dimension_numbers = #tpu.dot_dimension_numbers<[1], [0], [0], [1], [0, 0, 1, 1], [], []>} : vector<8x128xf32>, vector<128x512xf32>, vector<8x512xf32> -> vector<8x512xf32>
    %54 = arith.addf %52, %53 : vector<8x512xf32>
    %55 = vector.extract_strided_slice %54 {offsets = [0, 0], sizes = [8, 128], strides = [1, 1]} : vector<8x512xf32> to vector<8x128xf32>
    %56 = arith.negf %55 : vector<8x128xf32>
    %57 = math.exp %56 : vector<8x128xf32>
    %cst_30 = arith.constant 1.000000e+00 : f32
    %58 = vector.broadcast %cst_30 : f32 to vector<8x128xf32>
    %59 = arith.addf %58, %57 : vector<8x128xf32>
    %60 = arith.divf %58, %59 : vector<8x128xf32>
    %61 = vector.extract_strided_slice %54 {offsets = [0, 128], sizes = [8, 128], strides = [1, 1]} : vector<8x512xf32> to vector<8x128xf32>
    %62 = arith.negf %61 : vector<8x128xf32>
    %63 = math.exp %62 : vector<8x128xf32>
    %cst_31 = arith.constant 1.000000e+00 : f32
    %64 = vector.broadcast %cst_31 : f32 to vector<8x128xf32>
    %65 = arith.addf %64, %63 : vector<8x128xf32>
    %66 = arith.divf %64, %65 : vector<8x128xf32>
    %67 = vector.extract_strided_slice %54 {offsets = [0, 256], sizes = [8, 128], strides = [1, 1]} : vector<8x512xf32> to vector<8x128xf32>
    %68 = math.tanh %67 : vector<8x128xf32>
    %69 = vector.extract_strided_slice %54 {offsets = [0, 384], sizes = [8, 128], strides = [1, 1]} : vector<8x512xf32> to vector<8x128xf32>
    %70 = arith.negf %69 : vector<8x128xf32>
    %71 = math.exp %70 : vector<8x128xf32>
    %cst_32 = arith.constant 1.000000e+00 : f32
    %72 = vector.broadcast %cst_32 : f32 to vector<8x128xf32>
    %73 = arith.addf %72, %71 : vector<8x128xf32>
    %74 = arith.divf %72, %73 : vector<8x128xf32>
    %75 = arith.mulf %66, %46 : vector<8x128xf32>
    %76 = arith.mulf %60, %68 : vector<8x128xf32>
    %77 = arith.addf %75, %76 : vector<8x128xf32>
    %78 = math.tanh %77 : vector<8x128xf32>
    %79 = arith.mulf %74, %78 : vector<8x128xf32>
    %c2_i32 = arith.constant 2 : i32
    %c8_i32_33 = arith.constant 8 : i32
    %80 = arith.muli %c2_i32, %c8_i32_33 : i32
    %81 = tpu.assume_multiple %80, 8 : i32
    %82 = arith.index_cast %81 : i32 to index
    %c0_34 = arith.constant 0 : index
    %83 = vector.load %arg13[%82, %c0_34] : memref<64x512xf32, #tpu.memory_space<vmem>>, vector<8x512xf32>
    %cst_35 = arith.constant dense<0.000000e+00> : vector<8x512xf32>
    %84 = tpu.matmul %79, %0, %cst_35 {dimension_numbers = #tpu.dot_dimension_numbers<[1], [0], [0], [1], [0, 0, 1, 1], [], []>} : vector<8x128xf32>, vector<128x512xf32>, vector<8x512xf32> -> vector<8x512xf32>
    %85 = arith.addf %83, %84 : vector<8x512xf32>
    %86 = vector.extract_strided_slice %85 {offsets = [0, 0], sizes = [8, 128], strides = [1, 1]} : vector<8x512xf32> to vector<8x128xf32>
    %87 = arith.negf %86 : vector<8x128xf32>
    %88 = math.exp %87 : vector<8x128xf32>
    %cst_36 = arith.constant 1.000000e+00 : f32
    %89 = vector.broadcast %cst_36 : f32 to vector<8x128xf32>
    %90 = arith.addf %89, %88 : vector<8x128xf32>
    %91 = arith.divf %89, %90 : vector<8x128xf32>
    %92 = vector.extract_strided_slice %85 {offsets = [0, 128], sizes = [8, 128], strides = [1, 1]} : vector<8x512xf32> to vector<8x128xf32>
    %93 = arith.negf %92 : vector<8x128xf32>
    %94 = math.exp %93 : vector<8x128xf32>
    %cst_37 = arith.constant 1.000000e+00 : f32
    %95 = vector.broadcast %cst_37 : f32 to vector<8x128xf32>
    %96 = arith.addf %95, %94 : vector<8x128xf32>
    %97 = arith.divf %95, %96 : vector<8x128xf32>
    %98 = vector.extract_strided_slice %85 {offsets = [0, 256], sizes = [8, 128], strides = [1, 1]} : vector<8x512xf32> to vector<8x128xf32>
    %99 = math.tanh %98 : vector<8x128xf32>
    %100 = vector.extract_strided_slice %85 {offsets = [0, 384], sizes = [8, 128], strides = [1, 1]} : vector<8x512xf32> to vector<8x128xf32>
    %101 = arith.negf %100 : vector<8x128xf32>
    %102 = math.exp %101 : vector<8x128xf32>
    %cst_38 = arith.constant 1.000000e+00 : f32
    %103 = vector.broadcast %cst_38 : f32 to vector<8x128xf32>
    %104 = arith.addf %103, %102 : vector<8x128xf32>
    %105 = arith.divf %103, %104 : vector<8x128xf32>
    %106 = arith.mulf %97, %77 : vector<8x128xf32>
    %107 = arith.mulf %91, %99 : vector<8x128xf32>
    %108 = arith.addf %106, %107 : vector<8x128xf32>
    %109 = math.tanh %108 : vector<8x128xf32>
    %110 = arith.mulf %105, %109 : vector<8x128xf32>
    %c3_i32 = arith.constant 3 : i32
    %c8_i32_39 = arith.constant 8 : i32
    %111 = arith.muli %c3_i32, %c8_i32_39 : i32
    %112 = tpu.assume_multiple %111, 8 : i32
    %113 = arith.index_cast %112 : i32 to index
    %c0_40 = arith.constant 0 : index
    %114 = vector.load %arg13[%113, %c0_40] : memref<64x512xf32, #tpu.memory_space<vmem>>, vector<8x512xf32>
    %cst_41 = arith.constant dense<0.000000e+00> : vector<8x512xf32>
    %115 = tpu.matmul %110, %0, %cst_41 {dimension_numbers = #tpu.dot_dimension_numbers<[1], [0], [0], [1], [0, 0, 1, 1], [], []>} : vector<8x128xf32>, vector<128x512xf32>, vector<8x512xf32> -> vector<8x512xf32>
    %116 = arith.addf %114, %115 : vector<8x512xf32>
    %117 = vector.extract_strided_slice %116 {offsets = [0, 0], sizes = [8, 128], strides = [1, 1]} : vector<8x512xf32> to vector<8x128xf32>
    %118 = arith.negf %117 : vector<8x128xf32>
    %119 = math.exp %118 : vector<8x128xf32>
    %cst_42 = arith.constant 1.000000e+00 : f32
    %120 = vector.broadcast %cst_42 : f32 to vector<8x128xf32>
    %121 = arith.addf %120, %119 : vector<8x128xf32>
    %122 = arith.divf %120, %121 : vector<8x128xf32>
    %123 = vector.extract_strided_slice %116 {offsets = [0, 128], sizes = [8, 128], strides = [1, 1]} : vector<8x512xf32> to vector<8x128xf32>
    %124 = arith.negf %123 : vector<8x128xf32>
    %125 = math.exp %124 : vector<8x128xf32>
    %cst_43 = arith.constant 1.000000e+00 : f32
    %126 = vector.broadcast %cst_43 : f32 to vector<8x128xf32>
    %127 = arith.addf %126, %125 : vector<8x128xf32>
    %128 = arith.divf %126, %127 : vector<8x128xf32>
    %129 = vector.extract_strided_slice %116 {offsets = [0, 256], sizes = [8, 128], strides = [1, 1]} : vector<8x512xf32> to vector<8x128xf32>
    %130 = math.tanh %129 : vector<8x128xf32>
    %131 = vector.extract_strided_slice %116 {offsets = [0, 384], sizes = [8, 128], strides = [1, 1]} : vector<8x512xf32> to vector<8x128xf32>
    %132 = arith.negf %131 : vector<8x128xf32>
    %133 = math.exp %132 : vector<8x128xf32>
    %cst_44 = arith.constant 1.000000e+00 : f32
    %134 = vector.broadcast %cst_44 : f32 to vector<8x128xf32>
    %135 = arith.addf %134, %133 : vector<8x128xf32>
    %136 = arith.divf %134, %135 : vector<8x128xf32>
    %137 = arith.mulf %128, %108 : vector<8x128xf32>
    %138 = arith.mulf %122, %130 : vector<8x128xf32>
    %139 = arith.addf %137, %138 : vector<8x128xf32>
    %140 = math.tanh %139 : vector<8x128xf32>
    %141 = arith.mulf %136, %140 : vector<8x128xf32>
    %c4_i32 = arith.constant 4 : i32
    %c8_i32_45 = arith.constant 8 : i32
    %142 = arith.muli %c4_i32, %c8_i32_45 : i32
    %143 = tpu.assume_multiple %142, 8 : i32
    %144 = arith.index_cast %143 : i32 to index
    %c0_46 = arith.constant 0 : index
    %145 = vector.load %arg13[%144, %c0_46] : memref<64x512xf32, #tpu.memory_space<vmem>>, vector<8x512xf32>
    %cst_47 = arith.constant dense<0.000000e+00> : vector<8x512xf32>
    %146 = tpu.matmul %141, %0, %cst_47 {dimension_numbers = #tpu.dot_dimension_numbers<[1], [0], [0], [1], [0, 0, 1, 1], [], []>} : vector<8x128xf32>, vector<128x512xf32>, vector<8x512xf32> -> vector<8x512xf32>
    %147 = arith.addf %145, %146 : vector<8x512xf32>
    %148 = vector.extract_strided_slice %147 {offsets = [0, 0], sizes = [8, 128], strides = [1, 1]} : vector<8x512xf32> to vector<8x128xf32>
    %149 = arith.negf %148 : vector<8x128xf32>
    %150 = math.exp %149 : vector<8x128xf32>
    %cst_48 = arith.constant 1.000000e+00 : f32
    %151 = vector.broadcast %cst_48 : f32 to vector<8x128xf32>
    %152 = arith.addf %151, %150 : vector<8x128xf32>
    %153 = arith.divf %151, %152 : vector<8x128xf32>
    %154 = vector.extract_strided_slice %147 {offsets = [0, 128], sizes = [8, 128], strides = [1, 1]} : vector<8x512xf32> to vector<8x128xf32>
    %155 = arith.negf %154 : vector<8x128xf32>
    %156 = math.exp %155 : vector<8x128xf32>
    %cst_49 = arith.constant 1.000000e+00 : f32
    %157 = vector.broadcast %cst_49 : f32 to vector<8x128xf32>
    %158 = arith.addf %157, %156 : vector<8x128xf32>
    %159 = arith.divf %157, %158 : vector<8x128xf32>
    %160 = vector.extract_strided_slice %147 {offsets = [0, 256], sizes = [8, 128], strides = [1, 1]} : vector<8x512xf32> to vector<8x128xf32>
    %161 = math.tanh %160 : vector<8x128xf32>
    %162 = vector.extract_strided_slice %147 {offsets = [0, 384], sizes = [8, 128], strides = [1, 1]} : vector<8x512xf32> to vector<8x128xf32>
    %163 = arith.negf %162 : vector<8x128xf32>
    %164 = math.exp %163 : vector<8x128xf32>
    %cst_50 = arith.constant 1.000000e+00 : f32
    %165 = vector.broadcast %cst_50 : f32 to vector<8x128xf32>
    %166 = arith.addf %165, %164 : vector<8x128xf32>
    %167 = arith.divf %165, %166 : vector<8x128xf32>
    %168 = arith.mulf %159, %139 : vector<8x128xf32>
    %169 = arith.mulf %153, %161 : vector<8x128xf32>
    %170 = arith.addf %168, %169 : vector<8x128xf32>
    %171 = math.tanh %170 : vector<8x128xf32>
    %172 = arith.mulf %167, %171 : vector<8x128xf32>
    %c5_i32 = arith.constant 5 : i32
    %c8_i32_51 = arith.constant 8 : i32
    %173 = arith.muli %c5_i32, %c8_i32_51 : i32
    %174 = tpu.assume_multiple %173, 8 : i32
    %175 = arith.index_cast %174 : i32 to index
    %c0_52 = arith.constant 0 : index
    %176 = vector.load %arg13[%175, %c0_52] : memref<64x512xf32, #tpu.memory_space<vmem>>, vector<8x512xf32>
    %cst_53 = arith.constant dense<0.000000e+00> : vector<8x512xf32>
    %177 = tpu.matmul %172, %0, %cst_53 {dimension_numbers = #tpu.dot_dimension_numbers<[1], [0], [0], [1], [0, 0, 1, 1], [], []>} : vector<8x128xf32>, vector<128x512xf32>, vector<8x512xf32> -> vector<8x512xf32>
    %178 = arith.addf %176, %177 : vector<8x512xf32>
    %179 = vector.extract_strided_slice %178 {offsets = [0, 0], sizes = [8, 128], strides = [1, 1]} : vector<8x512xf32> to vector<8x128xf32>
    %180 = arith.negf %179 : vector<8x128xf32>
    %181 = math.exp %180 : vector<8x128xf32>
    %cst_54 = arith.constant 1.000000e+00 : f32
    %182 = vector.broadcast %cst_54 : f32 to vector<8x128xf32>
    %183 = arith.addf %182, %181 : vector<8x128xf32>
    %184 = arith.divf %182, %183 : vector<8x128xf32>
    %185 = vector.extract_strided_slice %178 {offsets = [0, 128], sizes = [8, 128], strides = [1, 1]} : vector<8x512xf32> to vector<8x128xf32>
    %186 = arith.negf %185 : vector<8x128xf32>
    %187 = math.exp %186 : vector<8x128xf32>
    %cst_55 = arith.constant 1.000000e+00 : f32
    %188 = vector.broadcast %cst_55 : f32 to vector<8x128xf32>
    %189 = arith.addf %188, %187 : vector<8x128xf32>
    %190 = arith.divf %188, %189 : vector<8x128xf32>
    %191 = vector.extract_strided_slice %178 {offsets = [0, 256], sizes = [8, 128], strides = [1, 1]} : vector<8x512xf32> to vector<8x128xf32>
    %192 = math.tanh %191 : vector<8x128xf32>
    %193 = vector.extract_strided_slice %178 {offsets = [0, 384], sizes = [8, 128], strides = [1, 1]} : vector<8x512xf32> to vector<8x128xf32>
    %194 = arith.negf %193 : vector<8x128xf32>
    %195 = math.exp %194 : vector<8x128xf32>
    %cst_56 = arith.constant 1.000000e+00 : f32
    %196 = vector.broadcast %cst_56 : f32 to vector<8x128xf32>
    %197 = arith.addf %196, %195 : vector<8x128xf32>
    %198 = arith.divf %196, %197 : vector<8x128xf32>
    %199 = arith.mulf %190, %170 : vector<8x128xf32>
    %200 = arith.mulf %184, %192 : vector<8x128xf32>
    %201 = arith.addf %199, %200 : vector<8x128xf32>
    %202 = math.tanh %201 : vector<8x128xf32>
    %203 = arith.mulf %198, %202 : vector<8x128xf32>
    %c6_i32 = arith.constant 6 : i32
    %c8_i32_57 = arith.constant 8 : i32
    %204 = arith.muli %c6_i32, %c8_i32_57 : i32
    %205 = tpu.assume_multiple %204, 8 : i32
    %206 = arith.index_cast %205 : i32 to index
    %c0_58 = arith.constant 0 : index
    %207 = vector.load %arg13[%206, %c0_58] : memref<64x512xf32, #tpu.memory_space<vmem>>, vector<8x512xf32>
    %cst_59 = arith.constant dense<0.000000e+00> : vector<8x512xf32>
    %208 = tpu.matmul %203, %0, %cst_59 {dimension_numbers = #tpu.dot_dimension_numbers<[1], [0], [0], [1], [0, 0, 1, 1], [], []>} : vector<8x128xf32>, vector<128x512xf32>, vector<8x512xf32> -> vector<8x512xf32>
    %209 = arith.addf %207, %208 : vector<8x512xf32>
    %210 = vector.extract_strided_slice %209 {offsets = [0, 0], sizes = [8, 128], strides = [1, 1]} : vector<8x512xf32> to vector<8x128xf32>
    %211 = arith.negf %210 : vector<8x128xf32>
    %212 = math.exp %211 : vector<8x128xf32>
    %cst_60 = arith.constant 1.000000e+00 : f32
    %213 = vector.broadcast %cst_60 : f32 to vector<8x128xf32>
    %214 = arith.addf %213, %212 : vector<8x128xf32>
    %215 = arith.divf %213, %214 : vector<8x128xf32>
    %216 = vector.extract_strided_slice %209 {offsets = [0, 128], sizes = [8, 128], strides = [1, 1]} : vector<8x512xf32> to vector<8x128xf32>
    %217 = arith.negf %216 : vector<8x128xf32>
    %218 = math.exp %217 : vector<8x128xf32>
    %cst_61 = arith.constant 1.000000e+00 : f32
    %219 = vector.broadcast %cst_61 : f32 to vector<8x128xf32>
    %220 = arith.addf %219, %218 : vector<8x128xf32>
    %221 = arith.divf %219, %220 : vector<8x128xf32>
    %222 = vector.extract_strided_slice %209 {offsets = [0, 256], sizes = [8, 128], strides = [1, 1]} : vector<8x512xf32> to vector<8x128xf32>
    %223 = math.tanh %222 : vector<8x128xf32>
    %224 = vector.extract_strided_slice %209 {offsets = [0, 384], sizes = [8, 128], strides = [1, 1]} : vector<8x512xf32> to vector<8x128xf32>
    %225 = arith.negf %224 : vector<8x128xf32>
    %226 = math.exp %225 : vector<8x128xf32>
    %cst_62 = arith.constant 1.000000e+00 : f32
    %227 = vector.broadcast %cst_62 : f32 to vector<8x128xf32>
    %228 = arith.addf %227, %226 : vector<8x128xf32>
    %229 = arith.divf %227, %228 : vector<8x128xf32>
    %230 = arith.mulf %221, %201 : vector<8x128xf32>
    %231 = arith.mulf %215, %223 : vector<8x128xf32>
    %232 = arith.addf %230, %231 : vector<8x128xf32>
    %233 = math.tanh %232 : vector<8x128xf32>
    %234 = arith.mulf %229, %233 : vector<8x128xf32>
    %c7_i32 = arith.constant 7 : i32
    %c8_i32_63 = arith.constant 8 : i32
    %235 = arith.muli %c7_i32, %c8_i32_63 : i32
    %236 = tpu.assume_multiple %235, 8 : i32
    %237 = arith.index_cast %236 : i32 to index
    %c0_64 = arith.constant 0 : index
    %238 = vector.load %arg13[%237, %c0_64] : memref<64x512xf32, #tpu.memory_space<vmem>>, vector<8x512xf32>
    %cst_65 = arith.constant dense<0.000000e+00> : vector<8x512xf32>
    %239 = tpu.matmul %234, %0, %cst_65 {dimension_numbers = #tpu.dot_dimension_numbers<[1], [0], [0], [1], [0, 0, 1, 1], [], []>} : vector<8x128xf32>, vector<128x512xf32>, vector<8x512xf32> -> vector<8x512xf32>
    %240 = arith.addf %238, %239 : vector<8x512xf32>
    %241 = vector.extract_strided_slice %240 {offsets = [0, 0], sizes = [8, 128], strides = [1, 1]} : vector<8x512xf32> to vector<8x128xf32>
    %242 = arith.negf %241 : vector<8x128xf32>
    %243 = math.exp %242 : vector<8x128xf32>
    %cst_66 = arith.constant 1.000000e+00 : f32
    %244 = vector.broadcast %cst_66 : f32 to vector<8x128xf32>
    %245 = arith.addf %244, %243 : vector<8x128xf32>
    %246 = arith.divf %244, %245 : vector<8x128xf32>
    %247 = vector.extract_strided_slice %240 {offsets = [0, 128], sizes = [8, 128], strides = [1, 1]} : vector<8x512xf32> to vector<8x128xf32>
    %248 = arith.negf %247 : vector<8x128xf32>
    %249 = math.exp %248 : vector<8x128xf32>
    %cst_67 = arith.constant 1.000000e+00 : f32
    %250 = vector.broadcast %cst_67 : f32 to vector<8x128xf32>
    %251 = arith.addf %250, %249 : vector<8x128xf32>
    %252 = arith.divf %250, %251 : vector<8x128xf32>
    %253 = vector.extract_strided_slice %240 {offsets = [0, 256], sizes = [8, 128], strides = [1, 1]} : vector<8x512xf32> to vector<8x128xf32>
    %254 = math.tanh %253 : vector<8x128xf32>
    %255 = vector.extract_strided_slice %240 {offsets = [0, 384], sizes = [8, 128], strides = [1, 1]} : vector<8x512xf32> to vector<8x128xf32>
    %256 = arith.negf %255 : vector<8x128xf32>
    %257 = math.exp %256 : vector<8x128xf32>
    %cst_68 = arith.constant 1.000000e+00 : f32
    %258 = vector.broadcast %cst_68 : f32 to vector<8x128xf32>
    %259 = arith.addf %258, %257 : vector<8x128xf32>
    %260 = arith.divf %258, %259 : vector<8x128xf32>
    %261 = arith.mulf %252, %232 : vector<8x128xf32>
    %262 = arith.mulf %246, %254 : vector<8x128xf32>
    %263 = arith.addf %261, %262 : vector<8x128xf32>
    %264 = math.tanh %263 : vector<8x128xf32>
    %265 = arith.mulf %260, %264 : vector<8x128xf32>
    %c8_i32_69 = arith.constant 8 : i32
    %c0_i32_70 = arith.constant 0 : i32
    %c8_i32_71 = arith.constant 8 : i32
    %266 = arith.muli %c0_i32_70, %c8_i32_71 : i32
    %267 = tpu.assume_multiple %266, 8 : i32
    %268 = arith.index_cast %267 : i32 to index
    %c0_72 = arith.constant 0 : index
    %269 = vector.load %arg14[%268, %c0_72] : memref<64x512xf32, #tpu.memory_space<vmem>>, vector<8x512xf32>
    %cst_73 = arith.constant dense<0.000000e+00> : vector<8x512xf32>
    %270 = tpu.matmul %265, %1, %cst_73 {dimension_numbers = #tpu.dot_dimension_numbers<[1], [0], [0], [1], [0, 0, 1, 1], [], []>} : vector<8x128xf32>, vector<128x512xf32>, vector<8x512xf32> -> vector<8x512xf32>
    %271 = arith.addf %269, %270 : vector<8x512xf32>
    %272 = vector.extract_strided_slice %271 {offsets = [0, 0], sizes = [8, 128], strides = [1, 1]} : vector<8x512xf32> to vector<8x128xf32>
    %273 = arith.negf %272 : vector<8x128xf32>
    %274 = math.exp %273 : vector<8x128xf32>
    %cst_74 = arith.constant 1.000000e+00 : f32
    %275 = vector.broadcast %cst_74 : f32 to vector<8x128xf32>
    %276 = arith.addf %275, %274 : vector<8x128xf32>
    %277 = arith.divf %275, %276 : vector<8x128xf32>
    %278 = vector.extract_strided_slice %271 {offsets = [0, 128], sizes = [8, 128], strides = [1, 1]} : vector<8x512xf32> to vector<8x128xf32>
    %279 = arith.negf %278 : vector<8x128xf32>
    %280 = math.exp %279 : vector<8x128xf32>
    %cst_75 = arith.constant 1.000000e+00 : f32
    %281 = vector.broadcast %cst_75 : f32 to vector<8x128xf32>
    %282 = arith.addf %281, %280 : vector<8x128xf32>
    %283 = arith.divf %281, %282 : vector<8x128xf32>
    %284 = vector.extract_strided_slice %271 {offsets = [0, 256], sizes = [8, 128], strides = [1, 1]} : vector<8x512xf32> to vector<8x128xf32>
    %285 = math.tanh %284 : vector<8x128xf32>
    %286 = vector.extract_strided_slice %271 {offsets = [0, 384], sizes = [8, 128], strides = [1, 1]} : vector<8x512xf32> to vector<8x128xf32>
    %287 = arith.negf %286 : vector<8x128xf32>
    %288 = math.exp %287 : vector<8x128xf32>
    %cst_76 = arith.constant 1.000000e+00 : f32
    %289 = vector.broadcast %cst_76 : f32 to vector<8x128xf32>
    %290 = arith.addf %289, %288 : vector<8x128xf32>
    %291 = arith.divf %289, %290 : vector<8x128xf32>
    %292 = arith.mulf %283, %263 : vector<8x128xf32>
    %293 = arith.mulf %277, %285 : vector<8x128xf32>
    %294 = arith.addf %292, %293 : vector<8x128xf32>
    %295 = math.tanh %294 : vector<8x128xf32>
    %296 = arith.mulf %291, %295 : vector<8x128xf32>
    %297 = arith.index_cast %267 : i32 to index
    %c0_77 = arith.constant 0 : index
    %298 = vector.load %arg15[%297, %c0_77] : memref<64x128xf32, #tpu.memory_space<vmem>>, vector<8x128xf32>
    tpu.vector_store %arg15[%297, %c0_77], %296 {strides = array<i32>} : memref<64x128xf32, #tpu.memory_space<vmem>>, vector<8x128xf32>,
    %c1_i32_78 = arith.constant 1 : i32
    %c8_i32_79 = arith.constant 8 : i32
    %299 = arith.muli %c1_i32_78, %c8_i32_79 : i32
    %300 = tpu.assume_multiple %299, 8 : i32
    %301 = arith.index_cast %300 : i32 to index
    %c0_80 = arith.constant 0 : index
    %302 = vector.load %arg14[%301, %c0_80] : memref<64x512xf32, #tpu.memory_space<vmem>>, vector<8x512xf32>
    %cst_81 = arith.constant dense<0.000000e+00> : vector<8x512xf32>
    %303 = tpu.matmul %296, %1, %cst_81 {dimension_numbers = #tpu.dot_dimension_numbers<[1], [0], [0], [1], [0, 0, 1, 1], [], []>} : vector<8x128xf32>, vector<128x512xf32>, vector<8x512xf32> -> vector<8x512xf32>
    %304 = arith.addf %302, %303 : vector<8x512xf32>
    %305 = vector.extract_strided_slice %304 {offsets = [0, 0], sizes = [8, 128], strides = [1, 1]} : vector<8x512xf32> to vector<8x128xf32>
    %306 = arith.negf %305 : vector<8x128xf32>
    %307 = math.exp %306 : vector<8x128xf32>
    %cst_82 = arith.constant 1.000000e+00 : f32
    %308 = vector.broadcast %cst_82 : f32 to vector<8x128xf32>
    %309 = arith.addf %308, %307 : vector<8x128xf32>
    %310 = arith.divf %308, %309 : vector<8x128xf32>
    %311 = vector.extract_strided_slice %304 {offsets = [0, 128], sizes = [8, 128], strides = [1, 1]} : vector<8x512xf32> to vector<8x128xf32>
    %312 = arith.negf %311 : vector<8x128xf32>
    %313 = math.exp %312 : vector<8x128xf32>
    %cst_83 = arith.constant 1.000000e+00 : f32
    %314 = vector.broadcast %cst_83 : f32 to vector<8x128xf32>
    %315 = arith.addf %314, %313 : vector<8x128xf32>
    %316 = arith.divf %314, %315 : vector<8x128xf32>
    %317 = vector.extract_strided_slice %304 {offsets = [0, 256], sizes = [8, 128], strides = [1, 1]} : vector<8x512xf32> to vector<8x128xf32>
    %318 = math.tanh %317 : vector<8x128xf32>
    %319 = vector.extract_strided_slice %304 {offsets = [0, 384], sizes = [8, 128], strides = [1, 1]} : vector<8x512xf32> to vector<8x128xf32>
    %320 = arith.negf %319 : vector<8x128xf32>
    %321 = math.exp %320 : vector<8x128xf32>
    %cst_84 = arith.constant 1.000000e+00 : f32
    %322 = vector.broadcast %cst_84 : f32 to vector<8x128xf32>
    %323 = arith.addf %322, %321 : vector<8x128xf32>
    %324 = arith.divf %322, %323 : vector<8x128xf32>
    %325 = arith.mulf %316, %294 : vector<8x128xf32>
    %326 = arith.mulf %310, %318 : vector<8x128xf32>
    %327 = arith.addf %325, %326 : vector<8x128xf32>
    %328 = math.tanh %327 : vector<8x128xf32>
    %329 = arith.mulf %324, %328 : vector<8x128xf32>
    %330 = arith.index_cast %300 : i32 to index
    %c0_85 = arith.constant 0 : index
    %331 = vector.load %arg15[%330, %c0_85] : memref<64x128xf32, #tpu.memory_space<vmem>>, vector<8x128xf32>
    tpu.vector_store %arg15[%330, %c0_85], %329 {strides = array<i32>} : memref<64x128xf32, #tpu.memory_space<vmem>>, vector<8x128xf32>,
    %c2_i32_86 = arith.constant 2 : i32
    %c8_i32_87 = arith.constant 8 : i32
    %332 = arith.muli %c2_i32_86, %c8_i32_87 : i32
    %333 = tpu.assume_multiple %332, 8 : i32
    %334 = arith.index_cast %333 : i32 to index
    %c0_88 = arith.constant 0 : index
    %335 = vector.load %arg14[%334, %c0_88] : memref<64x512xf32, #tpu.memory_space<vmem>>, vector<8x512xf32>
    %cst_89 = arith.constant dense<0.000000e+00> : vector<8x512xf32>
    %336 = tpu.matmul %329, %1, %cst_89 {dimension_numbers = #tpu.dot_dimension_numbers<[1], [0], [0], [1], [0, 0, 1, 1], [], []>} : vector<8x128xf32>, vector<128x512xf32>, vector<8x512xf32> -> vector<8x512xf32>
    %337 = arith.addf %335, %336 : vector<8x512xf32>
    %338 = vector.extract_strided_slice %337 {offsets = [0, 0], sizes = [8, 128], strides = [1, 1]} : vector<8x512xf32> to vector<8x128xf32>
    %339 = arith.negf %338 : vector<8x128xf32>
    %340 = math.exp %339 : vector<8x128xf32>
    %cst_90 = arith.constant 1.000000e+00 : f32
    %341 = vector.broadcast %cst_90 : f32 to vector<8x128xf32>
    %342 = arith.addf %341, %340 : vector<8x128xf32>
    %343 = arith.divf %341, %342 : vector<8x128xf32>
    %344 = vector.extract_strided_slice %337 {offsets = [0, 128], sizes = [8, 128], strides = [1, 1]} : vector<8x512xf32> to vector<8x128xf32>
    %345 = arith.negf %344 : vector<8x128xf32>
    %346 = math.exp %345 : vector<8x128xf32>
    %cst_91 = arith.constant 1.000000e+00 : f32
    %347 = vector.broadcast %cst_91 : f32 to vector<8x128xf32>
    %348 = arith.addf %347, %346 : vector<8x128xf32>
    %349 = arith.divf %347, %348 : vector<8x128xf32>
    %350 = vector.extract_strided_slice %337 {offsets = [0, 256], sizes = [8, 128], strides = [1, 1]} : vector<8x512xf32> to vector<8x128xf32>
    %351 = math.tanh %350 : vector<8x128xf32>
    %352 = vector.extract_strided_slice %337 {offsets = [0, 384], sizes = [8, 128], strides = [1, 1]} : vector<8x512xf32> to vector<8x128xf32>
    %353 = arith.negf %352 : vector<8x128xf32>
    %354 = math.exp %353 : vector<8x128xf32>
    %cst_92 = arith.constant 1.000000e+00 : f32
    %355 = vector.broadcast %cst_92 : f32 to vector<8x128xf32>
    %356 = arith.addf %355, %354 : vector<8x128xf32>
    %357 = arith.divf %355, %356 : vector<8x128xf32>
    %358 = arith.mulf %349, %327 : vector<8x128xf32>
    %359 = arith.mulf %343, %351 : vector<8x128xf32>
    %360 = arith.addf %358, %359 : vector<8x128xf32>
    %361 = math.tanh %360 : vector<8x128xf32>
    %362 = arith.mulf %357, %361 : vector<8x128xf32>
    %363 = arith.index_cast %333 : i32 to index
    %c0_93 = arith.constant 0 : index
    %364 = vector.load %arg15[%363, %c0_93] : memref<64x128xf32, #tpu.memory_space<vmem>>, vector<8x128xf32>
    tpu.vector_store %arg15[%363, %c0_93], %362 {strides = array<i32>} : memref<64x128xf32, #tpu.memory_space<vmem>>, vector<8x128xf32>,
    %c3_i32_94 = arith.constant 3 : i32
    %c8_i32_95 = arith.constant 8 : i32
    %365 = arith.muli %c3_i32_94, %c8_i32_95 : i32
    %366 = tpu.assume_multiple %365, 8 : i32
    %367 = arith.index_cast %366 : i32 to index
    %c0_96 = arith.constant 0 : index
    %368 = vector.load %arg14[%367, %c0_96] : memref<64x512xf32, #tpu.memory_space<vmem>>, vector<8x512xf32>
    %cst_97 = arith.constant dense<0.000000e+00> : vector<8x512xf32>
    %369 = tpu.matmul %362, %1, %cst_97 {dimension_numbers = #tpu.dot_dimension_numbers<[1], [0], [0], [1], [0, 0, 1, 1], [], []>} : vector<8x128xf32>, vector<128x512xf32>, vector<8x512xf32> -> vector<8x512xf32>
    %370 = arith.addf %368, %369 : vector<8x512xf32>
    %371 = vector.extract_strided_slice %370 {offsets = [0, 0], sizes = [8, 128], strides = [1, 1]} : vector<8x512xf32> to vector<8x128xf32>
    %372 = arith.negf %371 : vector<8x128xf32>
    %373 = math.exp %372 : vector<8x128xf32>
    %cst_98 = arith.constant 1.000000e+00 : f32
    %374 = vector.broadcast %cst_98 : f32 to vector<8x128xf32>
    %375 = arith.addf %374, %373 : vector<8x128xf32>
    %376 = arith.divf %374, %375 : vector<8x128xf32>
    %377 = vector.extract_strided_slice %370 {offsets = [0, 128], sizes = [8, 128], strides = [1, 1]} : vector<8x512xf32> to vector<8x128xf32>
    %378 = arith.negf %377 : vector<8x128xf32>
    %379 = math.exp %378 : vector<8x128xf32>
    %cst_99 = arith.constant 1.000000e+00 : f32
    %380 = vector.broadcast %cst_99 : f32 to vector<8x128xf32>
    %381 = arith.addf %380, %379 : vector<8x128xf32>
    %382 = arith.divf %380, %381 : vector<8x128xf32>
    %383 = vector.extract_strided_slice %370 {offsets = [0, 256], sizes = [8, 128], strides = [1, 1]} : vector<8x512xf32> to vector<8x128xf32>
    %384 = math.tanh %383 : vector<8x128xf32>
    %385 = vector.extract_strided_slice %370 {offsets = [0, 384], sizes = [8, 128], strides = [1, 1]} : vector<8x512xf32> to vector<8x128xf32>
    %386 = arith.negf %385 : vector<8x128xf32>
    %387 = math.exp %386 : vector<8x128xf32>
    %cst_100 = arith.constant 1.000000e+00 : f32
    %388 = vector.broadcast %cst_100 : f32 to vector<8x128xf32>
    %389 = arith.addf %388, %387 : vector<8x128xf32>
    %390 = arith.divf %388, %389 : vector<8x128xf32>
    %391 = arith.mulf %382, %360 : vector<8x128xf32>
    %392 = arith.mulf %376, %384 : vector<8x128xf32>
    %393 = arith.addf %391, %392 : vector<8x128xf32>
    %394 = math.tanh %393 : vector<8x128xf32>
    %395 = arith.mulf %390, %394 : vector<8x128xf32>
    %396 = arith.index_cast %366 : i32 to index
    %c0_101 = arith.constant 0 : index
    %397 = vector.load %arg15[%396, %c0_101] : memref<64x128xf32, #tpu.memory_space<vmem>>, vector<8x128xf32>
    tpu.vector_store %arg15[%396, %c0_101], %395 {strides = array<i32>} : memref<64x128xf32, #tpu.memory_space<vmem>>, vector<8x128xf32>,
    %c4_i32_102 = arith.constant 4 : i32
    %c8_i32_103 = arith.constant 8 : i32
    %398 = arith.muli %c4_i32_102, %c8_i32_103 : i32
    %399 = tpu.assume_multiple %398, 8 : i32
    %400 = arith.index_cast %399 : i32 to index
    %c0_104 = arith.constant 0 : index
    %401 = vector.load %arg14[%400, %c0_104] : memref<64x512xf32, #tpu.memory_space<vmem>>, vector<8x512xf32>
    %cst_105 = arith.constant dense<0.000000e+00> : vector<8x512xf32>
    %402 = tpu.matmul %395, %1, %cst_105 {dimension_numbers = #tpu.dot_dimension_numbers<[1], [0], [0], [1], [0, 0, 1, 1], [], []>} : vector<8x128xf32>, vector<128x512xf32>, vector<8x512xf32> -> vector<8x512xf32>
    %403 = arith.addf %401, %402 : vector<8x512xf32>
    %404 = vector.extract_strided_slice %403 {offsets = [0, 0], sizes = [8, 128], strides = [1, 1]} : vector<8x512xf32> to vector<8x128xf32>
    %405 = arith.negf %404 : vector<8x128xf32>
    %406 = math.exp %405 : vector<8x128xf32>
    %cst_106 = arith.constant 1.000000e+00 : f32
    %407 = vector.broadcast %cst_106 : f32 to vector<8x128xf32>
    %408 = arith.addf %407, %406 : vector<8x128xf32>
    %409 = arith.divf %407, %408 : vector<8x128xf32>
    %410 = vector.extract_strided_slice %403 {offsets = [0, 128], sizes = [8, 128], strides = [1, 1]} : vector<8x512xf32> to vector<8x128xf32>
    %411 = arith.negf %410 : vector<8x128xf32>
    %412 = math.exp %411 : vector<8x128xf32>
    %cst_107 = arith.constant 1.000000e+00 : f32
    %413 = vector.broadcast %cst_107 : f32 to vector<8x128xf32>
    %414 = arith.addf %413, %412 : vector<8x128xf32>
    %415 = arith.divf %413, %414 : vector<8x128xf32>
    %416 = vector.extract_strided_slice %403 {offsets = [0, 256], sizes = [8, 128], strides = [1, 1]} : vector<8x512xf32> to vector<8x128xf32>
    %417 = math.tanh %416 : vector<8x128xf32>
    %418 = vector.extract_strided_slice %403 {offsets = [0, 384], sizes = [8, 128], strides = [1, 1]} : vector<8x512xf32> to vector<8x128xf32>
    %419 = arith.negf %418 : vector<8x128xf32>
    %420 = math.exp %419 : vector<8x128xf32>
    %cst_108 = arith.constant 1.000000e+00 : f32
    %421 = vector.broadcast %cst_108 : f32 to vector<8x128xf32>
    %422 = arith.addf %421, %420 : vector<8x128xf32>
    %423 = arith.divf %421, %422 : vector<8x128xf32>
    %424 = arith.mulf %415, %393 : vector<8x128xf32>
    %425 = arith.mulf %409, %417 : vector<8x128xf32>
    %426 = arith.addf %424, %425 : vector<8x128xf32>
    %427 = math.tanh %426 : vector<8x128xf32>
    %428 = arith.mulf %423, %427 : vector<8x128xf32>
    %429 = arith.index_cast %399 : i32 to index
    %c0_109 = arith.constant 0 : index
    %430 = vector.load %arg15[%429, %c0_109] : memref<64x128xf32, #tpu.memory_space<vmem>>, vector<8x128xf32>
    tpu.vector_store %arg15[%429, %c0_109], %428 {strides = array<i32>} : memref<64x128xf32, #tpu.memory_space<vmem>>, vector<8x128xf32>,
    %c5_i32_110 = arith.constant 5 : i32
    %c8_i32_111 = arith.constant 8 : i32
    %431 = arith.muli %c5_i32_110, %c8_i32_111 : i32
    %432 = tpu.assume_multiple %431, 8 : i32
    %433 = arith.index_cast %432 : i32 to index
    %c0_112 = arith.constant 0 : index
    %434 = vector.load %arg14[%433, %c0_112] : memref<64x512xf32, #tpu.memory_space<vmem>>, vector<8x512xf32>
    %cst_113 = arith.constant dense<0.000000e+00> : vector<8x512xf32>
    %435 = tpu.matmul %428, %1, %cst_113 {dimension_numbers = #tpu.dot_dimension_numbers<[1], [0], [0], [1], [0, 0, 1, 1], [], []>} : vector<8x128xf32>, vector<128x512xf32>, vector<8x512xf32> -> vector<8x512xf32>
    %436 = arith.addf %434, %435 : vector<8x512xf32>
    %437 = vector.extract_strided_slice %436 {offsets = [0, 0], sizes = [8, 128], strides = [1, 1]} : vector<8x512xf32> to vector<8x128xf32>
    %438 = arith.negf %437 : vector<8x128xf32>
    %439 = math.exp %438 : vector<8x128xf32>
    %cst_114 = arith.constant 1.000000e+00 : f32
    %440 = vector.broadcast %cst_114 : f32 to vector<8x128xf32>
    %441 = arith.addf %440, %439 : vector<8x128xf32>
    %442 = arith.divf %440, %441 : vector<8x128xf32>
    %443 = vector.extract_strided_slice %436 {offsets = [0, 128], sizes = [8, 128], strides = [1, 1]} : vector<8x512xf32> to vector<8x128xf32>
    %444 = arith.negf %443 : vector<8x128xf32>
    %445 = math.exp %444 : vector<8x128xf32>
    %cst_115 = arith.constant 1.000000e+00 : f32
    %446 = vector.broadcast %cst_115 : f32 to vector<8x128xf32>
    %447 = arith.addf %446, %445 : vector<8x128xf32>
    %448 = arith.divf %446, %447 : vector<8x128xf32>
    %449 = vector.extract_strided_slice %436 {offsets = [0, 256], sizes = [8, 128], strides = [1, 1]} : vector<8x512xf32> to vector<8x128xf32>
    %450 = math.tanh %449 : vector<8x128xf32>
    %451 = vector.extract_strided_slice %436 {offsets = [0, 384], sizes = [8, 128], strides = [1, 1]} : vector<8x512xf32> to vector<8x128xf32>
    %452 = arith.negf %451 : vector<8x128xf32>
    %453 = math.exp %452 : vector<8x128xf32>
    %cst_116 = arith.constant 1.000000e+00 : f32
    %454 = vector.broadcast %cst_116 : f32 to vector<8x128xf32>
    %455 = arith.addf %454, %453 : vector<8x128xf32>
    %456 = arith.divf %454, %455 : vector<8x128xf32>
    %457 = arith.mulf %448, %426 : vector<8x128xf32>
    %458 = arith.mulf %442, %450 : vector<8x128xf32>
    %459 = arith.addf %457, %458 : vector<8x128xf32>
    %460 = math.tanh %459 : vector<8x128xf32>
    %461 = arith.mulf %456, %460 : vector<8x128xf32>
    %462 = arith.index_cast %432 : i32 to index
    %c0_117 = arith.constant 0 : index
    %463 = vector.load %arg15[%462, %c0_117] : memref<64x128xf32, #tpu.memory_space<vmem>>, vector<8x128xf32>
    tpu.vector_store %arg15[%462, %c0_117], %461 {strides = array<i32>} : memref<64x128xf32, #tpu.memory_space<vmem>>, vector<8x128xf32>,
    %c6_i32_118 = arith.constant 6 : i32
    %c8_i32_119 = arith.constant 8 : i32
    %464 = arith.muli %c6_i32_118, %c8_i32_119 : i32
    %465 = tpu.assume_multiple %464, 8 : i32
    %466 = arith.index_cast %465 : i32 to index
    %c0_120 = arith.constant 0 : index
    %467 = vector.load %arg14[%466, %c0_120] : memref<64x512xf32, #tpu.memory_space<vmem>>, vector<8x512xf32>
    %cst_121 = arith.constant dense<0.000000e+00> : vector<8x512xf32>
    %468 = tpu.matmul %461, %1, %cst_121 {dimension_numbers = #tpu.dot_dimension_numbers<[1], [0], [0], [1], [0, 0, 1, 1], [], []>} : vector<8x128xf32>, vector<128x512xf32>, vector<8x512xf32> -> vector<8x512xf32>
    %469 = arith.addf %467, %468 : vector<8x512xf32>
    %470 = vector.extract_strided_slice %469 {offsets = [0, 0], sizes = [8, 128], strides = [1, 1]} : vector<8x512xf32> to vector<8x128xf32>
    %471 = arith.negf %470 : vector<8x128xf32>
    %472 = math.exp %471 : vector<8x128xf32>
    %cst_122 = arith.constant 1.000000e+00 : f32
    %473 = vector.broadcast %cst_122 : f32 to vector<8x128xf32>
    %474 = arith.addf %473, %472 : vector<8x128xf32>
    %475 = arith.divf %473, %474 : vector<8x128xf32>
    %476 = vector.extract_strided_slice %469 {offsets = [0, 128], sizes = [8, 128], strides = [1, 1]} : vector<8x512xf32> to vector<8x128xf32>
    %477 = arith.negf %476 : vector<8x128xf32>
    %478 = math.exp %477 : vector<8x128xf32>
    %cst_123 = arith.constant 1.000000e+00 : f32
    %479 = vector.broadcast %cst_123 : f32 to vector<8x128xf32>
    %480 = arith.addf %479, %478 : vector<8x128xf32>
    %481 = arith.divf %479, %480 : vector<8x128xf32>
    %482 = vector.extract_strided_slice %469 {offsets = [0, 256], sizes = [8, 128], strides = [1, 1]} : vector<8x512xf32> to vector<8x128xf32>
    %483 = math.tanh %482 : vector<8x128xf32>
    %484 = vector.extract_strided_slice %469 {offsets = [0, 384], sizes = [8, 128], strides = [1, 1]} : vector<8x512xf32> to vector<8x128xf32>
    %485 = arith.negf %484 : vector<8x128xf32>
    %486 = math.exp %485 : vector<8x128xf32>
    %cst_124 = arith.constant 1.000000e+00 : f32
    %487 = vector.broadcast %cst_124 : f32 to vector<8x128xf32>
    %488 = arith.addf %487, %486 : vector<8x128xf32>
    %489 = arith.divf %487, %488 : vector<8x128xf32>
    %490 = arith.mulf %481, %459 : vector<8x128xf32>
    %491 = arith.mulf %475, %483 : vector<8x128xf32>
    %492 = arith.addf %490, %491 : vector<8x128xf32>
    %493 = math.tanh %492 : vector<8x128xf32>
    %494 = arith.mulf %489, %493 : vector<8x128xf32>
    %495 = arith.index_cast %465 : i32 to index
    %c0_125 = arith.constant 0 : index
    %496 = vector.load %arg15[%495, %c0_125] : memref<64x128xf32, #tpu.memory_space<vmem>>, vector<8x128xf32>
    tpu.vector_store %arg15[%495, %c0_125], %494 {strides = array<i32>} : memref<64x128xf32, #tpu.memory_space<vmem>>, vector<8x128xf32>,
    %c7_i32_126 = arith.constant 7 : i32
    %c8_i32_127 = arith.constant 8 : i32
    %497 = arith.muli %c7_i32_126, %c8_i32_127 : i32
    %498 = tpu.assume_multiple %497, 8 : i32
    %499 = arith.index_cast %498 : i32 to index
    %c0_128 = arith.constant 0 : index
    %500 = vector.load %arg14[%499, %c0_128] : memref<64x512xf32, #tpu.memory_space<vmem>>, vector<8x512xf32>
    %cst_129 = arith.constant dense<0.000000e+00> : vector<8x512xf32>
    %501 = tpu.matmul %494, %1, %cst_129 {dimension_numbers = #tpu.dot_dimension_numbers<[1], [0], [0], [1], [0, 0, 1, 1], [], []>} : vector<8x128xf32>, vector<128x512xf32>, vector<8x512xf32> -> vector<8x512xf32>
    %502 = arith.addf %500, %501 : vector<8x512xf32>
    %503 = vector.extract_strided_slice %502 {offsets = [0, 0], sizes = [8, 128], strides = [1, 1]} : vector<8x512xf32> to vector<8x128xf32>
    %504 = arith.negf %503 : vector<8x128xf32>
    %505 = math.exp %504 : vector<8x128xf32>
    %cst_130 = arith.constant 1.000000e+00 : f32
    %506 = vector.broadcast %cst_130 : f32 to vector<8x128xf32>
    %507 = arith.addf %506, %505 : vector<8x128xf32>
    %508 = arith.divf %506, %507 : vector<8x128xf32>
    %509 = vector.extract_strided_slice %502 {offsets = [0, 128], sizes = [8, 128], strides = [1, 1]} : vector<8x512xf32> to vector<8x128xf32>
    %510 = arith.negf %509 : vector<8x128xf32>
    %511 = math.exp %510 : vector<8x128xf32>
    %cst_131 = arith.constant 1.000000e+00 : f32
    %512 = vector.broadcast %cst_131 : f32 to vector<8x128xf32>
    %513 = arith.addf %512, %511 : vector<8x128xf32>
    %514 = arith.divf %512, %513 : vector<8x128xf32>
    %515 = vector.extract_strided_slice %502 {offsets = [0, 256], sizes = [8, 128], strides = [1, 1]} : vector<8x512xf32> to vector<8x128xf32>
    %516 = math.tanh %515 : vector<8x128xf32>
    %517 = vector.extract_strided_slice %502 {offsets = [0, 384], sizes = [8, 128], strides = [1, 1]} : vector<8x512xf32> to vector<8x128xf32>
    %518 = arith.negf %517 : vector<8x128xf32>
    %519 = math.exp %518 : vector<8x128xf32>
    %cst_132 = arith.constant 1.000000e+00 : f32
    %520 = vector.broadcast %cst_132 : f32 to vector<8x128xf32>
    %521 = arith.addf %520, %519 : vector<8x128xf32>
    %522 = arith.divf %520, %521 : vector<8x128xf32>
    %523 = arith.mulf %514, %492 : vector<8x128xf32>
    %524 = arith.mulf %508, %516 : vector<8x128xf32>
    %525 = arith.addf %523, %524 : vector<8x128xf32>
    %526 = math.tanh %525 : vector<8x128xf32>
    %527 = arith.mulf %522, %526 : vector<8x128xf32>
    %528 = arith.index_cast %498 : i32 to index
    %c0_133 = arith.constant 0 : index
    %529 = vector.load %arg15[%528, %c0_133] : memref<64x128xf32, #tpu.memory_space<vmem>>, vector<8x128xf32>
    tpu.vector_store %arg15[%528, %c0_133], %527 {strides = array<i32>} : memref<64x128xf32, #tpu.memory_space<vmem>>, vector<8x128xf32>,
    %c8_i32_134 = arith.constant 8 : i32
    %c0_135 = arith.constant 0 : index
    %c0_136 = arith.constant 0 : index
    %530 = vector.load %arg15[%c0_135, %c0_136] : memref<64x128xf32, #tpu.memory_space<vmem>>, vector<64x128xf32>
    %c0_137 = arith.constant 0 : index
    %c0_138 = arith.constant 0 : index
    %531 = vector.load %arg8[%c0_137, %c0_138] : memref<128x128xf32, #tpu.memory_space<vmem>>, vector<128x128xf32>
    %cst_139 = arith.constant dense<0.000000e+00> : vector<64x128xf32>
    %532 = tpu.matmul %530, %531, %cst_139 {dimension_numbers = #tpu.dot_dimension_numbers<[1], [0], [0], [1], [0, 0, 1, 1], [], []>} : vector<64x128xf32>, vector<128x128xf32>, vector<64x128xf32> -> vector<64x128xf32>
    %c0_140 = arith.constant 0 : index
    %c0_141 = arith.constant 0 : index
    %533 = vector.load %arg9[%c0_140, %c0_141] : memref<1x128xf32, #tpu.memory_space<vmem>>, vector<1x128xf32>
    %534 = vector.broadcast %533 : vector<1x128xf32> to vector<64x128xf32>
    %535 = arith.addf %532, %534 : vector<64x128xf32>
    %536 = math.tanh %535 : vector<64x128xf32>
    %c0_142 = arith.constant 0 : index
    %c0_143 = arith.constant 0 : index
    %537 = vector.load %arg10[%c0_142, %c0_143] : memref<128x128xf32, #tpu.memory_space<vmem>>, vector<128x128xf32>
    %cst_144 = arith.constant dense<0.000000e+00> : vector<64x128xf32>
    %538 = tpu.matmul %536, %537, %cst_144 {dimension_numbers = #tpu.dot_dimension_numbers<[1], [0], [0], [1], [0, 0, 1, 1], [], []>} : vector<64x128xf32>, vector<128x128xf32>, vector<64x128xf32> -> vector<64x128xf32>
    %c0_145 = arith.constant 0 : index
    %c0_146 = arith.constant 0 : index
    %539 = vector.load %arg11[%c0_145, %c0_146] : memref<1x128xf32, #tpu.memory_space<vmem>>, vector<1x128xf32>
    %540 = vector.broadcast %539 : vector<1x128xf32> to vector<64x128xf32>
    %541 = arith.addf %538, %540 : vector<64x128xf32>
    %c0_147 = arith.constant 0 : index
    %c0_148 = arith.constant 0 : index
    %542 = vector.load %arg12[%c0_147, %c0_148] : memref<64x128xf32, #tpu.memory_space<vmem>>, vector<64x128xf32>
    tpu.vector_store %arg12[%c0_147, %c0_148], %541 {strides = array<i32>} : memref<64x128xf32, #tpu.memory_space<vmem>>, vector<64x128xf32>,
    return
  }
}

</mosaic_0001>

<llo_original>
// kernel: tpu_custom_call.1
$region0: #{tpu_custom_call.1}
  #allocation0 [shape = 'u32[]', space=smem, size = 0x4, offset = 0x4, fixed_abs, tag = 'smem constant byte address 0x4 - core index']
  #allocation1 [shape = 'u32[144,128]{1,0:T(1,128)}', space=vmem, size = 0x12000, scoped, tag = 'internal scratch']
  #allocation2 [shape = 'f32[64,512]{1,0:T(8,128)}', space=vmem, size = 0x20000, scoped, tag = 'scratch operand']
  #allocation3 [shape = 'f32[64,512]{1,0:T(8,128)}', space=vmem, size = 0x20000, scoped, tag = 'scratch operand']
  #allocation4 [shape = 'f32[64,128]{1,0:T(8,128)}', space=vmem, size = 0x8000, scoped, tag = 'scratch operand']
  %s0 = inlined_call_operand.hbm [shape: f32[64,128], index: 0, kind: input, shape index: {}]
  %s1 = inlined_call_operand.hbm [shape: f32[64,128], index: 1, kind: input, shape index: {}]
  %s2 = inlined_call_operand.hbm [shape: f32[128,512], index: 2, kind: input, shape index: {}]
  %s3 = inlined_call_operand.hbm [shape: f32[128,512], index: 3, kind: input, shape index: {}]
  %s4 = inlined_call_operand.vmem [shape: f32[1,512], index: 4, kind: input, shape index: {}]
  %s5 = inlined_call_operand.hbm [shape: f32[128,512], index: 5, kind: input, shape index: {}]
  %s6 = inlined_call_operand.hbm [shape: f32[128,512], index: 6, kind: input, shape index: {}]
  %s7 = inlined_call_operand.vmem [shape: f32[1,512], index: 7, kind: input, shape index: {}]
  %s8 = inlined_call_operand.hbm [shape: f32[128,128], index: 8, kind: input, shape index: {}]
  %s9 = inlined_call_operand.vmem [shape: f32[1,128], index: 9, kind: input, shape index: {}]
  %s10 = inlined_call_operand.hbm [shape: f32[128,128], index: 10, kind: input, shape index: {}]
  %s11 = inlined_call_operand.vmem [shape: f32[1,128], index: 11, kind: input, shape index: {}]
  %s12 = inlined_call_operand.hbm [shape: f32[64,128], index: 12, kind: output, shape index: {}]
  %s13 = sld [smem:[#allocation0]]
  $region90: #{tpu_custom_call.1} parent=0
    _
  %s15 = ssub.s32 1, %s13
  %s16 = scalar_select 0, %s15, %s13
  $region1: #{tpu_custom_call.1} parent=0
    #allocation5 [shape = 'u8[32768]{0}', space=vmem, size = 0x8000, scoped, tag = 'input window, operand 0, single buffered']
    #allocation6 [shape = 's32[1]{0}', space=sflag, size = 0x4, scoped, tag = 'scoped memory for tpu_custom_call.1']
    #allocation7 [shape = 's32[1]{0}', space=sflag, size = 0x4, scoped, tag = 'scoped memory for tpu_custom_call.1']
    #allocation8 [shape = 'u8[32768]{0}', space=vmem, size = 0x8000, scoped, tag = 'input window, operand 1, single buffered']
    #allocation9 [shape = 's32[1]{0}', space=sflag, size = 0x4, scoped, tag = 'scoped memory for tpu_custom_call.1']
    #allocation10 [shape = 'u8[262144]{0}', space=vmem, size = 0x40000, scoped, tag = 'input window, operand 2, single buffered']
    #allocation11 [shape = 'u8[262144]{0}', space=vmem, size = 0x40000, scoped, tag = 'input window, operand 3, single buffered']
    #allocation12 [shape = 's32[1]{0}', space=sflag, size = 0x4, scoped, tag = 'scoped memory for tpu_custom_call.1']
    #allocation13 [shape = 'u8[262144]{0}', space=vmem, size = 0x40000, scoped, tag = 'input window, operand 5, single buffered']
    #allocation14 [shape = 'u8[262144]{0}', space=vmem, size = 0x40000, scoped, tag = 'input window, operand 6, single buffered']
    #allocation15 [shape = 's32[1]{0}', space=sflag, size = 0x4, scoped, tag = 'scoped memory for tpu_custom_call.1']
    #allocation16 [shape = 'u8[65536]{0}', space=vmem, size = 0x10000, scoped, tag = 'input window, operand 8, single buffered']
    #allocation17 [shape = 'u8[65536]{0}', space=vmem, size = 0x10000, scoped, tag = 'input window, operand 10, single buffered']
    #allocation18 [shape = 's32[1]{0}', space=sflag, size = 0x4, scoped, tag = 'scoped memory for tpu_custom_call.1']
    #allocation19 [shape = 'u8[32768]{0}', space=vmem, size = 0x8000, scoped, tag = 'output window, operand 0, single buffered']
    %17 = vsyncpa [#allocation6], 0
    %18 = vsyncpa [#allocation9], 0
    %19 = vsyncpa [#allocation12], 0
    %20 = vsyncpa [#allocation15], 0
    %21 = vsyncpa [#allocation18], 0
    %22 = vsyncpa [#allocation7], 0
    // Predicated region
    $region2: #{tpu_custom_call.1} parent=1 // pred_check
      _
    $region3: #{tpu_custom_call.1} parent=1 // pred_check_branch
      %24 = sbr.rel (0) target = $region5
    $region4: #{tpu_custom_call.1} parent=1 // pred_region
      %s26 = ssub.s32 1024, 1024
      %27 = vsyncadd [#allocation6], %s26
      %s28 = sshll.u32 [#allocation5], 4
      %s29 = int_to_ptr.vmem [resolvable:$true] %s28
      %34 = dma.hbm_to_vmem [thread:$0]  %s0, 1024, %s29, [#allocation6], 128, 128, 8
    $region5: #{tpu_custom_call.1} parent=1 // pred_fallthru
      _
    // Predicated region
    $region6: #{tpu_custom_call.1} parent=1 // pred_check
      _
    $region7: #{tpu_custom_call.1} parent=1 // pred_check_branch
      %36 = sbr.rel (0) target = $region9
    $region8: #{tpu_custom_call.1} parent=1 // pred_region
      %s38 = ssub.s32 1024, 1024
      %39 = vsyncadd [#allocation9], %s38
      %s40 = sshll.u32 [#allocation8], 4
      %s41 = int_to_ptr.vmem [resolvable:$true] %s40
      %46 = dma.hbm_to_vmem [thread:$0]  %s1, 1024, %s41, [#allocation9], 128, 128, 8
    $region9: #{tpu_custom_call.1} parent=1 // pred_fallthru
      _
    // Predicated region
    $region10: #{tpu_custom_call.1} parent=1 // pred_check
      _
    $region11: #{tpu_custom_call.1} parent=1 // pred_check_branch
      %48 = sbr.rel (0) target = $region13
    $region12: #{tpu_custom_call.1} parent=1 // pred_region
      %s50 = ssub.s32 8192, 8192
      %51 = vsyncadd [#allocation9], %s50
      %s52 = sshll.u32 [#allocation10], 4
      %s53 = int_to_ptr.vmem [resolvable:$true] %s52
      %58 = dma.hbm_to_vmem [thread:$0]  %s2, 8192, %s53, [#allocation9], 512, 512, 32
    $region13: #{tpu_custom_call.1} parent=1 // pred_fallthru
      _
    // Predicated region
    $region14: #{tpu_custom_call.1} parent=1 // pred_check
      _
    $region15: #{tpu_custom_call.1} parent=1 // pred_check_branch
      %60 = sbr.rel (0) target = $region17
    $region16: #{tpu_custom_call.1} parent=1 // pred_region
      %s62 = ssub.s32 8192, 8192
      %63 = vsyncadd [#allocation12], %s62
      %s64 = sshll.u32 [#allocation11], 4
      %s65 = int_to_ptr.vmem [resolvable:$true] %s64
      %70 = dma.hbm_to_vmem [thread:$0]  %s3, 8192, %s65, [#allocation12], 512, 512, 32
    $region17: #{tpu_custom_call.1} parent=1 // pred_fallthru
      _
    // Predicated region
    $region18: #{tpu_custom_call.1} parent=1 // pred_check
      _
    $region19: #{tpu_custom_call.1} parent=1 // pred_check_branch
      %72 = sbr.rel (0) target = $region21
    $region20: #{tpu_custom_call.1} parent=1 // pred_region
      _
    $region21: #{tpu_custom_call.1} parent=1 // pred_fallthru
      _
    // Predicated region
    $region22: #{tpu_custom_call.1} parent=1 // pred_check
      _
    $region23: #{tpu_custom_call.1} parent=1 // pred_check_branch
      %74 = sbr.rel (0) target = $region25
    $region24: #{tpu_custom_call.1} parent=1 // pred_region
      %s76 = ssub.s32 8192, 8192
      %77 = vsyncadd [#allocation12], %s76
      %s78 = sshll.u32 [#allocation13], 4
      %s79 = int_to_ptr.vmem [resolvable:$true] %s78
      %84 = dma.hbm_to_vmem [thread:$0]  %s5, 8192, %s79, [#allocation12], 512, 512, 32
    $region25: #{tpu_custom_call.1} parent=1 // pred_fallthru
      _
    // Predicated region
    $region26: #{tpu_custom_call.1} parent=1 // pred_check
      _
    $region27: #{tpu_custom_call.1} parent=1 // pred_check_branch
      %86 = sbr.rel (0) target = $region29
    $region28: #{tpu_custom_call.1} parent=1 // pred_region
      %s88 = ssub.s32 8192, 8192
      %89 = vsyncadd [#allocation15], %s88
      %s90 = sshll.u32 [#allocation14], 4
      %s91 = int_to_ptr.vmem [resolvable:$true] %s90
      %96 = dma.hbm_to_vmem [thread:$0]  %s6, 8192, %s91, [#allocation15], 512, 512, 32
    $region29: #{tpu_custom_call.1} parent=1 // pred_fallthru
      _
    // Predicated region
    $region30: #{tpu_custom_call.1} parent=1 // pred_check
      _
    $region31: #{tpu_custom_call.1} parent=1 // pred_check_branch
      %98 = sbr.rel (0) target = $region33
    $region32: #{tpu_custom_call.1} parent=1 // pred_region
      _
    $region33: #{tpu_custom_call.1} parent=1 // pred_fallthru
      _
    // Predicated region
    $region34: #{tpu_custom_call.1} parent=1 // pred_check
      _
    $region35: #{tpu_custom_call.1} parent=1 // pred_check_branch
      %100 = sbr.rel (0) target = $region37
    $region36: #{tpu_custom_call.1} parent=1 // pred_region
      %s102 = ssub.s32 2048, 2048
      %103 = vsyncadd [#allocation15], %s102
      %s104 = sshll.u32 [#allocation16], 4
      %s105 = int_to_ptr.vmem [resolvable:$true] %s104
      %110 = dma.hbm_to_vmem [thread:$0]  %s8, 2048, %s105, [#allocation15], 128, 128, 8
    $region37: #{tpu_custom_call.1} parent=1 // pred_fallthru
      _
    // Predicated region
    $region38: #{tpu_custom_call.1} parent=1 // pred_check
      _
    $region39: #{tpu_custom_call.1} parent=1 // pred_check_branch
      %112 = sbr.rel (0) target = $region41
    $region40: #{tpu_custom_call.1} parent=1 // pred_region
      _
    $region41: #{tpu_custom_call.1} parent=1 // pred_fallthru
      _
    // Predicated region
    $region42: #{tpu_custom_call.1} parent=1 // pred_check
      _
    $region43: #{tpu_custom_call.1} parent=1 // pred_check_branch
      %114 = sbr.rel (0) target = $region45
    $region44: #{tpu_custom_call.1} parent=1 // pred_region
      %s116 = ssub.s32 2048, 2048
      %117 = vsyncadd [#allocation18], %s116
      %s118 = sshll.u32 [#allocation17], 4
      %s119 = int_to_ptr.vmem [resolvable:$true] %s118
      %124 = dma.hbm_to_vmem [thread:$0]  %s10, 2048, %s119, [#allocation18], 128, 128, 8
    $region45: #{tpu_custom_call.1} parent=1 // pred_fallthru
      _
    // Predicated region
    $region46: #{tpu_custom_call.1} parent=1 // pred_check
      _
    $region47: #{tpu_custom_call.1} parent=1 // pred_check_branch
      %126 = sbr.rel (0) target = $region49
    $region48: #{tpu_custom_call.1} parent=1 // pred_region
      _
    $region49: #{tpu_custom_call.1} parent=1 // pred_fallthru
      _
    // Predicated region
    $region50: #{tpu_custom_call.1} parent=1 // pred_check
      _
    $region51: #{tpu_custom_call.1} parent=1 // pred_check_branch
      %128 = sbr.rel (0) target = $region53
    $region52: #{tpu_custom_call.1} parent=1 // pred_region
      %129 = dma.done [#allocation6], 1024
    $region53: #{tpu_custom_call.1} parent=1 // pred_fallthru
      _
    // Predicated region
    $region54: #{tpu_custom_call.1} parent=1 // pred_check
      _
    $region55: #{tpu_custom_call.1} parent=1 // pred_check_branch
      %131 = sbr.rel (0) target = $region57
    $region56: #{tpu_custom_call.1} parent=1 // pred_region
      %132 = dma.done [#allocation9], 1024
    $region57: #{tpu_custom_call.1} parent=1 // pred_fallthru
      _
    // Predicated region
    $region58: #{tpu_custom_call.1} parent=1 // pred_check
      _
    $region59: #{tpu_custom_call.1} parent=1 // pred_check_branch
      %134 = sbr.rel (0) target = $region61
    $region60: #{tpu_custom_call.1} parent=1 // pred_region
      %135 = dma.done [#allocation9], 8192
    $region61: #{tpu_custom_call.1} parent=1 // pred_fallthru
      _
    // Predicated region
    $region62: #{tpu_custom_call.1} parent=1 // pred_check
      _
    $region63: #{tpu_custom_call.1} parent=1 // pred_check_branch
      %137 = sbr.rel (0) target = $region65
    $region64: #{tpu_custom_call.1} parent=1 // pred_region
      %138 = dma.done [#allocation12], 8192
    $region65: #{tpu_custom_call.1} parent=1 // pred_fallthru
      _
    // Predicated region
    $region66: #{tpu_custom_call.1} parent=1 // pred_check
      _
    $region67: #{tpu_custom_call.1} parent=1 // pred_check_branch
      %140 = sbr.rel (0) target = $region69
    $region68: #{tpu_custom_call.1} parent=1 // pred_region
      %141 = dma.done [#allocation12], 8192
    $region69: #{tpu_custom_call.1} parent=1 // pred_fallthru
      _
    // Predicated region
    $region70: #{tpu_custom_call.1} parent=1 // pred_check
      _
    $region71: #{tpu_custom_call.1} parent=1 // pred_check_branch
      %143 = sbr.rel (0) target = $region73
    $region72: #{tpu_custom_call.1} parent=1 // pred_region
      %144 = dma.done [#allocation15], 8192
    $region73: #{tpu_custom_call.1} parent=1 // pred_fallthru
      _
    // Predicated region
    $region74: #{tpu_custom_call.1} parent=1 // pred_check
      _
    $region75: #{tpu_custom_call.1} parent=1 // pred_check_branch
      %146 = sbr.rel (0) target = $region77
    $region76: #{tpu_custom_call.1} parent=1 // pred_region
      %147 = dma.done [#allocation15], 2048
    $region77: #{tpu_custom_call.1} parent=1 // pred_fallthru
      _
    // Predicated region
    $region78: #{tpu_custom_call.1} parent=1 // pred_check
      _
    $region79: #{tpu_custom_call.1} parent=1 // pred_check_branch
      %149 = sbr.rel (0) target = $region81
    $region80: #{tpu_custom_call.1} parent=1 // pred_region
      %150 = dma.done [#allocation18], 2048
    $region81: #{tpu_custom_call.1} parent=1 // pred_fallthru
      _
    %v151 = vld [vmem:[#allocation11] sm:$0xff]
    %v152 = vld [vmem:[#allocation11 + $0x8] sm:$0xff]
    %v153 = vld [vmem:[#allocation11 + $0x10] sm:$0xff]
    %v154 = vld [vmem:[#allocation11 + $0x18] sm:$0xff]
    %v155 = vld [vmem:[#allocation11 + $0x20] sm:$0xff]
    %v156 = vld [vmem:[#allocation11 + $0x28] sm:$0xff]
    %v157 = vld [vmem:[#allocation11 + $0x30] sm:$0xff]
    %v158 = vld [vmem:[#allocation11 + $0x38] sm:$0xff]
    %v159 = vld [vmem:[#allocation11 + $0x40] sm:$0xff]
    %v160 = vld [vmem:[#allocation11 + $0x48] sm:$0xff]
    %v161 = vld [vmem:[#allocation11 + $0x50] sm:$0xff]
    %v162 = vld [vmem:[#allocation11 + $0x58] sm:$0xff]
    %v163 = vld [vmem:[#allocation11 + $0x60] sm:$0xff]
    %v164 = vld [vmem:[#allocation11 + $0x68] sm:$0xff]
    %v165 = vld [vmem:[#allocation11 + $0x70] sm:$0xff]
    %v166 = vld [vmem:[#allocation11 + $0x78] sm:$0xff]
    %v167 = vld [vmem:[#allocation11 + $0x80] sm:$0xff]
    %v168 = vld [vmem:[#allocation11 + $0x88] sm:$0xff]
    %v169 = vld [vmem:[#allocation11 + $0x90] sm:$0xff]
    %v170 = vld [vmem:[#allocation11 + $0x98] sm:$0xff]
    %v171 = vld [vmem:[#allocation11 + $0xa0] sm:$0xff]
    %v172 = vld [vmem:[#allocation11 + $0xa8] sm:$0xff]
    %v173 = vld [vmem:[#allocation11 + $0xb0] sm:$0xff]
    %v174 = vld [vmem:[#allocation11 + $0xb8] sm:$0xff]
    %v175 = vld [vmem:[#allocation11 + $0xc0] sm:$0xff]
    %v176 = vld [vmem:[#allocation11 + $0xc8] sm:$0xff]
    %v177 = vld [vmem:[#allocation11 + $0xd0] sm:$0xff]
    %v178 = vld [vmem:[#allocation11 + $0xd8] sm:$0xff]
    %v179 = vld [vmem:[#allocation11 + $0xe0] sm:$0xff]
    %v180 = vld [vmem:[#allocation11 + $0xe8] sm:$0xff]
    %v181 = vld [vmem:[#allocation11 + $0xf0] sm:$0xff]
    %v182 = vld [vmem:[#allocation11 + $0xf8] sm:$0xff]
    %v183 = vld [vmem:[#allocation11 + $0x100] sm:$0xff]
    %v184 = vld [vmem:[#allocation11 + $0x108] sm:$0xff]
    %v185 = vld [vmem:[#allocation11 + $0x110] sm:$0xff]
    %v186 = vld [vmem:[#allocation11 + $0x118] sm:$0xff]
    %v187 = vld [vmem:[#allocation11 + $0x120] sm:$0xff]
    %v188 = vld [vmem:[#allocation11 + $0x128] sm:$0xff]
    %v189 = vld [vmem:[#allocation11 + $0x130] sm:$0xff]
    %v190 = vld [vmem:[#allocation11 + $0x138] sm:$0xff]
    %v191 = vld [vmem:[#allocation11 + $0x140] sm:$0xff]
    %v192 = vld [vmem:[#allocation11 + $0x148] sm:$0xff]
    %v193 = vld [vmem:[#allocation11 + $0x150] sm:$0xff]
    %v194 = vld [vmem:[#allocation11 + $0x158] sm:$0xff]
    %v195 = vld [vmem:[#allocation11 + $0x160] sm:$0xff]
    %v196 = vld [vmem:[#allocation11 + $0x168] sm:$0xff]
    %v197 = vld [vmem:[#allocation11 + $0x170] sm:$0xff]
    %v198 = vld [vmem:[#allocation11 + $0x178] sm:$0xff]
    %v199 = vld [vmem:[#allocation11 + $0x180] sm:$0xff]
    %v200 = vld [vmem:[#allocation11 + $0x188] sm:$0xff]
    %v201 = vld [vmem:[#allocation11 + $0x190] sm:$0xff]
    %v202 = vld [vmem:[#allocation11 + $0x198] sm:$0xff]
    %v203 = vld [vmem:[#allocation11 + $0x1a0] sm:$0xff]
    %v204 = vld [vmem:[#allocation11 + $0x1a8] sm:$0xff]
    %v205 = vld [vmem:[#allocation11 + $0x1b0] sm:$0xff]
    %v206 = vld [vmem:[#allocation11 + $0x1b8] sm:$0xff]
    %v207 = vld [vmem:[#allocation11 + $0x1c0] sm:$0xff]
    %v208 = vld [vmem:[#allocation11 + $0x1c8] sm:$0xff]
    %v209 = vld [vmem:[#allocation11 + $0x1d0] sm:$0xff]
    %v210 = vld [vmem:[#allocation11 + $0x1d8] sm:$0xff]
    %v211 = vld [vmem:[#allocation11 + $0x1e0] sm:$0xff]
    %v212 = vld [vmem:[#allocation11 + $0x1e8] sm:$0xff]
    %v213 = vld [vmem:[#allocation11 + $0x1f0] sm:$0xff]
    %v214 = vld [vmem:[#allocation11 + $0x1f8] sm:$0xff]
    %v215 = vld [vmem:[#allocation14] sm:$0xff]
    %v216 = vld [vmem:[#allocation14 + $0x8] sm:$0xff]
    %v217 = vld [vmem:[#allocation14 + $0x10] sm:$0xff]
    %v218 = vld [vmem:[#allocation14 + $0x18] sm:$0xff]
    %v219 = vld [vmem:[#allocation14 + $0x20] sm:$0xff]
    %v220 = vld [vmem:[#allocation14 + $0x28] sm:$0xff]
    %v221 = vld [vmem:[#allocation14 + $0x30] sm:$0xff]
    %v222 = vld [vmem:[#allocation14 + $0x38] sm:$0xff]
    %v223 = vld [vmem:[#allocation14 + $0x40] sm:$0xff]
    %v224 = vld [vmem:[#allocation14 + $0x48] sm:$0xff]
    %v225 = vld [vmem:[#allocation14 + $0x50] sm:$0xff]
    %v226 = vld [vmem:[#allocation14 + $0x58] sm:$0xff]
    %v227 = vld [vmem:[#allocation14 + $0x60] sm:$0xff]
    %v228 = vld [vmem:[#allocation14 + $0x68] sm:$0xff]
    %v229 = vld [vmem:[#allocation14 + $0x70] sm:$0xff]
    %v230 = vld [vmem:[#allocation14 + $0x78] sm:$0xff]
    %v231 = vld [vmem:[#allocation14 + $0x80] sm:$0xff]
    %v232 = vld [vmem:[#allocation14 + $0x88] sm:$0xff]
    %v233 = vld [vmem:[#allocation14 + $0x90] sm:$0xff]
    %v234 = vld [vmem:[#allocation14 + $0x98] sm:$0xff]
    %v235 = vld [vmem:[#allocation14 + $0xa0] sm:$0xff]
    %v236 = vld [vmem:[#allocation14 + $0xa8] sm:$0xff]
    %v237 = vld [vmem:[#allocation14 + $0xb0] sm:$0xff]
    %v238 = vld [vmem:[#allocation14 + $0xb8] sm:$0xff]
    %v239 = vld [vmem:[#allocation14 + $0xc0] sm:$0xff]
    %v240 = vld [vmem:[#allocation14 + $0xc8] sm:$0xff]
    %v241 = vld [vmem:[#allocation14 + $0xd0] sm:$0xff]
    %v242 = vld [vmem:[#allocation14 + $0xd8] sm:$0xff]
    %v243 = vld [vmem:[#allocation14 + $0xe0] sm:$0xff]
    %v244 = vld [vmem:[#allocation14 + $0xe8] sm:$0xff]
    %v245 = vld [vmem:[#allocation14 + $0xf0] sm:$0xff]
    %v246 = vld [vmem:[#allocation14 + $0xf8] sm:$0xff]
    %v247 = vld [vmem:[#allocation14 + $0x100] sm:$0xff]
    %v248 = vld [vmem:[#allocation14 + $0x108] sm:$0xff]
    %v249 = vld [vmem:[#allocation14 + $0x110] sm:$0xff]
    %v250 = vld [vmem:[#allocation14 + $0x118] sm:$0xff]
    %v251 = vld [vmem:[#allocation14 + $0x120] sm:$0xff]
    %v252 = vld [vmem:[#allocation14 + $0x128] sm:$0xff]
    %v253 = vld [vmem:[#allocation14 + $0x130] sm:$0xff]
    %v254 = vld [vmem:[#allocation14 + $0x138] sm:$0xff]
    %v255 = vld [vmem:[#allocation14 + $0x140] sm:$0xff]
    %v256 = vld [vmem:[#allocation14 + $0x148] sm:$0xff]
    %v257 = vld [vmem:[#allocation14 + $0x150] sm:$0xff]
    %v258 = vld [vmem:[#allocation14 + $0x158] sm:$0xff]
    %v259 = vld [vmem:[#allocation14 + $0x160] sm:$0xff]
    %v260 = vld [vmem:[#allocation14 + $0x168] sm:$0xff]
    %v261 = vld [vmem:[#allocation14 + $0x170] sm:$0xff]
    %v262 = vld [vmem:[#allocation14 + $0x178] sm:$0xff]
    %v263 = vld [vmem:[#allocation14 + $0x180] sm:$0xff]
    %v264 = vld [vmem:[#allocation14 + $0x188] sm:$0xff]
    %v265 = vld [vmem:[#allocation14 + $0x190] sm:$0xff]
    %v266 = vld [vmem:[#allocation14 + $0x198] sm:$0xff]
    %v267 = vld [vmem:[#allocation14 + $0x1a0] sm:$0xff]
    %v268 = vld [vmem:[#allocation14 + $0x1a8] sm:$0xff]
    %v269 = vld [vmem:[#allocation14 + $0x1b0] sm:$0xff]
    %v270 = vld [vmem:[#allocation14 + $0x1b8] sm:$0xff]
    %v271 = vld [vmem:[#allocation14 + $0x1c0] sm:$0xff]
    %v272 = vld [vmem:[#allocation14 + $0x1c8] sm:$0xff]
    %v273 = vld [vmem:[#allocation14 + $0x1d0] sm:$0xff]
    %v274 = vld [vmem:[#allocation14 + $0x1d8] sm:$0xff]
    %v275 = vld [vmem:[#allocation14 + $0x1e0] sm:$0xff]
    %v276 = vld [vmem:[#allocation14 + $0x1e8] sm:$0xff]
    %v277 = vld [vmem:[#allocation14 + $0x1f0] sm:$0xff]
    %v278 = vld [vmem:[#allocation14 + $0x1f8] sm:$0xff]
    %v279 = vld [vmem:[#allocation5] sm:$0xff]
    %v280 = vld [vmem:[#allocation5 + $0x8] sm:$0xff]
    %v281 = vld [vmem:[#allocation5 + $0x10] sm:$0xff]
    %v282 = vld [vmem:[#allocation5 + $0x18] sm:$0xff]
    %v283 = vld [vmem:[#allocation5 + $0x20] sm:$0xff]
    %v284 = vld [vmem:[#allocation5 + $0x28] sm:$0xff]
    %v285 = vld [vmem:[#allocation5 + $0x30] sm:$0xff]
    %v286 = vld [vmem:[#allocation5 + $0x38] sm:$0xff]
    %v287 = vld [vmem:[#allocation10] sm:$0xff]
    %v288 = vld [vmem:[#allocation10 + $0x8] sm:$0xff]
    %v289 = vld [vmem:[#allocation10 + $0x10] sm:$0xff]
    %v290 = vld [vmem:[#allocation10 + $0x18] sm:$0xff]
    %v291 = vld [vmem:[#allocation10 + $0x20] sm:$0xff]
    %v292 = vld [vmem:[#allocation10 + $0x28] sm:$0xff]
    %v293 = vld [vmem:[#allocation10 + $0x30] sm:$0xff]
    %v294 = vld [vmem:[#allocation10 + $0x38] sm:$0xff]
    %v295 = vld [vmem:[#allocation10 + $0x40] sm:$0xff]
    %v296 = vld [vmem:[#allocation10 + $0x48] sm:$0xff]
    %v297 = vld [vmem:[#allocation10 + $0x50] sm:$0xff]
    %v298 = vld [vmem:[#allocation10 + $0x58] sm:$0xff]
    %v299 = vld [vmem:[#allocation10 + $0x60] sm:$0xff]
    %v300 = vld [vmem:[#allocation10 + $0x68] sm:$0xff]
    %v301 = vld [vmem:[#allocation10 + $0x70] sm:$0xff]
    %v302 = vld [vmem:[#allocation10 + $0x78] sm:$0xff]
    %v303 = vld [vmem:[#allocation10 + $0x80] sm:$0xff]
    %v304 = vld [vmem:[#allocation10 + $0x88] sm:$0xff]
    %v305 = vld [vmem:[#allocation10 + $0x90] sm:$0xff]
    %v306 = vld [vmem:[#allocation10 + $0x98] sm:$0xff]
    %v307 = vld [vmem:[#allocation10 + $0xa0] sm:$0xff]
    %v308 = vld [vmem:[#allocation10 + $0xa8] sm:$0xff]
    %v309 = vld [vmem:[#allocation10 + $0xb0] sm:$0xff]
    %v310 = vld [vmem:[#allocation10 + $0xb8] sm:$0xff]
    %v311 = vld [vmem:[#allocation10 + $0xc0] sm:$0xff]
    %v312 = vld [vmem:[#allocation10 + $0xc8] sm:$0xff]
    %v313 = vld [vmem:[#allocation10 + $0xd0] sm:$0xff]
    %v314 = vld [vmem:[#allocation10 + $0xd8] sm:$0xff]
    %v315 = vld [vmem:[#allocation10 + $0xe0] sm:$0xff]
    %v316 = vld [vmem:[#allocation10 + $0xe8] sm:$0xff]
    %v317 = vld [vmem:[#allocation10 + $0xf0] sm:$0xff]
    %v318 = vld [vmem:[#allocation10 + $0xf8] sm:$0xff]
    %v319 = vld [vmem:[#allocation10 + $0x100] sm:$0xff]
    %v320 = vld [vmem:[#allocation10 + $0x108] sm:$0xff]
    %v321 = vld [vmem:[#allocation10 + $0x110] sm:$0xff]
    %v322 = vld [vmem:[#allocation10 + $0x118] sm:$0xff]
    %v323 = vld [vmem:[#allocation10 + $0x120] sm:$0xff]
    %v324 = vld [vmem:[#allocation10 + $0x128] sm:$0xff]
    %v325 = vld [vmem:[#allocation10 + $0x130] sm:$0xff]
    %v326 = vld [vmem:[#allocation10 + $0x138] sm:$0xff]
    %v327 = vld [vmem:[#allocation10 + $0x140] sm:$0xff]
    %v328 = vld [vmem:[#allocation10 + $0x148] sm:$0xff]
    %v329 = vld [vmem:[#allocation10 + $0x150] sm:$0xff]
    %v330 = vld [vmem:[#allocation10 + $0x158] sm:$0xff]
    %v331 = vld [vmem:[#allocation10 + $0x160] sm:$0xff]
    %v332 = vld [vmem:[#allocation10 + $0x168] sm:$0xff]
    %v333 = vld [vmem:[#allocation10 + $0x170] sm:$0xff]
    %v334 = vld [vmem:[#allocation10 + $0x178] sm:$0xff]
    %v335 = vld [vmem:[#allocation10 + $0x180] sm:$0xff]
    %v336 = vld [vmem:[#allocation10 + $0x188] sm:$0xff]
    %v337 = vld [vmem:[#allocation10 + $0x190] sm:$0xff]
    %v338 = vld [vmem:[#allocation10 + $0x198] sm:$0xff]
    %v339 = vld [vmem:[#allocation10 + $0x1a0] sm:$0xff]
    %v340 = vld [vmem:[#allocation10 + $0x1a8] sm:$0xff]
    %v341 = vld [vmem:[#allocation10 + $0x1b0] sm:$0xff]
    %v342 = vld [vmem:[#allocation10 + $0x1b8] sm:$0xff]
    %v343 = vld [vmem:[#allocation10 + $0x1c0] sm:$0xff]
    %v344 = vld [vmem:[#allocation10 + $0x1c8] sm:$0xff]
    %v345 = vld [vmem:[#allocation10 + $0x1d0] sm:$0xff]
    %v346 = vld [vmem:[#allocation10 + $0x1d8] sm:$0xff]
    %v347 = vld [vmem:[#allocation10 + $0x1e0] sm:$0xff]
    %v348 = vld [vmem:[#allocation10 + $0x1e8] sm:$0xff]
    %v349 = vld [vmem:[#allocation10 + $0x1f0] sm:$0xff]
    %v350 = vld [vmem:[#allocation10 + $0x1f8] sm:$0xff]
    %v351 = vld [vmem:[%s4] sm:$0xf]
    %v353 = vlaneseq
    %v354 = vshrl.u32 %v353, 7
    %v355 = vsub.s32 0, %v354
    %v356 = vrot.slane %v351, %v355
    %v357 = vlaneseq
    %v358 = vshrl.u32 %v357, 7
    %v359 = vsub.s32 1, %v358
    %v360 = vrot.slane %v351, %v359
    %v361 = vlaneseq
    %v362 = vshrl.u32 %v361, 7
    %v363 = vsub.s32 2, %v362
    %v364 = vrot.slane %v351, %v363
    %v365 = vlaneseq
    %v366 = vshrl.u32 %v365, 7
    %v367 = vsub.s32 3, %v366
    %v368 = vrot.slane %v351, %v367
    %373 = vmatprep.subr.mxu0 %v288
    %374 = vmatpush1.msra.mxu0 %v287
    %375 = vmatprep.subr.mxu0 %v292
    %376 = vmatpush1.msra.mxu0 %v291
    %377 = vmatprep.subr.mxu0 %v296
    %378 = vmatpush1.msra.mxu0 %v295
    %379 = vmatprep.subr.mxu0 %v300
    %380 = vmatpush1.msra.mxu0 %v299
    %381 = vmatprep.subr.mxu0 %v304
    %382 = vmatpush1.msra.mxu0 %v303
    %383 = vmatprep.subr.mxu0 %v308
    %384 = vmatpush1.msra.mxu0 %v307
    %385 = vmatprep.subr.mxu0 %v312
    %386 = vmatpush1.msra.mxu0 %v311
    %387 = vmatprep.subr.mxu0 %v316
    %388 = vmatpush1.msra.mxu0 %v315
    %389 = vmatprep.subr.mxu0 %v320
    %390 = vmatpush1.msra.mxu0 %v319
    %391 = vmatprep.subr.mxu0 %v324
    %392 = vmatpush1.msra.mxu0 %v323
    %393 = vmatprep.subr.mxu0 %v328
    %394 = vmatpush1.msra.mxu0 %v327
    %395 = vmatprep.subr.mxu0 %v332
    %396 = vmatpush1.msra.mxu0 %v331
    %397 = vmatprep.subr.mxu0 %v336
    %398 = vmatpush1.msra.mxu0 %v335
    %399 = vmatprep.subr.mxu0 %v340
    %400 = vmatpush1.msra.mxu0 %v339
    %401 = vmatprep.subr.mxu0 %v344
    %402 = vmatpush1.msra.mxu0 %v343
    %403 = vmatprep.subr.mxu0 %v348
    %404 = vmatpush1.msra.mxu0 %v347
    %405 = vmatprep.subr.mxu0 0.0
    %406 = vmatpush1.msra.mxu0 0.0
    %407 = vmatprep.subr.mxu0 0.0
    %408 = vmatpush1.msra.mxu0 0.0
    %409 = vmatprep.subr.mxu0 0.0
    %410 = vmatpush1.msra.mxu0 0.0
    %411 = vmatprep.subr.mxu0 0.0
    %412 = vmatpush1.msra.mxu0 0.0
    %413 = vmatprep.subr.mxu0 0.0
    %414 = vmatpush1.msra.mxu0 0.0
    %415 = vmatprep.subr.mxu0 0.0
    %416 = vmatpush1.msra.mxu0 0.0
    %417 = vmatprep.subr.mxu0 0.0
    %418 = vmatpush1.msra.mxu0 0.0
    %419 = vmatprep.subr.mxu0 0.0
    %420 = vmatpush1.msra.mxu0 0.0
    %421 = vmatprep.subr.mxu0 0.0
    %422 = vmatpush1.msra.mxu0 0.0
    %423 = vmatprep.subr.mxu0 0.0
    %424 = vmatpush1.msra.mxu0 0.0
    %425 = vmatprep.subr.mxu0 0.0
    %426 = vmatpush1.msra.mxu0 0.0
    %427 = vmatprep.subr.mxu0 0.0
    %428 = vmatpush1.msra.mxu0 0.0
    %429 = vmatprep.subr.mxu0 0.0
    %430 = vmatpush1.msra.mxu0 0.0
    %431 = vmatprep.subr.mxu0 0.0
    %432 = vmatpush1.msra.mxu0 0.0
    %433 = vmatprep.subr.mxu0 0.0
    %434 = vmatpush1.msra.mxu0 0.0
    %435 = vmatprep.subr.mxu0 0.0
    %436 = vmatpush1.msra.mxu0 0.0
    %437 = vmatprep.mubr.f32.mxu0 0.0
    %438 = vmatmul.mubr.f32.gmra.mrb[0].mxu0 %v279
    %v439 = vpop.f32.mrb[0].mxu0
    %v440 = vadd.f32 %v356, %v439
    %v441 = vpop.f32.mrb[0].mxu0
    %v442 = vadd.f32 %v360, %v441
    %443 = vmatprep.mubr.f32.mxu0 0.0
    %444 = vmatmul.mubr.f32.gmra.mrb[0].mxu0 %v280
    %v445 = vpop.f32.mrb[0].mxu0
    %v446 = vadd.f32 %v356, %v445
    %v447 = vpop.f32.mrb[0].mxu0
    %v448 = vadd.f32 %v360, %v447
    %449 = vmatprep.mubr.f32.mxu0 0.0
    %450 = vmatmul.mubr.f32.gmra.mrb[0].mxu0 %v281
    %v451 = vpop.f32.mrb[0].mxu0
    %v452 = vadd.f32 %v356, %v451
    %v453 = vpop.f32.mrb[0].mxu0
    %v454 = vadd.f32 %v360, %v453
    %455 = vmatprep.mubr.f32.mxu0 0.0
    %456 = vmatmul.mubr.f32.gmra.mrb[0].mxu0 %v282
    %v457 = vpop.f32.mrb[0].mxu0
    %v458 = vadd.f32 %v356, %v457
    %v459 = vpop.f32.mrb[0].mxu0
    %v460 = vadd.f32 %v360, %v459
    %461 = vmatprep.mubr.f32.mxu0 0.0
    %462 = vmatmul.mubr.f32.gmra.mrb[0].mxu0 %v283
    %v463 = vpop.f32.mrb[0].mxu0
    %v464 = vadd.f32 %v356, %v463
    %v465 = vpop.f32.mrb[0].mxu0
    %v466 = vadd.f32 %v360, %v465
    %467 = vmatprep.mubr.f32.mxu0 0.0
    %468 = vmatmul.mubr.f32.gmra.mrb[0].mxu0 %v284
    %v469 = vpop.f32.mrb[0].mxu0
    %v470 = vadd.f32 %v356, %v469
    %v471 = vpop.f32.mrb[0].mxu0
    %v472 = vadd.f32 %v360, %v471
    %473 = vmatprep.mubr.f32.mxu0 0.0
    %474 = vmatmul.mubr.f32.gmra.mrb[0].mxu0 %v285
    %v475 = vpop.f32.mrb[0].mxu0
    %v476 = vadd.f32 %v356, %v475
    %v477 = vpop.f32.mrb[0].mxu0
    %v478 = vadd.f32 %v360, %v477
    %479 = vmatprep.mubr.f32.mxu0 0.0
    %480 = vmatmul.mubr.f32.gmra.mrb[0].mxu0 %v286
    %v481 = vpop.f32.mrb[0].mxu0
    %v482 = vadd.f32 %v356, %v481
    %v483 = vpop.f32.mrb[0].mxu0
    %v484 = vadd.f32 %v360, %v483
    %485 = vdwg.mxu0
    %486 = vmatprep.subr.mxu0 %v290
    %487 = vmatpush1.msra.mxu0 %v289
    %488 = vmatprep.subr.mxu0 %v294
    %489 = vmatpush1.msra.mxu0 %v293
    %490 = vmatprep.subr.mxu0 %v298
    %491 = vmatpush1.msra.mxu0 %v297
    %492 = vmatprep.subr.mxu0 %v302
    %493 = vmatpush1.msra.mxu0 %v301
    %494 = vmatprep.subr.mxu0 %v306
    %495 = vmatpush1.msra.mxu0 %v305
    %496 = vmatprep.subr.mxu0 %v310
    %497 = vmatpush1.msra.mxu0 %v309
    %498 = vmatprep.subr.mxu0 %v314
    %499 = vmatpush1.msra.mxu0 %v313
    %500 = vmatprep.subr.mxu0 %v318
    %501 = vmatpush1.msra.mxu0 %v317
    %502 = vmatprep.subr.mxu0 %v322
    %503 = vmatpush1.msra.mxu0 %v321
    %504 = vmatprep.subr.mxu0 %v326
    %505 = vmatpush1.msra.mxu0 %v325
    %506 = vmatprep.subr.mxu0 %v330
    %507 = vmatpush1.msra.mxu0 %v329
    %508 = vmatprep.subr.mxu0 %v334
    %509 = vmatpush1.msra.mxu0 %v333
    %510 = vmatprep.subr.mxu0 %v338
    %511 = vmatpush1.msra.mxu0 %v337
    %512 = vmatprep.subr.mxu0 %v342
    %513 = vmatpush1.msra.mxu0 %v341
    %514 = vmatprep.subr.mxu0 %v346
    %515 = vmatpush1.msra.mxu0 %v345
    %516 = vmatprep.subr.mxu0 %v350
    %517 = vmatpush1.msra.mxu0 %v349
    %518 = vmatprep.subr.mxu0 0.0
    %519 = vmatpush1.msra.mxu0 0.0
    %520 = vmatprep.subr.mxu0 0.0
    %521 = vmatpush1.msra.mxu0 0.0
    %522 = vmatprep.subr.mxu0 0.0
    %523 = vmatpush1.msra.mxu0 0.0
    %524 = vmatprep.subr.mxu0 0.0
    %525 = vmatpush1.msra.mxu0 0.0
    %526 = vmatprep.subr.mxu0 0.0
    %527 = vmatpush1.msra.mxu0 0.0
    %528 = vmatprep.subr.mxu0 0.0
    %529 = vmatpush1.msra.mxu0 0.0
    %530 = vmatprep.subr.mxu0 0.0
    %531 = vmatpush1.msra.mxu0 0.0
    %532 = vmatprep.subr.mxu0 0.0
    %533 = vmatpush1.msra.mxu0 0.0
    %534 = vmatprep.subr.mxu0 0.0
    %535 = vmatpush1.msra.mxu0 0.0
    %536 = vmatprep.subr.mxu0 0.0
    %537 = vmatpush1.msra.mxu0 0.0
    %538 = vmatprep.subr.mxu0 0.0
    %539 = vmatpush1.msra.mxu0 0.0
    %540 = vmatprep.subr.mxu0 0.0
    %541 = vmatpush1.msra.mxu0 0.0
    %542 = vmatprep.subr.mxu0 0.0
    %543 = vmatpush1.msra.mxu0 0.0
    %544 = vmatprep.subr.mxu0 0.0
    %545 = vmatpush1.msra.mxu0 0.0
    %546 = vmatprep.subr.mxu0 0.0
    %547 = vmatpush1.msra.mxu0 0.0
    %548 = vmatprep.subr.mxu0 0.0
    %549 = vmatpush1.msra.mxu0 0.0
    %550 = vmatprep.mubr.f32.mxu0 0.0
    %551 = vmatmul.mubr.f32.gmra.mrb[0].mxu0 %v279
    %v552 = vpop.f32.mrb[0].mxu0
    %v553 = vadd.f32 %v364, %v552
    %v554 = vpop.f32.mrb[0].mxu0
    %v555 = vadd.f32 %v368, %v554
    %556 = vmatprep.mubr.f32.mxu0 0.0
    %557 = vmatmul.mubr.f32.gmra.mrb[0].mxu0 %v280
    %v558 = vpop.f32.mrb[0].mxu0
    %v559 = vadd.f32 %v364, %v558
    %v560 = vpop.f32.mrb[0].mxu0
    %v561 = vadd.f32 %v368, %v560
    %562 = vmatprep.mubr.f32.mxu0 0.0
    %563 = vmatmul.mubr.f32.gmra.mrb[0].mxu0 %v281
    %v564 = vpop.f32.mrb[0].mxu0
    %v565 = vadd.f32 %v364, %v564
    %v566 = vpop.f32.mrb[0].mxu0
    %v567 = vadd.f32 %v368, %v566
    %568 = vmatprep.mubr.f32.mxu0 0.0
    %569 = vmatmul.mubr.f32.gmra.mrb[0].mxu0 %v282
    %v570 = vpop.f32.mrb[0].mxu0
    %v571 = vadd.f32 %v364, %v570
    %v572 = vpop.f32.mrb[0].mxu0
    %v573 = vadd.f32 %v368, %v572
    %574 = vmatprep.mubr.f32.mxu0 0.0
    %575 = vmatmul.mubr.f32.gmra.mrb[0].mxu0 %v283
    %v576 = vpop.f32.mrb[0].mxu0
    %v577 = vadd.f32 %v364, %v576
    %v578 = vpop.f32.mrb[0].mxu0
    %v579 = vadd.f32 %v368, %v578
    %580 = vmatprep.mubr.f32.mxu0 0.0
    %581 = vmatmul.mubr.f32.gmra.mrb[0].mxu0 %v284
    %v582 = vpop.f32.mrb[0].mxu0
    %v583 = vadd.f32 %v364, %v582
    %v584 = vpop.f32.mrb[0].mxu0
    %v585 = vadd.f32 %v368, %v584
    %586 = vmatprep.mubr.f32.mxu0 0.0
    %587 = vmatmul.mubr.f32.gmra.mrb[0].mxu0 %v285
    %v588 = vpop.f32.mrb[0].mxu0
    %v589 = vadd.f32 %v364, %v588
    %v590 = vpop.f32.mrb[0].mxu0
    %v591 = vadd.f32 %v368, %v590
    %592 = vmatprep.mubr.f32.mxu0 0.0
    %593 = vmatmul.mubr.f32.gmra.mrb[0].mxu0 %v286
    %v594 = vpop.f32.mrb[0].mxu0
    %v595 = vadd.f32 %v364, %v594
    %v596 = vpop.f32.mrb[0].mxu0
    %v597 = vadd.f32 %v368, %v596
    %598 = vdwg.mxu0
    %599 = vst [vmem:[#allocation2] sm:$0xff] %v440
    %600 = vst [vmem:[#allocation2 + $0x8] sm:$0xff] %v442
    %601 = vst [vmem:[#allocation2 + $0x10] sm:$0xff] %v553
    %602 = vst [vmem:[#allocation2 + $0x18] sm:$0xff] %v555
    %603 = vst [vmem:[#allocation2 + $0x20] sm:$0xff] %v446
    %604 = vst [vmem:[#allocation2 + $0x28] sm:$0xff] %v448
    %605 = vst [vmem:[#allocation2 + $0x30] sm:$0xff] %v559
    %606 = vst [vmem:[#allocation2 + $0x38] sm:$0xff] %v561
    %607 = vst [vmem:[#allocation2 + $0x40] sm:$0xff] %v452
    %608 = vst [vmem:[#allocation2 + $0x48] sm:$0xff] %v454
    %609 = vst [vmem:[#allocation2 + $0x50] sm:$0xff] %v565
    %610 = vst [vmem:[#allocation2 + $0x58] sm:$0xff] %v567
    %611 = vst [vmem:[#allocation2 + $0x60] sm:$0xff] %v458
    %612 = vst [vmem:[#allocation2 + $0x68] sm:$0xff] %v460
    %613 = vst [vmem:[#allocation2 + $0x70] sm:$0xff] %v571
    %614 = vst [vmem:[#allocation2 + $0x78] sm:$0xff] %v573
    %615 = vst [vmem:[#allocation2 + $0x80] sm:$0xff] %v464
    %616 = vst [vmem:[#allocation2 + $0x88] sm:$0xff] %v466
    %617 = vst [vmem:[#allocation2 + $0x90] sm:$0xff] %v577
    %618 = vst [vmem:[#allocation2 + $0x98] sm:$0xff] %v579
    %619 = vst [vmem:[#allocation2 + $0xa0] sm:$0xff] %v470
    %620 = vst [vmem:[#allocation2 + $0xa8] sm:$0xff] %v472
    %621 = vst [vmem:[#allocation2 + $0xb0] sm:$0xff] %v583
    %622 = vst [vmem:[#allocation2 + $0xb8] sm:$0xff] %v585
    %623 = vst [vmem:[#allocation2 + $0xc0] sm:$0xff] %v476
    %624 = vst [vmem:[#allocation2 + $0xc8] sm:$0xff] %v478
    %625 = vst [vmem:[#allocation2 + $0xd0] sm:$0xff] %v589
    %626 = vst [vmem:[#allocation2 + $0xd8] sm:$0xff] %v591
    %627 = vst [vmem:[#allocation2 + $0xe0] sm:$0xff] %v482
    %628 = vst [vmem:[#allocation2 + $0xe8] sm:$0xff] %v484
    %629 = vst [vmem:[#allocation2 + $0xf0] sm:$0xff] %v595
    %630 = vst [vmem:[#allocation2 + $0xf8] sm:$0xff] %v597
    %v631 = vld [vmem:[#allocation8] sm:$0xff]
    %v632 = vld [vmem:[#allocation8 + $0x8] sm:$0xff]
    %v633 = vld [vmem:[#allocation8 + $0x10] sm:$0xff]
    %v634 = vld [vmem:[#allocation8 + $0x18] sm:$0xff]
    %v635 = vld [vmem:[#allocation8 + $0x20] sm:$0xff]
    %v636 = vld [vmem:[#allocation8 + $0x28] sm:$0xff]
    %v637 = vld [vmem:[#allocation8 + $0x30] sm:$0xff]
    %v638 = vld [vmem:[#allocation8 + $0x38] sm:$0xff]
    %v639 = vld [vmem:[#allocation13] sm:$0xff]
    %v640 = vld [vmem:[#allocation13 + $0x8] sm:$0xff]
    %v641 = vld [vmem:[#allocation13 + $0x10] sm:$0xff]
    %v642 = vld [vmem:[#allocation13 + $0x18] sm:$0xff]
    %v643 = vld [vmem:[#allocation13 + $0x20] sm:$0xff]
    %v644 = vld [vmem:[#allocation13 + $0x28] sm:$0xff]
    %v645 = vld [vmem:[#allocation13 + $0x30] sm:$0xff]
    %v646 = vld [vmem:[#allocation13 + $0x38] sm:$0xff]
    %v647 = vld [vmem:[#allocation13 + $0x40] sm:$0xff]
    %v648 = vld [vmem:[#allocation13 + $0x48] sm:$0xff]
    %v649 = vld [vmem:[#allocation13 + $0x50] sm:$0xff]
    %v650 = vld [vmem:[#allocation13 + $0x58] sm:$0xff]
    %v651 = vld [vmem:[#allocation13 + $0x60] sm:$0xff]
    %v652 = vld [vmem:[#allocation13 + $0x68] sm:$0xff]
    %v653 = vld [vmem:[#allocation13 + $0x70] sm:$0xff]
    %v654 = vld [vmem:[#allocation13 + $0x78] sm:$0xff]
    %v655 = vld [vmem:[#allocation13 + $0x80] sm:$0xff]
    %v656 = vld [vmem:[#allocation13 + $0x88] sm:$0xff]
    %v657 = vld [vmem:[#allocation13 + $0x90] sm:$0xff]
    %v658 = vld [vmem:[#allocation13 + $0x98] sm:$0xff]
    %v659 = vld [vmem:[#allocation13 + $0xa0] sm:$0xff]
    %v660 = vld [vmem:[#allocation13 + $0xa8] sm:$0xff]
    %v661 = vld [vmem:[#allocation13 + $0xb0] sm:$0xff]
    %v662 = vld [vmem:[#allocation13 + $0xb8] sm:$0xff]
    %v663 = vld [vmem:[#allocation13 + $0xc0] sm:$0xff]
    %v664 = vld [vmem:[#allocation13 + $0xc8] sm:$0xff]
    %v665 = vld [vmem:[#allocation13 + $0xd0] sm:$0xff]
    %v666 = vld [vmem:[#allocation13 + $0xd8] sm:$0xff]
    %v667 = vld [vmem:[#allocation13 + $0xe0] sm:$0xff]
    %v668 = vld [vmem:[#allocation13 + $0xe8] sm:$0xff]
    %v669 = vld [vmem:[#allocation13 + $0xf0] sm:$0xff]
    %v670 = vld [vmem:[#allocation13 + $0xf8] sm:$0xff]
    %v671 = vld [vmem:[#allocation13 + $0x100] sm:$0xff]
    %v672 = vld [vmem:[#allocation13 + $0x108] sm:$0xff]
    %v673 = vld [vmem:[#allocation13 + $0x110] sm:$0xff]
    %v674 = vld [vmem:[#allocation13 + $0x118] sm:$0xff]
    %v675 = vld [vmem:[#allocation13 + $0x120] sm:$0xff]
    %v676 = vld [vmem:[#allocation13 + $0x128] sm:$0xff]
    %v677 = vld [vmem:[#allocation13 + $0x130] sm:$0xff]
    %v678 = vld [vmem:[#allocation13 + $0x138] sm:$0xff]
    %v679 = vld [vmem:[#allocation13 + $0x140] sm:$0xff]
    %v680 = vld [vmem:[#allocation13 + $0x148] sm:$0xff]
    %v681 = vld [vmem:[#allocation13 + $0x150] sm:$0xff]
    %v682 = vld [vmem:[#allocation13 + $0x158] sm:$0xff]
    %v683 = vld [vmem:[#allocation13 + $0x160] sm:$0xff]
    %v684 = vld [vmem:[#allocation13 + $0x168] sm:$0xff]
    %v685 = vld [vmem:[#allocation13 + $0x170] sm:$0xff]
    %v686 = vld [vmem:[#allocation13 + $0x178] sm:$0xff]
    %v687 = vld [vmem:[#allocation13 + $0x180] sm:$0xff]
    %v688 = vld [vmem:[#allocation13 + $0x188] sm:$0xff]
    %v689 = vld [vmem:[#allocation13 + $0x190] sm:$0xff]
    %v690 = vld [vmem:[#allocation13 + $0x198] sm:$0xff]
    %v691 = vld [vmem:[#allocation13 + $0x1a0] sm:$0xff]
    %v692 = vld [vmem:[#allocation13 + $0x1a8] sm:$0xff]
    %v693 = vld [vmem:[#allocation13 + $0x1b0] sm:$0xff]
    %v694 = vld [vmem:[#allocation13 + $0x1b8] sm:$0xff]
    %v695 = vld [vmem:[#allocation13 + $0x1c0] sm:$0xff]
    %v696 = vld [vmem:[#allocation13 + $0x1c8] sm:$0xff]
    %v697 = vld [vmem:[#allocation13 + $0x1d0] sm:$0xff]
    %v698 = vld [vmem:[#allocation13 + $0x1d8] sm:$0xff]
    %v699 = vld [vmem:[#allocation13 + $0x1e0] sm:$0xff]
    %v700 = vld [vmem:[#allocation13 + $0x1e8] sm:$0xff]
    %v701 = vld [vmem:[#allocation13 + $0x1f0] sm:$0xff]
    %v702 = vld [vmem:[#allocation13 + $0x1f8] sm:$0xff]
    %v703 = vld [vmem:[%s7] sm:$0xf]
    %v705 = vlaneseq
    %v706 = vshrl.u32 %v705, 7
    %v707 = vsub.s32 0, %v706
    %v708 = vrot.slane %v703, %v707
    %v709 = vlaneseq
    %v710 = vshrl.u32 %v709, 7
    %v711 = vsub.s32 1, %v710
    %v712 = vrot.slane %v703, %v711
    %v713 = vlaneseq
    %v714 = vshrl.u32 %v713, 7
    %v715 = vsub.s32 2, %v714
    %v716 = vrot.slane %v703, %v715
    %v717 = vlaneseq
    %v718 = vshrl.u32 %v717, 7
    %v719 = vsub.s32 3, %v718
    %v720 = vrot.slane %v703, %v719
    %725 = vmatprep.subr.mxu0 %v640
    %726 = vmatpush1.msra.mxu0 %v639
    %727 = vmatprep.subr.mxu0 %v644
    %728 = vmatpush1.msra.mxu0 %v643
    %729 = vmatprep.subr.mxu0 %v648
    %730 = vmatpush1.msra.mxu0 %v647
    %731 = vmatprep.subr.mxu0 %v652
    %732 = vmatpush1.msra.mxu0 %v651
    %733 = vmatprep.subr.mxu0 %v656
    %734 = vmatpush1.msra.mxu0 %v655
    %735 = vmatprep.subr.mxu0 %v660
    %736 = vmatpush1.msra.mxu0 %v659
    %737 = vmatprep.subr.mxu0 %v664
    %738 = vmatpush1.msra.mxu0 %v663
    %739 = vmatprep.subr.mxu0 %v668
    %740 = vmatpush1.msra.mxu0 %v667
    %741 = vmatprep.subr.mxu0 %v672
    %742 = vmatpush1.msra.mxu0 %v671
    %743 = vmatprep.subr.mxu0 %v676
    %744 = vmatpush1.msra.mxu0 %v675
    %745 = vmatprep.subr.mxu0 %v680
    %746 = vmatpush1.msra.mxu0 %v679
    %747 = vmatprep.subr.mxu0 %v684
    %748 = vmatpush1.msra.mxu0 %v683
    %749 = vmatprep.subr.mxu0 %v688
    %750 = vmatpush1.msra.mxu0 %v687
    %751 = vmatprep.subr.mxu0 %v692
    %752 = vmatpush1.msra.mxu0 %v691
    %753 = vmatprep.subr.mxu0 %v696
    %754 = vmatpush1.msra.mxu0 %v695
    %755 = vmatprep.subr.mxu0 %v700
    %756 = vmatpush1.msra.mxu0 %v699
    %757 = vmatprep.subr.mxu0 0.0
    %758 = vmatpush1.msra.mxu0 0.0
    %759 = vmatprep.subr.mxu0 0.0
    %760 = vmatpush1.msra.mxu0 0.0
    %761 = vmatprep.subr.mxu0 0.0
    %762 = vmatpush1.msra.mxu0 0.0
    %763 = vmatprep.subr.mxu0 0.0
    %764 = vmatpush1.msra.mxu0 0.0
    %765 = vmatprep.subr.mxu0 0.0
    %766 = vmatpush1.msra.mxu0 0.0
    %767 = vmatprep.subr.mxu0 0.0
    %768 = vmatpush1.msra.mxu0 0.0
    %769 = vmatprep.subr.mxu0 0.0
    %770 = vmatpush1.msra.mxu0 0.0
    %771 = vmatprep.subr.mxu0 0.0
    %772 = vmatpush1.msra.mxu0 0.0
    %773 = vmatprep.subr.mxu0 0.0
    %774 = vmatpush1.msra.mxu0 0.0
    %775 = vmatprep.subr.mxu0 0.0
    %776 = vmatpush1.msra.mxu0 0.0
    %777 = vmatprep.subr.mxu0 0.0
    %778 = vmatpush1.msra.mxu0 0.0
    %779 = vmatprep.subr.mxu0 0.0
    %780 = vmatpush1.msra.mxu0 0.0
    %781 = vmatprep.subr.mxu0 0.0
    %782 = vmatpush1.msra.mxu0 0.0
    %783 = vmatprep.subr.mxu0 0.0
    %784 = vmatpush1.msra.mxu0 0.0
    %785 = vmatprep.subr.mxu0 0.0
    %786 = vmatpush1.msra.mxu0 0.0
    %787 = vmatprep.subr.mxu0 0.0
    %788 = vmatpush1.msra.mxu0 0.0
    %789 = vmatprep.mubr.f32.mxu0 0.0
    %790 = vmatmul.mubr.f32.gmra.mrb[0].mxu0 %v631
    %v791 = vpop.f32.mrb[0].mxu0
    %v792 = vadd.f32 %v708, %v791
    %v793 = vpop.f32.mrb[0].mxu0
    %v794 = vadd.f32 %v712, %v793
    %795 = vmatprep.mubr.f32.mxu0 0.0
    %796 = vmatmul.mubr.f32.gmra.mrb[0].mxu0 %v632
    %v797 = vpop.f32.mrb[0].mxu0
    %v798 = vadd.f32 %v708, %v797
    %v799 = vpop.f32.mrb[0].mxu0
    %v800 = vadd.f32 %v712, %v799
    %801 = vmatprep.mubr.f32.mxu0 0.0
    %802 = vmatmul.mubr.f32.gmra.mrb[0].mxu0 %v633
    %v803 = vpop.f32.mrb[0].mxu0
    %v804 = vadd.f32 %v708, %v803
    %v805 = vpop.f32.mrb[0].mxu0
    %v806 = vadd.f32 %v712, %v805
    %807 = vmatprep.mubr.f32.mxu0 0.0
    %808 = vmatmul.mubr.f32.gmra.mrb[0].mxu0 %v634
    %v809 = vpop.f32.mrb[0].mxu0
    %v810 = vadd.f32 %v708, %v809
    %v811 = vpop.f32.mrb[0].mxu0
    %v812 = vadd.f32 %v712, %v811
    %813 = vmatprep.mubr.f32.mxu0 0.0
    %814 = vmatmul.mubr.f32.gmra.mrb[0].mxu0 %v635
    %v815 = vpop.f32.mrb[0].mxu0
    %v816 = vadd.f32 %v708, %v815
    %v817 = vpop.f32.mrb[0].mxu0
    %v818 = vadd.f32 %v712, %v817
    %819 = vmatprep.mubr.f32.mxu0 0.0
    %820 = vmatmul.mubr.f32.gmra.mrb[0].mxu0 %v636
    %v821 = vpop.f32.mrb[0].mxu0
    %v822 = vadd.f32 %v708, %v821
    %v823 = vpop.f32.mrb[0].mxu0
    %v824 = vadd.f32 %v712, %v823
    %825 = vmatprep.mubr.f32.mxu0 0.0
    %826 = vmatmul.mubr.f32.gmra.mrb[0].mxu0 %v637
    %v827 = vpop.f32.mrb[0].mxu0
    %v828 = vadd.f32 %v708, %v827
    %v829 = vpop.f32.mrb[0].mxu0
    %v830 = vadd.f32 %v712, %v829
    %831 = vmatprep.mubr.f32.mxu0 0.0
    %832 = vmatmul.mubr.f32.gmra.mrb[0].mxu0 %v638
    %v833 = vpop.f32.mrb[0].mxu0
    %v834 = vadd.f32 %v708, %v833
    %v835 = vpop.f32.mrb[0].mxu0
    %v836 = vadd.f32 %v712, %v835
    %837 = vdwg.mxu0
    %838 = vmatprep.subr.mxu0 %v642
    %839 = vmatpush1.msra.mxu0 %v641
    %840 = vmatprep.subr.mxu0 %v646
    %841 = vmatpush1.msra.mxu0 %v645
    %842 = vmatprep.subr.mxu0 %v650
    %843 = vmatpush1.msra.mxu0 %v649
    %844 = vmatprep.subr.mxu0 %v654
    %845 = vmatpush1.msra.mxu0 %v653
    %846 = vmatprep.subr.mxu0 %v658
    %847 = vmatpush1.msra.mxu0 %v657
    %848 = vmatprep.subr.mxu0 %v662
    %849 = vmatpush1.msra.mxu0 %v661
    %850 = vmatprep.subr.mxu0 %v666
    %851 = vmatpush1.msra.mxu0 %v665
    %852 = vmatprep.subr.mxu0 %v670
    %853 = vmatpush1.msra.mxu0 %v669
    %854 = vmatprep.subr.mxu0 %v674
    %855 = vmatpush1.msra.mxu0 %v673
    %856 = vmatprep.subr.mxu0 %v678
    %857 = vmatpush1.msra.mxu0 %v677
    %858 = vmatprep.subr.mxu0 %v682
    %859 = vmatpush1.msra.mxu0 %v681
    %860 = vmatprep.subr.mxu0 %v686
    %861 = vmatpush1.msra.mxu0 %v685
    %862 = vmatprep.subr.mxu0 %v690
    %863 = vmatpush1.msra.mxu0 %v689
    %864 = vmatprep.subr.mxu0 %v694
    %865 = vmatpush1.msra.mxu0 %v693
    %866 = vmatprep.subr.mxu0 %v698
    %867 = vmatpush1.msra.mxu0 %v697
    %868 = vmatprep.subr.mxu0 %v702
    %869 = vmatpush1.msra.mxu0 %v701
    %870 = vmatprep.subr.mxu0 0.0
    %871 = vmatpush1.msra.mxu0 0.0
    %872 = vmatprep.subr.mxu0 0.0
    %873 = vmatpush1.msra.mxu0 0.0
    %874 = vmatprep.subr.mxu0 0.0
    %875 = vmatpush1.msra.mxu0 0.0
    %876 = vmatprep.subr.mxu0 0.0
    %877 = vmatpush1.msra.mxu0 0.0
    %878 = vmatprep.subr.mxu0 0.0
    %879 = vmatpush1.msra.mxu0 0.0
    %880 = vmatprep.subr.mxu0 0.0
    %881 = vmatpush1.msra.mxu0 0.0
    %882 = vmatprep.subr.mxu0 0.0
    %883 = vmatpush1.msra.mxu0 0.0
    %884 = vmatprep.subr.mxu0 0.0
    %885 = vmatpush1.msra.mxu0 0.0
    %886 = vmatprep.subr.mxu0 0.0
    %887 = vmatpush1.msra.mxu0 0.0
    %888 = vmatprep.subr.mxu0 0.0
    %889 = vmatpush1.msra.mxu0 0.0
    %890 = vmatprep.subr.mxu0 0.0
    %891 = vmatpush1.msra.mxu0 0.0
    %892 = vmatprep.subr.mxu0 0.0
    %893 = vmatpush1.msra.mxu0 0.0
    %894 = vmatprep.subr.mxu0 0.0
    %895 = vmatpush1.msra.mxu0 0.0
    %896 = vmatprep.subr.mxu0 0.0
    %897 = vmatpush1.msra.mxu0 0.0
    %898 = vmatprep.subr.mxu0 0.0
    %899 = vmatpush1.msra.mxu0 0.0
    %900 = vmatprep.subr.mxu0 0.0
    %901 = vmatpush1.msra.mxu0 0.0
    %902 = vmatprep.mubr.f32.mxu0 0.0
    %903 = vmatmul.mubr.f32.gmra.mrb[0].mxu0 %v631
    %v904 = vpop.f32.mrb[0].mxu0
    %v905 = vadd.f32 %v716, %v904
    %v906 = vpop.f32.mrb[0].mxu0
    %v907 = vadd.f32 %v720, %v906
    %908 = vmatprep.mubr.f32.mxu0 0.0
    %909 = vmatmul.mubr.f32.gmra.mrb[0].mxu0 %v632
    %v910 = vpop.f32.mrb[0].mxu0
    %v911 = vadd.f32 %v716, %v910
    %v912 = vpop.f32.mrb[0].mxu0
    %v913 = vadd.f32 %v720, %v912
    %914 = vmatprep.mubr.f32.mxu0 0.0
    %915 = vmatmul.mubr.f32.gmra.mrb[0].mxu0 %v633
    %v916 = vpop.f32.mrb[0].mxu0
    %v917 = vadd.f32 %v716, %v916
    %v918 = vpop.f32.mrb[0].mxu0
    %v919 = vadd.f32 %v720, %v918
    %920 = vmatprep.mubr.f32.mxu0 0.0
    %921 = vmatmul.mubr.f32.gmra.mrb[0].mxu0 %v634
    %v922 = vpop.f32.mrb[0].mxu0
    %v923 = vadd.f32 %v716, %v922
    %v924 = vpop.f32.mrb[0].mxu0
    %v925 = vadd.f32 %v720, %v924
    %926 = vmatprep.mubr.f32.mxu0 0.0
    %927 = vmatmul.mubr.f32.gmra.mrb[0].mxu0 %v635
    %v928 = vpop.f32.mrb[0].mxu0
    %v929 = vadd.f32 %v716, %v928
    %v930 = vpop.f32.mrb[0].mxu0
    %v931 = vadd.f32 %v720, %v930
    %932 = vmatprep.mubr.f32.mxu0 0.0
    %933 = vmatmul.mubr.f32.gmra.mrb[0].mxu0 %v636
    %v934 = vpop.f32.mrb[0].mxu0
    %v935 = vadd.f32 %v716, %v934
    %v936 = vpop.f32.mrb[0].mxu0
    %v937 = vadd.f32 %v720, %v936
    %938 = vmatprep.mubr.f32.mxu0 0.0
    %939 = vmatmul.mubr.f32.gmra.mrb[0].mxu0 %v637
    %v940 = vpop.f32.mrb[0].mxu0
    %v941 = vadd.f32 %v716, %v940
    %v942 = vpop.f32.mrb[0].mxu0
    %v943 = vadd.f32 %v720, %v942
    %944 = vmatprep.mubr.f32.mxu0 0.0
    %945 = vmatmul.mubr.f32.gmra.mrb[0].mxu0 %v638
    %v946 = vpop.f32.mrb[0].mxu0
    %v947 = vadd.f32 %v716, %v946
    %v948 = vpop.f32.mrb[0].mxu0
    %v949 = vadd.f32 %v720, %v948
    %950 = vdwg.mxu0
    %951 = vst [vmem:[#allocation3] sm:$0xff] %v792
    %952 = vst [vmem:[#allocation3 + $0x8] sm:$0xff] %v794
    %953 = vst [vmem:[#allocation3 + $0x10] sm:$0xff] %v905
    %954 = vst [vmem:[#allocation3 + $0x18] sm:$0xff] %v907
    %955 = vst [vmem:[#allocation3 + $0x20] sm:$0xff] %v798
    %956 = vst [vmem:[#allocation3 + $0x28] sm:$0xff] %v800
    %957 = vst [vmem:[#allocation3 + $0x30] sm:$0xff] %v911
    %958 = vst [vmem:[#allocation3 + $0x38] sm:$0xff] %v913
    %959 = vst [vmem:[#allocation3 + $0x40] sm:$0xff] %v804
    %960 = vst [vmem:[#allocation3 + $0x48] sm:$0xff] %v806
    %961 = vst [vmem:[#allocation3 + $0x50] sm:$0xff] %v917
    %962 = vst [vmem:[#allocation3 + $0x58] sm:$0xff] %v919
    %963 = vst [vmem:[#allocation3 + $0x60] sm:$0xff] %v810
    %964 = vst [vmem:[#allocation3 + $0x68] sm:$0xff] %v812
    %965 = vst [vmem:[#allocation3 + $0x70] sm:$0xff] %v923
    %966 = vst [vmem:[#allocation3 + $0x78] sm:$0xff] %v925
    %967 = vst [vmem:[#allocation3 + $0x80] sm:$0xff] %v816
    %968 = vst [vmem:[#allocation3 + $0x88] sm:$0xff] %v818
    %969 = vst [vmem:[#allocation3 + $0x90] sm:$0xff] %v929
    %970 = vst [vmem:[#allocation3 + $0x98] sm:$0xff] %v931
    %971 = vst [vmem:[#allocation3 + $0xa0] sm:$0xff] %v822
    %972 = vst [vmem:[#allocation3 + $0xa8] sm:$0xff] %v824
    %973 = vst [vmem:[#allocation3 + $0xb0] sm:$0xff] %v935
    %974 = vst [vmem:[#allocation3 + $0xb8] sm:$0xff] %v937
    %975 = vst [vmem:[#allocation3 + $0xc0] sm:$0xff] %v828
    %976 = vst [vmem:[#allocation3 + $0xc8] sm:$0xff] %v830
    %977 = vst [vmem:[#allocation3 + $0xd0] sm:$0xff] %v941
    %978 = vst [vmem:[#allocation3 + $0xd8] sm:$0xff] %v943
    %979 = vst [vmem:[#allocation3 + $0xe0] sm:$0xff] %v834
    %980 = vst [vmem:[#allocation3 + $0xe8] sm:$0xff] %v836
    %981 = vst [vmem:[#allocation3 + $0xf0] sm:$0xff] %v947
    %982 = vst [vmem:[#allocation3 + $0xf8] sm:$0xff] %v949
    %s983 = smul.u32 0, 4
    %s984 = smul.addr %s983, 8
    %s985 = scalar_lea.vmem [#allocation2], %s984
    %v986 = vld [vmem:[%s985] sm:$0xff]
    %v987 = vld [vmem:[%s985 + $0x8] sm:$0xff]
    %v988 = vld [vmem:[%s985 + $0x10] sm:$0xff]
    %v989 = vld [vmem:[%s985 + $0x18] sm:$0xff]
    %990 = vmatprep.subr.mxu0 %v152
    %991 = vmatpush1.msra.mxu0 %v151
    %992 = vmatprep.subr.mxu0 %v156
    %993 = vmatpush1.msra.mxu0 %v155
    %994 = vmatprep.subr.mxu0 %v160
    %995 = vmatpush1.msra.mxu0 %v159
    %996 = vmatprep.subr.mxu0 %v164
    %997 = vmatpush1.msra.mxu0 %v163
    %998 = vmatprep.subr.mxu0 %v168
    %999 = vmatpush1.msra.mxu0 %v167
    %1000 = vmatprep.subr.mxu0 %v172
    %1001 = vmatpush1.msra.mxu0 %v171
    %1002 = vmatprep.subr.mxu0 %v176
    %1003 = vmatpush1.msra.mxu0 %v175
    %1004 = vmatprep.subr.mxu0 %v180
    %1005 = vmatpush1.msra.mxu0 %v179
    %1006 = vmatprep.subr.mxu0 %v184
    %1007 = vmatpush1.msra.mxu0 %v183
    %1008 = vmatprep.subr.mxu0 %v188
    %1009 = vmatpush1.msra.mxu0 %v187
    %1010 = vmatprep.subr.mxu0 %v192
    %1011 = vmatpush1.msra.mxu0 %v191
    %1012 = vmatprep.subr.mxu0 %v196
    %1013 = vmatpush1.msra.mxu0 %v195
    %1014 = vmatprep.subr.mxu0 %v200
    %1015 = vmatpush1.msra.mxu0 %v199
    %1016 = vmatprep.subr.mxu0 %v204
    %1017 = vmatpush1.msra.mxu0 %v203
    %1018 = vmatprep.subr.mxu0 %v208
    %1019 = vmatpush1.msra.mxu0 %v207
    %1020 = vmatprep.subr.mxu0 %v212
    %1021 = vmatpush1.msra.mxu0 %v211
    %1022 = vmatprep.subr.mxu0 0.0
    %1023 = vmatpush1.msra.mxu0 0.0
    %1024 = vmatprep.subr.mxu0 0.0
    %1025 = vmatpush1.msra.mxu0 0.0
    %1026 = vmatprep.subr.mxu0 0.0
    %1027 = vmatpush1.msra.mxu0 0.0
    %1028 = vmatprep.subr.mxu0 0.0
    %1029 = vmatpush1.msra.mxu0 0.0
    %1030 = vmatprep.subr.mxu0 0.0
    %1031 = vmatpush1.msra.mxu0 0.0
    %1032 = vmatprep.subr.mxu0 0.0
    %1033 = vmatpush1.msra.mxu0 0.0
    %1034 = vmatprep.subr.mxu0 0.0
    %1035 = vmatpush1.msra.mxu0 0.0
    %1036 = vmatprep.subr.mxu0 0.0
    %1037 = vmatpush1.msra.mxu0 0.0
    %1038 = vmatprep.subr.mxu0 0.0
    %1039 = vmatpush1.msra.mxu0 0.0
    %1040 = vmatprep.subr.mxu0 0.0
    %1041 = vmatpush1.msra.mxu0 0.0
    %1042 = vmatprep.subr.mxu0 0.0
    %1043 = vmatpush1.msra.mxu0 0.0
    %1044 = vmatprep.subr.mxu0 0.0
    %1045 = vmatpush1.msra.mxu0 0.0
    %1046 = vmatprep.subr.mxu0 0.0
    %1047 = vmatpush1.msra.mxu0 0.0
    %1048 = vmatprep.subr.mxu0 0.0
    %1049 = vmatpush1.msra.mxu0 0.0
    %1050 = vmatprep.subr.mxu0 0.0
    %1051 = vmatpush1.msra.mxu0 0.0
    %1052 = vmatprep.subr.mxu0 0.0
    %1053 = vmatpush1.msra.mxu0 0.0
    %1054 = vmatprep.mubr.f32.mxu0 0.0
    %1055 = vmatmul.mubr.f32.gmra.mrb[0].mxu0 0.0
    %v1056 = vpop.f32.mrb[0].mxu0
    %v1057 = vadd.f32 0.0, %v1056
    %v1058 = vpop.f32.mrb[0].mxu0
    %v1059 = vadd.f32 0.0, %v1058
    %1060 = vdwg.mxu0
    %1061 = vmatprep.subr.mxu0 %v154
    %1062 = vmatpush1.msra.mxu0 %v153
    %1063 = vmatprep.subr.mxu0 %v158
    %1064 = vmatpush1.msra.mxu0 %v157
    %1065 = vmatprep.subr.mxu0 %v162
    %1066 = vmatpush1.msra.mxu0 %v161
    %1067 = vmatprep.subr.mxu0 %v166
    %1068 = vmatpush1.msra.mxu0 %v165
    %1069 = vmatprep.subr.mxu0 %v170
    %1070 = vmatpush1.msra.mxu0 %v169
    %1071 = vmatprep.subr.mxu0 %v174
    %1072 = vmatpush1.msra.mxu0 %v173
    %1073 = vmatprep.subr.mxu0 %v178
    %1074 = vmatpush1.msra.mxu0 %v177
    %1075 = vmatprep.subr.mxu0 %v182
    %1076 = vmatpush1.msra.mxu0 %v181
    %1077 = vmatprep.subr.mxu0 %v186
    %1078 = vmatpush1.msra.mxu0 %v185
    %1079 = vmatprep.subr.mxu0 %v190
    %1080 = vmatpush1.msra.mxu0 %v189
    %1081 = vmatprep.subr.mxu0 %v194
    %1082 = vmatpush1.msra.mxu0 %v193
    %1083 = vmatprep.subr.mxu0 %v198
    %1084 = vmatpush1.msra.mxu0 %v197
    %1085 = vmatprep.subr.mxu0 %v202
    %1086 = vmatpush1.msra.mxu0 %v201
    %1087 = vmatprep.subr.mxu0 %v206
    %1088 = vmatpush1.msra.mxu0 %v205
    %1089 = vmatprep.subr.mxu0 %v210
    %1090 = vmatpush1.msra.mxu0 %v209
    %1091 = vmatprep.subr.mxu0 %v214
    %1092 = vmatpush1.msra.mxu0 %v213
    %1093 = vmatprep.subr.mxu0 0.0
    %1094 = vmatpush1.msra.mxu0 0.0
    %1095 = vmatprep.subr.mxu0 0.0
    %1096 = vmatpush1.msra.mxu0 0.0
    %1097 = vmatprep.subr.mxu0 0.0
    %1098 = vmatpush1.msra.mxu0 0.0
    %1099 = vmatprep.subr.mxu0 0.0
    %1100 = vmatpush1.msra.mxu0 0.0
    %1101 = vmatprep.subr.mxu0 0.0
    %1102 = vmatpush1.msra.mxu0 0.0
    %1103 = vmatprep.subr.mxu0 0.0
    %1104 = vmatpush1.msra.mxu0 0.0
    %1105 = vmatprep.subr.mxu0 0.0
    %1106 = vmatpush1.msra.mxu0 0.0
    %1107 = vmatprep.subr.mxu0 0.0
    %1108 = vmatpush1.msra.mxu0 0.0
    %1109 = vmatprep.subr.mxu0 0.0
    %1110 = vmatpush1.msra.mxu0 0.0
    %1111 = vmatprep.subr.mxu0 0.0
    %1112 = vmatpush1.msra.mxu0 0.0
    %1113 = vmatprep.subr.mxu0 0.0
    %1114 = vmatpush1.msra.mxu0 0.0
    %1115 = vmatprep.subr.mxu0 0.0
    %1116 = vmatpush1.msra.mxu0 0.0
    %1117 = vmatprep.subr.mxu0 0.0
    %1118 = vmatpush1.msra.mxu0 0.0
    %1119 = vmatprep.subr.mxu0 0.0
    %1120 = vmatpush1.msra.mxu0 0.0
    %1121 = vmatprep.subr.mxu0 0.0
    %1122 = vmatpush1.msra.mxu0 0.0
    %1123 = vmatprep.subr.mxu0 0.0
    %1124 = vmatpush1.msra.mxu0 0.0
    %1125 = vmatprep.mubr.f32.mxu0 0.0
    %1126 = vmatmul.mubr.f32.gmra.mrb[0].mxu0 0.0
    %v1127 = vpop.f32.mrb[0].mxu0
    %v1128 = vadd.f32 0.0, %v1127
    %v1129 = vpop.f32.mrb[0].mxu0
    %v1130 = vadd.f32 0.0, %v1129
    %1131 = vdwg.mxu0
    %v1132 = vadd.f32 %v986, %v1057
    %v1133 = vadd.f32 %v987, %v1059
    %v1134 = vadd.f32 %v988, %v1128
    %v1135 = vadd.f32 %v989, %v1130
    %v1136 = vxor.u32 %v1132, 2147483648
    %v1137 = vmul.f32 %v1136, 1.442695
    %v1138 = vpow.pop %v1137
    %v1139 = vadd.f32 %v1138, 1.0
    %v1140 = vrcp.pop %v1139
    %v1141 = vmul.f32 1.0, %v1140
    %v1142 = vxor.u32 %v1133, 2147483648
    %v1143 = vmul.f32 %v1142, 1.442695
    %v1144 = vpow.pop %v1143
    %v1145 = vadd.f32 %v1144, 1.0
    %v1146 = vrcp.pop %v1145
    %v1147 = vmul.f32 1.0, %v1146
    %v1148 = vtanh.pop %v1134
    %v1149 = vxor.u32 %v1135, 2147483648
    %v1150 = vmul.f32 %v1149, 1.442695
    %v1151 = vpow.pop %v1150
    %v1152 = vadd.f32 %v1151, 1.0
    %v1153 = vrcp.pop %v1152
    %v1154 = vmul.f32 1.0, %v1153
    %v1155 = vmul.f32 %v1147, 0.0
    %v1156 = vmul.f32 %v1141, %v1148
    %v1157 = vadd.f32 %v1155, %v1156
    %v1158 = vtanh.pop %v1157
    %v1159 = vmul.f32 %v1154, %v1158
    %s1160 = smul.u32 1, 4
    %s1161 = smul.addr %s1160, 8
    %s1162 = scalar_lea.vmem [#allocation2], %s1161
    %v1163 = vld [vmem:[%s1162] sm:$0xff]
    %v1164 = vld [vmem:[%s1162 + $0x8] sm:$0xff]
    %v1165 = vld [vmem:[%s1162 + $0x10] sm:$0xff]
    %v1166 = vld [vmem:[%s1162 + $0x18] sm:$0xff]
    %1167 = vmatprep.subr.mxu0 %v152
    %1168 = vmatpush1.msra.mxu0 %v151
    %1169 = vmatprep.subr.mxu0 %v156
    %1170 = vmatpush1.msra.mxu0 %v155
    %1171 = vmatprep.subr.mxu0 %v160
    %1172 = vmatpush1.msra.mxu0 %v159
    %1173 = vmatprep.subr.mxu0 %v164
    %1174 = vmatpush1.msra.mxu0 %v163
    %1175 = vmatprep.subr.mxu0 %v168
    %1176 = vmatpush1.msra.mxu0 %v167
    %1177 = vmatprep.subr.mxu0 %v172
    %1178 = vmatpush1.msra.mxu0 %v171
    %1179 = vmatprep.subr.mxu0 %v176
    %1180 = vmatpush1.msra.mxu0 %v175
    %1181 = vmatprep.subr.mxu0 %v180
    %1182 = vmatpush1.msra.mxu0 %v179
    %1183 = vmatprep.subr.mxu0 %v184
    %1184 = vmatpush1.msra.mxu0 %v183
    %1185 = vmatprep.subr.mxu0 %v188
    %1186 = vmatpush1.msra.mxu0 %v187
    %1187 = vmatprep.subr.mxu0 %v192
    %1188 = vmatpush1.msra.mxu0 %v191
    %1189 = vmatprep.subr.mxu0 %v196
    %1190 = vmatpush1.msra.mxu0 %v195
    %1191 = vmatprep.subr.mxu0 %v200
    %1192 = vmatpush1.msra.mxu0 %v199
    %1193 = vmatprep.subr.mxu0 %v204
    %1194 = vmatpush1.msra.mxu0 %v203
    %1195 = vmatprep.subr.mxu0 %v208
    %1196 = vmatpush1.msra.mxu0 %v207
    %1197 = vmatprep.subr.mxu0 %v212
    %1198 = vmatpush1.msra.mxu0 %v211
    %1199 = vmatprep.subr.mxu0 0.0
    %1200 = vmatpush1.msra.mxu0 0.0
    %1201 = vmatprep.subr.mxu0 0.0
    %1202 = vmatpush1.msra.mxu0 0.0
    %1203 = vmatprep.subr.mxu0 0.0
    %1204 = vmatpush1.msra.mxu0 0.0
    %1205 = vmatprep.subr.mxu0 0.0
    %1206 = vmatpush1.msra.mxu0 0.0
    %1207 = vmatprep.subr.mxu0 0.0
    %1208 = vmatpush1.msra.mxu0 0.0
    %1209 = vmatprep.subr.mxu0 0.0
    %1210 = vmatpush1.msra.mxu0 0.0
    %1211 = vmatprep.subr.mxu0 0.0
    %1212 = vmatpush1.msra.mxu0 0.0
    %1213 = vmatprep.subr.mxu0 0.0
    %1214 = vmatpush1.msra.mxu0 0.0
    %1215 = vmatprep.subr.mxu0 0.0
    %1216 = vmatpush1.msra.mxu0 0.0
    %1217 = vmatprep.subr.mxu0 0.0
    %1218 = vmatpush1.msra.mxu0 0.0
    %1219 = vmatprep.subr.mxu0 0.0
    %1220 = vmatpush1.msra.mxu0 0.0
    %1221 = vmatprep.subr.mxu0 0.0
    %1222 = vmatpush1.msra.mxu0 0.0
    %1223 = vmatprep.subr.mxu0 0.0
    %1224 = vmatpush1.msra.mxu0 0.0
    %1225 = vmatprep.subr.mxu0 0.0
    %1226 = vmatpush1.msra.mxu0 0.0
    %1227 = vmatprep.subr.mxu0 0.0
    %1228 = vmatpush1.msra.mxu0 0.0
    %1229 = vmatprep.subr.mxu0 0.0
    %1230 = vmatpush1.msra.mxu0 0.0
    %1231 = vmatprep.mubr.f32.mxu0 0.0
    %1232 = vmatmul.mubr.f32.gmra.mrb[0].mxu0 %v1159
    %v1233 = vpop.f32.mrb[0].mxu0
    %v1234 = vadd.f32 0.0, %v1233
    %v1235 = vpop.f32.mrb[0].mxu0
    %v1236 = vadd.f32 0.0, %v1235
    %1237 = vdwg.mxu0
    %1238 = vmatprep.subr.mxu0 %v154
    %1239 = vmatpush1.msra.mxu0 %v153
    %1240 = vmatprep.subr.mxu0 %v158
    %1241 = vmatpush1.msra.mxu0 %v157
    %1242 = vmatprep.subr.mxu0 %v162
    %1243 = vmatpush1.msra.mxu0 %v161
    %1244 = vmatprep.subr.mxu0 %v166
    %1245 = vmatpush1.msra.mxu0 %v165
    %1246 = vmatprep.subr.mxu0 %v170
    %1247 = vmatpush1.msra.mxu0 %v169
    %1248 = vmatprep.subr.mxu0 %v174
    %1249 = vmatpush1.msra.mxu0 %v173
    %1250 = vmatprep.subr.mxu0 %v178
    %1251 = vmatpush1.msra.mxu0 %v177
    %1252 = vmatprep.subr.mxu0 %v182
    %1253 = vmatpush1.msra.mxu0 %v181
    %1254 = vmatprep.subr.mxu0 %v186
    %1255 = vmatpush1.msra.mxu0 %v185
    %1256 = vmatprep.subr.mxu0 %v190
    %1257 = vmatpush1.msra.mxu0 %v189
    %1258 = vmatprep.subr.mxu0 %v194
    %1259 = vmatpush1.msra.mxu0 %v193
    %1260 = vmatprep.subr.mxu0 %v198
    %1261 = vmatpush1.msra.mxu0 %v197
    %1262 = vmatprep.subr.mxu0 %v202
    %1263 = vmatpush1.msra.mxu0 %v201
    %1264 = vmatprep.subr.mxu0 %v206
    %1265 = vmatpush1.msra.mxu0 %v205
    %1266 = vmatprep.subr.mxu0 %v210
    %1267 = vmatpush1.msra.mxu0 %v209
    %1268 = vmatprep.subr.mxu0 %v214
    %1269 = vmatpush1.msra.mxu0 %v213
    %1270 = vmatprep.subr.mxu0 0.0
    %1271 = vmatpush1.msra.mxu0 0.0
    %1272 = vmatprep.subr.mxu0 0.0
    %1273 = vmatpush1.msra.mxu0 0.0
    %1274 = vmatprep.subr.mxu0 0.0
    %1275 = vmatpush1.msra.mxu0 0.0
    %1276 = vmatprep.subr.mxu0 0.0
    %1277 = vmatpush1.msra.mxu0 0.0
    %1278 = vmatprep.subr.mxu0 0.0
    %1279 = vmatpush1.msra.mxu0 0.0
    %1280 = vmatprep.subr.mxu0 0.0
    %1281 = vmatpush1.msra.mxu0 0.0
    %1282 = vmatprep.subr.mxu0 0.0
    %1283 = vmatpush1.msra.mxu0 0.0
    %1284 = vmatprep.subr.mxu0 0.0
    %1285 = vmatpush1.msra.mxu0 0.0
    %1286 = vmatprep.subr.mxu0 0.0
    %1287 = vmatpush1.msra.mxu0 0.0
    %1288 = vmatprep.subr.mxu0 0.0
    %1289 = vmatpush1.msra.mxu0 0.0
    %1290 = vmatprep.subr.mxu0 0.0
    %1291 = vmatpush1.msra.mxu0 0.0
    %1292 = vmatprep.subr.mxu0 0.0
    %1293 = vmatpush1.msra.mxu0 0.0
    %1294 = vmatprep.subr.mxu0 0.0
    %1295 = vmatpush1.msra.mxu0 0.0
    %1296 = vmatprep.subr.mxu0 0.0
    %1297 = vmatpush1.msra.mxu0 0.0
    %1298 = vmatprep.subr.mxu0 0.0
    %1299 = vmatpush1.msra.mxu0 0.0
    %1300 = vmatprep.subr.mxu0 0.0
    %1301 = vmatpush1.msra.mxu0 0.0
    %1302 = vmatprep.mubr.f32.mxu0 0.0
    %1303 = vmatmul.mubr.f32.gmra.mrb[0].mxu0 %v1159
    %v1304 = vpop.f32.mrb[0].mxu0
    %v1305 = vadd.f32 0.0, %v1304
    %v1306 = vpop.f32.mrb[0].mxu0
    %v1307 = vadd.f32 0.0, %v1306
    %1308 = vdwg.mxu0
    %v1309 = vadd.f32 %v1163, %v1234
    %v1310 = vadd.f32 %v1164, %v1236
    %v1311 = vadd.f32 %v1165, %v1305
    %v1312 = vadd.f32 %v1166, %v1307
    %v1313 = vxor.u32 %v1309, 2147483648
    %v1314 = vmul.f32 %v1313, 1.442695
    %v1315 = vpow.pop %v1314
    %v1316 = vadd.f32 %v1315, 1.0
    %v1317 = vrcp.pop %v1316
    %v1318 = vmul.f32 1.0, %v1317
    %v1319 = vxor.u32 %v1310, 2147483648
    %v1320 = vmul.f32 %v1319, 1.442695
    %v1321 = vpow.pop %v1320
    %v1322 = vadd.f32 %v1321, 1.0
    %v1323 = vrcp.pop %v1322
    %v1324 = vmul.f32 1.0, %v1323
    %v1325 = vtanh.pop %v1311
    %v1326 = vxor.u32 %v1312, 2147483648
    %v1327 = vmul.f32 %v1326, 1.442695
    %v1328 = vpow.pop %v1327
    %v1329 = vadd.f32 %v1328, 1.0
    %v1330 = vrcp.pop %v1329
    %v1331 = vmul.f32 1.0, %v1330
    %v1332 = vmul.f32 %v1324, %v1157
    %v1333 = vmul.f32 %v1318, %v1325
    %v1334 = vadd.f32 %v1332, %v1333
    %v1335 = vtanh.pop %v1334
    %v1336 = vmul.f32 %v1331, %v1335
    %s1337 = smul.u32 2, 4
    %s1338 = smul.addr %s1337, 8
    %s1339 = scalar_lea.vmem [#allocation2], %s1338
    %v1340 = vld [vmem:[%s1339] sm:$0xff]
    %v1341 = vld [vmem:[%s1339 + $0x8] sm:$0xff]
    %v1342 = vld [vmem:[%s1339 + $0x10] sm:$0xff]
    %v1343 = vld [vmem:[%s1339 + $0x18] sm:$0xff]
    %1344 = vmatprep.subr.mxu0 %v152
    %1345 = vmatpush1.msra.mxu0 %v151
    %1346 = vmatprep.subr.mxu0 %v156
    %1347 = vmatpush1.msra.mxu0 %v155
    %1348 = vmatprep.subr.mxu0 %v160
    %1349 = vmatpush1.msra.mxu0 %v159
    %1350 = vmatprep.subr.mxu0 %v164
    %1351 = vmatpush1.msra.mxu0 %v163
    %1352 = vmatprep.subr.mxu0 %v168
    %1353 = vmatpush1.msra.mxu0 %v167
    %1354 = vmatprep.subr.mxu0 %v172
    %1355 = vmatpush1.msra.mxu0 %v171
    %1356 = vmatprep.subr.mxu0 %v176
    %1357 = vmatpush1.msra.mxu0 %v175
    %1358 = vmatprep.subr.mxu0 %v180
    %1359 = vmatpush1.msra.mxu0 %v179
    %1360 = vmatprep.subr.mxu0 %v184
    %1361 = vmatpush1.msra.mxu0 %v183
    %1362 = vmatprep.subr.mxu0 %v188
    %1363 = vmatpush1.msra.mxu0 %v187
    %1364 = vmatprep.subr.mxu0 %v192
    %1365 = vmatpush1.msra.mxu0 %v191
    %1366 = vmatprep.subr.mxu0 %v196
    %1367 = vmatpush1.msra.mxu0 %v195
    %1368 = vmatprep.subr.mxu0 %v200
    %1369 = vmatpush1.msra.mxu0 %v199
    %1370 = vmatprep.subr.mxu0 %v204
    %1371 = vmatpush1.msra.mxu0 %v203
    %1372 = vmatprep.subr.mxu0 %v208
    %1373 = vmatpush1.msra.mxu0 %v207
    %1374 = vmatprep.subr.mxu0 %v212
    %1375 = vmatpush1.msra.mxu0 %v211
    %1376 = vmatprep.subr.mxu0 0.0
    %1377 = vmatpush1.msra.mxu0 0.0
    %1378 = vmatprep.subr.mxu0 0.0
    %1379 = vmatpush1.msra.mxu0 0.0
    %1380 = vmatprep.subr.mxu0 0.0
    %1381 = vmatpush1.msra.mxu0 0.0
    %1382 = vmatprep.subr.mxu0 0.0
    %1383 = vmatpush1.msra.mxu0 0.0
    %1384 = vmatprep.subr.mxu0 0.0
    %1385 = vmatpush1.msra.mxu0 0.0
    %1386 = vmatprep.subr.mxu0 0.0
    %1387 = vmatpush1.msra.mxu0 0.0
    %1388 = vmatprep.subr.mxu0 0.0
    %1389 = vmatpush1.msra.mxu0 0.0
    %1390 = vmatprep.subr.mxu0 0.0
    %1391 = vmatpush1.msra.mxu0 0.0
    %1392 = vmatprep.subr.mxu0 0.0
    %1393 = vmatpush1.msra.mxu0 0.0
    %1394 = vmatprep.subr.mxu0 0.0
    %1395 = vmatpush1.msra.mxu0 0.0
    %1396 = vmatprep.subr.mxu0 0.0
    %1397 = vmatpush1.msra.mxu0 0.0
    %1398 = vmatprep.subr.mxu0 0.0
    %1399 = vmatpush1.msra.mxu0 0.0
    %1400 = vmatprep.subr.mxu0 0.0
    %1401 = vmatpush1.msra.mxu0 0.0
    %1402 = vmatprep.subr.mxu0 0.0
    %1403 = vmatpush1.msra.mxu0 0.0
    %1404 = vmatprep.subr.mxu0 0.0
    %1405 = vmatpush1.msra.mxu0 0.0
    %1406 = vmatprep.subr.mxu0 0.0
    %1407 = vmatpush1.msra.mxu0 0.0
    %1408 = vmatprep.mubr.f32.mxu0 0.0
    %1409 = vmatmul.mubr.f32.gmra.mrb[0].mxu0 %v1336
    %v1410 = vpop.f32.mrb[0].mxu0
    %v1411 = vadd.f32 0.0, %v1410
    %v1412 = vpop.f32.mrb[0].mxu0
    %v1413 = vadd.f32 0.0, %v1412
    %1414 = vdwg.mxu0
    %1415 = vmatprep.subr.mxu0 %v154
    %1416 = vmatpush1.msra.mxu0 %v153
    %1417 = vmatprep.subr.mxu0 %v158
    %1418 = vmatpush1.msra.mxu0 %v157
    %1419 = vmatprep.subr.mxu0 %v162
    %1420 = vmatpush1.msra.mxu0 %v161
    %1421 = vmatprep.subr.mxu0 %v166
    %1422 = vmatpush1.msra.mxu0 %v165
    %1423 = vmatprep.subr.mxu0 %v170
    %1424 = vmatpush1.msra.mxu0 %v169
    %1425 = vmatprep.subr.mxu0 %v174
    %1426 = vmatpush1.msra.mxu0 %v173
    %1427 = vmatprep.subr.mxu0 %v178
    %1428 = vmatpush1.msra.mxu0 %v177
    %1429 = vmatprep.subr.mxu0 %v182
    %1430 = vmatpush1.msra.mxu0 %v181
    %1431 = vmatprep.subr.mxu0 %v186
    %1432 = vmatpush1.msra.mxu0 %v185
    %1433 = vmatprep.subr.mxu0 %v190
    %1434 = vmatpush1.msra.mxu0 %v189
    %1435 = vmatprep.subr.mxu0 %v194
    %1436 = vmatpush1.msra.mxu0 %v193
    %1437 = vmatprep.subr.mxu0 %v198
    %1438 = vmatpush1.msra.mxu0 %v197
    %1439 = vmatprep.subr.mxu0 %v202
    %1440 = vmatpush1.msra.mxu0 %v201
    %1441 = vmatprep.subr.mxu0 %v206
    %1442 = vmatpush1.msra.mxu0 %v205
    %1443 = vmatprep.subr.mxu0 %v210
    %1444 = vmatpush1.msra.mxu0 %v209
    %1445 = vmatprep.subr.mxu0 %v214
    %1446 = vmatpush1.msra.mxu0 %v213
    %1447 = vmatprep.subr.mxu0 0.0
    %1448 = vmatpush1.msra.mxu0 0.0
    %1449 = vmatprep.subr.mxu0 0.0
    %1450 = vmatpush1.msra.mxu0 0.0
    %1451 = vmatprep.subr.mxu0 0.0
    %1452 = vmatpush1.msra.mxu0 0.0
    %1453 = vmatprep.subr.mxu0 0.0
    %1454 = vmatpush1.msra.mxu0 0.0
    %1455 = vmatprep.subr.mxu0 0.0
    %1456 = vmatpush1.msra.mxu0 0.0
    %1457 = vmatprep.subr.mxu0 0.0
    %1458 = vmatpush1.msra.mxu0 0.0
    %1459 = vmatprep.subr.mxu0 0.0
    %1460 = vmatpush1.msra.mxu0 0.0
    %1461 = vmatprep.subr.mxu0 0.0
    %1462 = vmatpush1.msra.mxu0 0.0
    %1463 = vmatprep.subr.mxu0 0.0
    %1464 = vmatpush1.msra.mxu0 0.0
    %1465 = vmatprep.subr.mxu0 0.0
    %1466 = vmatpush1.msra.mxu0 0.0
    %1467 = vmatprep.subr.mxu0 0.0
    %1468 = vmatpush1.msra.mxu0 0.0
    %1469 = vmatprep.subr.mxu0 0.0
    %1470 = vmatpush1.msra.mxu0 0.0
    %1471 = vmatprep.subr.mxu0 0.0
    %1472 = vmatpush1.msra.mxu0 0.0
    %1473 = vmatprep.subr.mxu0 0.0
    %1474 = vmatpush1.msra.mxu0 0.0
    %1475 = vmatprep.subr.mxu0 0.0
    %1476 = vmatpush1.msra.mxu0 0.0
    %1477 = vmatprep.subr.mxu0 0.0
    %1478 = vmatpush1.msra.mxu0 0.0
    %1479 = vmatprep.mubr.f32.mxu0 0.0
    %1480 = vmatmul.mubr.f32.gmra.mrb[0].mxu0 %v1336
    %v1481 = vpop.f32.mrb[0].mxu0
    %v1482 = vadd.f32 0.0, %v1481
    %v1483 = vpop.f32.mrb[0].mxu0
    %v1484 = vadd.f32 0.0, %v1483
    %1485 = vdwg.mxu0
    %v1486 = vadd.f32 %v1340, %v1411
    %v1487 = vadd.f32 %v1341, %v1413
    %v1488 = vadd.f32 %v1342, %v1482
    %v1489 = vadd.f32 %v1343, %v1484
    %v1490 = vxor.u32 %v1486, 2147483648
    %v1491 = vmul.f32 %v1490, 1.442695
    %v1492 = vpow.pop %v1491
    %v1493 = vadd.f32 %v1492, 1.0
    %v1494 = vrcp.pop %v1493
    %v1495 = vmul.f32 1.0, %v1494
    %v1496 = vxor.u32 %v1487, 2147483648
    %v1497 = vmul.f32 %v1496, 1.442695
    %v1498 = vpow.pop %v1497
    %v1499 = vadd.f32 %v1498, 1.0
    %v1500 = vrcp.pop %v1499
    %v1501 = vmul.f32 1.0, %v1500
    %v1502 = vtanh.pop %v1488
    %v1503 = vxor.u32 %v1489, 2147483648
    %v1504 = vmul.f32 %v1503, 1.442695
    %v1505 = vpow.pop %v1504
    %v1506 = vadd.f32 %v1505, 1.0
    %v1507 = vrcp.pop %v1506
    %v1508 = vmul.f32 1.0, %v1507
    %v1509 = vmul.f32 %v1501, %v1334
    %v1510 = vmul.f32 %v1495, %v1502
    %v1511 = vadd.f32 %v1509, %v1510
    %v1512 = vtanh.pop %v1511
    %v1513 = vmul.f32 %v1508, %v1512
    %s1514 = smul.u32 3, 4
    %s1515 = smul.addr %s1514, 8
    %s1516 = scalar_lea.vmem [#allocation2], %s1515
    %v1517 = vld [vmem:[%s1516] sm:$0xff]
    %v1518 = vld [vmem:[%s1516 + $0x8] sm:$0xff]
    %v1519 = vld [vmem:[%s1516 + $0x10] sm:$0xff]
    %v1520 = vld [vmem:[%s1516 + $0x18] sm:$0xff]
    %1521 = vmatprep.subr.mxu0 %v152
    %1522 = vmatpush1.msra.mxu0 %v151
    %1523 = vmatprep.subr.mxu0 %v156
    %1524 = vmatpush1.msra.mxu0 %v155
    %1525 = vmatprep.subr.mxu0 %v160
    %1526 = vmatpush1.msra.mxu0 %v159
    %1527 = vmatprep.subr.mxu0 %v164
    %1528 = vmatpush1.msra.mxu0 %v163
    %1529 = vmatprep.subr.mxu0 %v168
    %1530 = vmatpush1.msra.mxu0 %v167
    %1531 = vmatprep.subr.mxu0 %v172
    %1532 = vmatpush1.msra.mxu0 %v171
    %1533 = vmatprep.subr.mxu0 %v176
    %1534 = vmatpush1.msra.mxu0 %v175
    %1535 = vmatprep.subr.mxu0 %v180
    %1536 = vmatpush1.msra.mxu0 %v179
    %1537 = vmatprep.subr.mxu0 %v184
    %1538 = vmatpush1.msra.mxu0 %v183
    %1539 = vmatprep.subr.mxu0 %v188
    %1540 = vmatpush1.msra.mxu0 %v187
    %1541 = vmatprep.subr.mxu0 %v192
    %1542 = vmatpush1.msra.mxu0 %v191
    %1543 = vmatprep.subr.mxu0 %v196
    %1544 = vmatpush1.msra.mxu0 %v195
    %1545 = vmatprep.subr.mxu0 %v200
    %1546 = vmatpush1.msra.mxu0 %v199
    %1547 = vmatprep.subr.mxu0 %v204
    %1548 = vmatpush1.msra.mxu0 %v203
    %1549 = vmatprep.subr.mxu0 %v208
    %1550 = vmatpush1.msra.mxu0 %v207
    %1551 = vmatprep.subr.mxu0 %v212
    %1552 = vmatpush1.msra.mxu0 %v211
    %1553 = vmatprep.subr.mxu0 0.0
    %1554 = vmatpush1.msra.mxu0 0.0
    %1555 = vmatprep.subr.mxu0 0.0
    %1556 = vmatpush1.msra.mxu0 0.0
    %1557 = vmatprep.subr.mxu0 0.0
    %1558 = vmatpush1.msra.mxu0 0.0
    %1559 = vmatprep.subr.mxu0 0.0
    %1560 = vmatpush1.msra.mxu0 0.0
    %1561 = vmatprep.subr.mxu0 0.0
    %1562 = vmatpush1.msra.mxu0 0.0
    %1563 = vmatprep.subr.mxu0 0.0
    %1564 = vmatpush1.msra.mxu0 0.0
    %1565 = vmatprep.subr.mxu0 0.0
    %1566 = vmatpush1.msra.mxu0 0.0
    %1567 = vmatprep.subr.mxu0 0.0
    %1568 = vmatpush1.msra.mxu0 0.0
    %1569 = vmatprep.subr.mxu0 0.0
    %1570 = vmatpush1.msra.mxu0 0.0
    %1571 = vmatprep.subr.mxu0 0.0
    %1572 = vmatpush1.msra.mxu0 0.0
    %1573 = vmatprep.subr.mxu0 0.0
    %1574 = vmatpush1.msra.mxu0 0.0
    %1575 = vmatprep.subr.mxu0 0.0
    %1576 = vmatpush1.msra.mxu0 0.0
    %1577 = vmatprep.subr.mxu0 0.0
    %1578 = vmatpush1.msra.mxu0 0.0
    %1579 = vmatprep.subr.mxu0 0.0
    %1580 = vmatpush1.msra.mxu0 0.0
    %1581 = vmatprep.subr.mxu0 0.0
    %1582 = vmatpush1.msra.mxu0 0.0
    %1583 = vmatprep.subr.mxu0 0.0
    %1584 = vmatpush1.msra.mxu0 0.0
    %1585 = vmatprep.mubr.f32.mxu0 0.0
    %1586 = vmatmul.mubr.f32.gmra.mrb[0].mxu0 %v1513
    %v1587 = vpop.f32.mrb[0].mxu0
    %v1588 = vadd.f32 0.0, %v1587
    %v1589 = vpop.f32.mrb[0].mxu0
    %v1590 = vadd.f32 0.0, %v1589
    %1591 = vdwg.mxu0
    %1592 = vmatprep.subr.mxu0 %v154
    %1593 = vmatpush1.msra.mxu0 %v153
    %1594 = vmatprep.subr.mxu0 %v158
    %1595 = vmatpush1.msra.mxu0 %v157
    %1596 = vmatprep.subr.mxu0 %v162
    %1597 = vmatpush1.msra.mxu0 %v161
    %1598 = vmatprep.subr.mxu0 %v166
    %1599 = vmatpush1.msra.mxu0 %v165
    %1600 = vmatprep.subr.mxu0 %v170
    %1601 = vmatpush1.msra.mxu0 %v169
    %1602 = vmatprep.subr.mxu0 %v174
    %1603 = vmatpush1.msra.mxu0 %v173
    %1604 = vmatprep.subr.mxu0 %v178
    %1605 = vmatpush1.msra.mxu0 %v177
    %1606 = vmatprep.subr.mxu0 %v182
    %1607 = vmatpush1.msra.mxu0 %v181
    %1608 = vmatprep.subr.mxu0 %v186
    %1609 = vmatpush1.msra.mxu0 %v185
    %1610 = vmatprep.subr.mxu0 %v190
    %1611 = vmatpush1.msra.mxu0 %v189
    %1612 = vmatprep.subr.mxu0 %v194
    %1613 = vmatpush1.msra.mxu0 %v193
    %1614 = vmatprep.subr.mxu0 %v198
    %1615 = vmatpush1.msra.mxu0 %v197
    %1616 = vmatprep.subr.mxu0 %v202
    %1617 = vmatpush1.msra.mxu0 %v201
    %1618 = vmatprep.subr.mxu0 %v206
    %1619 = vmatpush1.msra.mxu0 %v205
    %1620 = vmatprep.subr.mxu0 %v210
    %1621 = vmatpush1.msra.mxu0 %v209
    %1622 = vmatprep.subr.mxu0 %v214
    %1623 = vmatpush1.msra.mxu0 %v213
    %1624 = vmatprep.subr.mxu0 0.0
    %1625 = vmatpush1.msra.mxu0 0.0
    %1626 = vmatprep.subr.mxu0 0.0
    %1627 = vmatpush1.msra.mxu0 0.0
    %1628 = vmatprep.subr.mxu0 0.0
    %1629 = vmatpush1.msra.mxu0 0.0
    %1630 = vmatprep.subr.mxu0 0.0
    %1631 = vmatpush1.msra.mxu0 0.0
    %1632 = vmatprep.subr.mxu0 0.0
    %1633 = vmatpush1.msra.mxu0 0.0
    %1634 = vmatprep.subr.mxu0 0.0
    %1635 = vmatpush1.msra.mxu0 0.0
    %1636 = vmatprep.subr.mxu0 0.0
    %1637 = vmatpush1.msra.mxu0 0.0
    %1638 = vmatprep.subr.mxu0 0.0
    %1639 = vmatpush1.msra.mxu0 0.0
    %1640 = vmatprep.subr.mxu0 0.0
    %1641 = vmatpush1.msra.mxu0 0.0
    %1642 = vmatprep.subr.mxu0 0.0
    %1643 = vmatpush1.msra.mxu0 0.0
    %1644 = vmatprep.subr.mxu0 0.0
    %1645 = vmatpush1.msra.mxu0 0.0
    %1646 = vmatprep.subr.mxu0 0.0
    %1647 = vmatpush1.msra.mxu0 0.0
    %1648 = vmatprep.subr.mxu0 0.0
    %1649 = vmatpush1.msra.mxu0 0.0
    %1650 = vmatprep.subr.mxu0 0.0
    %1651 = vmatpush1.msra.mxu0 0.0
    %1652 = vmatprep.subr.mxu0 0.0
    %1653 = vmatpush1.msra.mxu0 0.0
    %1654 = vmatprep.subr.mxu0 0.0
    %1655 = vmatpush1.msra.mxu0 0.0
    %1656 = vmatprep.mubr.f32.mxu0 0.0
    %1657 = vmatmul.mubr.f32.gmra.mrb[0].mxu0 %v1513
    %v1658 = vpop.f32.mrb[0].mxu0
    %v1659 = vadd.f32 0.0, %v1658
    %v1660 = vpop.f32.mrb[0].mxu0
    %v1661 = vadd.f32 0.0, %v1660
    %1662 = vdwg.mxu0
    %v1663 = vadd.f32 %v1517, %v1588
    %v1664 = vadd.f32 %v1518, %v1590
    %v1665 = vadd.f32 %v1519, %v1659
    %v1666 = vadd.f32 %v1520, %v1661
    %v1667 = vxor.u32 %v1663, 2147483648
    %v1668 = vmul.f32 %v1667, 1.442695
    %v1669 = vpow.pop %v1668
    %v1670 = vadd.f32 %v1669, 1.0
    %v1671 = vrcp.pop %v1670
    %v1672 = vmul.f32 1.0, %v1671
    %v1673 = vxor.u32 %v1664, 2147483648
    %v1674 = vmul.f32 %v1673, 1.442695
    %v1675 = vpow.pop %v1674
    %v1676 = vadd.f32 %v1675, 1.0
    %v1677 = vrcp.pop %v1676
    %v1678 = vmul.f32 1.0, %v1677
    %v1679 = vtanh.pop %v1665
    %v1680 = vxor.u32 %v1666, 2147483648
    %v1681 = vmul.f32 %v1680, 1.442695
    %v1682 = vpow.pop %v1681
    %v1683 = vadd.f32 %v1682, 1.0
    %v1684 = vrcp.pop %v1683
    %v1685 = vmul.f32 1.0, %v1684
    %v1686 = vmul.f32 %v1678, %v1511
    %v1687 = vmul.f32 %v1672, %v1679
    %v1688 = vadd.f32 %v1686, %v1687
    %v1689 = vtanh.pop %v1688
    %v1690 = vmul.f32 %v1685, %v1689
    %s1691 = smul.u32 4, 4
    %s1692 = smul.addr %s1691, 8
    %s1693 = scalar_lea.vmem [#allocation2], %s1692
    %v1694 = vld [vmem:[%s1693] sm:$0xff]
    %v1695 = vld [vmem:[%s1693 + $0x8] sm:$0xff]
    %v1696 = vld [vmem:[%s1693 + $0x10] sm:$0xff]
    %v1697 = vld [vmem:[%s1693 + $0x18] sm:$0xff]
    %1698 = vmatprep.subr.mxu0 %v152
    %1699 = vmatpush1.msra.mxu0 %v151
    %1700 = vmatprep.subr.mxu0 %v156
    %1701 = vmatpush1.msra.mxu0 %v155
    %1702 = vmatprep.subr.mxu0 %v160
    %1703 = vmatpush1.msra.mxu0 %v159
    %1704 = vmatprep.subr.mxu0 %v164
    %1705 = vmatpush1.msra.mxu0 %v163
    %1706 = vmatprep.subr.mxu0 %v168
    %1707 = vmatpush1.msra.mxu0 %v167
    %1708 = vmatprep.subr.mxu0 %v172
    %1709 = vmatpush1.msra.mxu0 %v171
    %1710 = vmatprep.subr.mxu0 %v176
    %1711 = vmatpush1.msra.mxu0 %v175
    %1712 = vmatprep.subr.mxu0 %v180
    %1713 = vmatpush1.msra.mxu0 %v179
    %1714 = vmatprep.subr.mxu0 %v184
    %1715 = vmatpush1.msra.mxu0 %v183
    %1716 = vmatprep.subr.mxu0 %v188
    %1717 = vmatpush1.msra.mxu0 %v187
    %1718 = vmatprep.subr.mxu0 %v192
    %1719 = vmatpush1.msra.mxu0 %v191
    %1720 = vmatprep.subr.mxu0 %v196
    %1721 = vmatpush1.msra.mxu0 %v195
    %1722 = vmatprep.subr.mxu0 %v200
    %1723 = vmatpush1.msra.mxu0 %v199
    %1724 = vmatprep.subr.mxu0 %v204
    %1725 = vmatpush1.msra.mxu0 %v203
    %1726 = vmatprep.subr.mxu0 %v208
    %1727 = vmatpush1.msra.mxu0 %v207
    %1728 = vmatprep.subr.mxu0 %v212
    %1729 = vmatpush1.msra.mxu0 %v211
    %1730 = vmatprep.subr.mxu0 0.0
    %1731 = vmatpush1.msra.mxu0 0.0
    %1732 = vmatprep.subr.mxu0 0.0
    %1733 = vmatpush1.msra.mxu0 0.0
    %1734 = vmatprep.subr.mxu0 0.0
    %1735 = vmatpush1.msra.mxu0 0.0
    %1736 = vmatprep.subr.mxu0 0.0
    %1737 = vmatpush1.msra.mxu0 0.0
    %1738 = vmatprep.subr.mxu0 0.0
    %1739 = vmatpush1.msra.mxu0 0.0
    %1740 = vmatprep.subr.mxu0 0.0
    %1741 = vmatpush1.msra.mxu0 0.0
    %1742 = vmatprep.subr.mxu0 0.0
    %1743 = vmatpush1.msra.mxu0 0.0
    %1744 = vmatprep.subr.mxu0 0.0
    %1745 = vmatpush1.msra.mxu0 0.0
    %1746 = vmatprep.subr.mxu0 0.0
    %1747 = vmatpush1.msra.mxu0 0.0
    %1748 = vmatprep.subr.mxu0 0.0
    %1749 = vmatpush1.msra.mxu0 0.0
    %1750 = vmatprep.subr.mxu0 0.0
    %1751 = vmatpush1.msra.mxu0 0.0
    %1752 = vmatprep.subr.mxu0 0.0
    %1753 = vmatpush1.msra.mxu0 0.0
    %1754 = vmatprep.subr.mxu0 0.0
    %1755 = vmatpush1.msra.mxu0 0.0
    %1756 = vmatprep.subr.mxu0 0.0
    %1757 = vmatpush1.msra.mxu0 0.0
    %1758 = vmatprep.subr.mxu0 0.0
    %1759 = vmatpush1.msra.mxu0 0.0
    %1760 = vmatprep.subr.mxu0 0.0
    %1761 = vmatpush1.msra.mxu0 0.0
    %1762 = vmatprep.mubr.f32.mxu0 0.0
    %1763 = vmatmul.mubr.f32.gmra.mrb[0].mxu0 %v1690
    %v1764 = vpop.f32.mrb[0].mxu0
    %v1765 = vadd.f32 0.0, %v1764
    %v1766 = vpop.f32.mrb[0].mxu0
    %v1767 = vadd.f32 0.0, %v1766
    %1768 = vdwg.mxu0
    %1769 = vmatprep.subr.mxu0 %v154
    %1770 = vmatpush1.msra.mxu0 %v153
    %1771 = vmatprep.subr.mxu0 %v158
    %1772 = vmatpush1.msra.mxu0 %v157
    %1773 = vmatprep.subr.mxu0 %v162
    %1774 = vmatpush1.msra.mxu0 %v161
    %1775 = vmatprep.subr.mxu0 %v166
    %1776 = vmatpush1.msra.mxu0 %v165
    %1777 = vmatprep.subr.mxu0 %v170
    %1778 = vmatpush1.msra.mxu0 %v169
    %1779 = vmatprep.subr.mxu0 %v174
    %1780 = vmatpush1.msra.mxu0 %v173
    %1781 = vmatprep.subr.mxu0 %v178
    %1782 = vmatpush1.msra.mxu0 %v177
    %1783 = vmatprep.subr.mxu0 %v182
    %1784 = vmatpush1.msra.mxu0 %v181
    %1785 = vmatprep.subr.mxu0 %v186
    %1786 = vmatpush1.msra.mxu0 %v185
    %1787 = vmatprep.subr.mxu0 %v190
    %1788 = vmatpush1.msra.mxu0 %v189
    %1789 = vmatprep.subr.mxu0 %v194
    %1790 = vmatpush1.msra.mxu0 %v193
    %1791 = vmatprep.subr.mxu0 %v198
    %1792 = vmatpush1.msra.mxu0 %v197
    %1793 = vmatprep.subr.mxu0 %v202
    %1794 = vmatpush1.msra.mxu0 %v201
    %1795 = vmatprep.subr.mxu0 %v206
    %1796 = vmatpush1.msra.mxu0 %v205
    %1797 = vmatprep.subr.mxu0 %v210
    %1798 = vmatpush1.msra.mxu0 %v209
    %1799 = vmatprep.subr.mxu0 %v214
    %1800 = vmatpush1.msra.mxu0 %v213
    %1801 = vmatprep.subr.mxu0 0.0
    %1802 = vmatpush1.msra.mxu0 0.0
    %1803 = vmatprep.subr.mxu0 0.0
    %1804 = vmatpush1.msra.mxu0 0.0
    %1805 = vmatprep.subr.mxu0 0.0
    %1806 = vmatpush1.msra.mxu0 0.0
    %1807 = vmatprep.subr.mxu0 0.0
    %1808 = vmatpush1.msra.mxu0 0.0
    %1809 = vmatprep.subr.mxu0 0.0
    %1810 = vmatpush1.msra.mxu0 0.0
    %1811 = vmatprep.subr.mxu0 0.0
    %1812 = vmatpush1.msra.mxu0 0.0
    %1813 = vmatprep.subr.mxu0 0.0
    %1814 = vmatpush1.msra.mxu0 0.0
    %1815 = vmatprep.subr.mxu0 0.0
    %1816 = vmatpush1.msra.mxu0 0.0
    %1817 = vmatprep.subr.mxu0 0.0
    %1818 = vmatpush1.msra.mxu0 0.0
    %1819 = vmatprep.subr.mxu0 0.0
    %1820 = vmatpush1.msra.mxu0 0.0
    %1821 = vmatprep.subr.mxu0 0.0
    %1822 = vmatpush1.msra.mxu0 0.0
    %1823 = vmatprep.subr.mxu0 0.0
    %1824 = vmatpush1.msra.mxu0 0.0
    %1825 = vmatprep.subr.mxu0 0.0
    %1826 = vmatpush1.msra.mxu0 0.0
    %1827 = vmatprep.subr.mxu0 0.0
    %1828 = vmatpush1.msra.mxu0 0.0
    %1829 = vmatprep.subr.mxu0 0.0
    %1830 = vmatpush1.msra.mxu0 0.0
    %1831 = vmatprep.subr.mxu0 0.0
    %1832 = vmatpush1.msra.mxu0 0.0
    %1833 = vmatprep.mubr.f32.mxu0 0.0
    %1834 = vmatmul.mubr.f32.gmra.mrb[0].mxu0 %v1690
    %v1835 = vpop.f32.mrb[0].mxu0
    %v1836 = vadd.f32 0.0, %v1835
    %v1837 = vpop.f32.mrb[0].mxu0
    %v1838 = vadd.f32 0.0, %v1837
    %1839 = vdwg.mxu0
    %v1840 = vadd.f32 %v1694, %v1765
    %v1841 = vadd.f32 %v1695, %v1767
    %v1842 = vadd.f32 %v1696, %v1836
    %v1843 = vadd.f32 %v1697, %v1838
    %v1844 = vxor.u32 %v1840, 2147483648
    %v1845 = vmul.f32 %v1844, 1.442695
    %v1846 = vpow.pop %v1845
    %v1847 = vadd.f32 %v1846, 1.0
    %v1848 = vrcp.pop %v1847
    %v1849 = vmul.f32 1.0, %v1848
    %v1850 = vxor.u32 %v1841, 2147483648
    %v1851 = vmul.f32 %v1850, 1.442695
    %v1852 = vpow.pop %v1851
    %v1853 = vadd.f32 %v1852, 1.0
    %v1854 = vrcp.pop %v1853
    %v1855 = vmul.f32 1.0, %v1854
    %v1856 = vtanh.pop %v1842
    %v1857 = vxor.u32 %v1843, 2147483648
    %v1858 = vmul.f32 %v1857, 1.442695
    %v1859 = vpow.pop %v1858
    %v1860 = vadd.f32 %v1859, 1.0
    %v1861 = vrcp.pop %v1860
    %v1862 = vmul.f32 1.0, %v1861
    %v1863 = vmul.f32 %v1855, %v1688
    %v1864 = vmul.f32 %v1849, %v1856
    %v1865 = vadd.f32 %v1863, %v1864
    %v1866 = vtanh.pop %v1865
    %v1867 = vmul.f32 %v1862, %v1866
    %s1868 = smul.u32 5, 4
    %s1869 = smul.addr %s1868, 8
    %s1870 = scalar_lea.vmem [#allocation2], %s1869
    %v1871 = vld [vmem:[%s1870] sm:$0xff]
    %v1872 = vld [vmem:[%s1870 + $0x8] sm:$0xff]
    %v1873 = vld [vmem:[%s1870 + $0x10] sm:$0xff]
    %v1874 = vld [vmem:[%s1870 + $0x18] sm:$0xff]
    %1875 = vmatprep.subr.mxu0 %v152
    %1876 = vmatpush1.msra.mxu0 %v151
    %1877 = vmatprep.subr.mxu0 %v156
    %1878 = vmatpush1.msra.mxu0 %v155
    %1879 = vmatprep.subr.mxu0 %v160
    %1880 = vmatpush1.msra.mxu0 %v159
    %1881 = vmatprep.subr.mxu0 %v164
    %1882 = vmatpush1.msra.mxu0 %v163
    %1883 = vmatprep.subr.mxu0 %v168
    %1884 = vmatpush1.msra.mxu0 %v167
    %1885 = vmatprep.subr.mxu0 %v172
    %1886 = vmatpush1.msra.mxu0 %v171
    %1887 = vmatprep.subr.mxu0 %v176
    %1888 = vmatpush1.msra.mxu0 %v175
    %1889 = vmatprep.subr.mxu0 %v180
    %1890 = vmatpush1.msra.mxu0 %v179
    %1891 = vmatprep.subr.mxu0 %v184
    %1892 = vmatpush1.msra.mxu0 %v183
    %1893 = vmatprep.subr.mxu0 %v188
    %1894 = vmatpush1.msra.mxu0 %v187
    %1895 = vmatprep.subr.mxu0 %v192
    %1896 = vmatpush1.msra.mxu0 %v191
    %1897 = vmatprep.subr.mxu0 %v196
    %1898 = vmatpush1.msra.mxu0 %v195
    %1899 = vmatprep.subr.mxu0 %v200
    %1900 = vmatpush1.msra.mxu0 %v199
    %1901 = vmatprep.subr.mxu0 %v204
    %1902 = vmatpush1.msra.mxu0 %v203
    %1903 = vmatprep.subr.mxu0 %v208
    %1904 = vmatpush1.msra.mxu0 %v207
    %1905 = vmatprep.subr.mxu0 %v212
    %1906 = vmatpush1.msra.mxu0 %v211
    %1907 = vmatprep.subr.mxu0 0.0
    %1908 = vmatpush1.msra.mxu0 0.0
    %1909 = vmatprep.subr.mxu0 0.0
    %1910 = vmatpush1.msra.mxu0 0.0
    %1911 = vmatprep.subr.mxu0 0.0
    %1912 = vmatpush1.msra.mxu0 0.0
    %1913 = vmatprep.subr.mxu0 0.0
    %1914 = vmatpush1.msra.mxu0 0.0
    %1915 = vmatprep.subr.mxu0 0.0
    %1916 = vmatpush1.msra.mxu0 0.0
    %1917 = vmatprep.subr.mxu0 0.0
    %1918 = vmatpush1.msra.mxu0 0.0
    %1919 = vmatprep.subr.mxu0 0.0
    %1920 = vmatpush1.msra.mxu0 0.0
    %1921 = vmatprep.subr.mxu0 0.0
    %1922 = vmatpush1.msra.mxu0 0.0
    %1923 = vmatprep.subr.mxu0 0.0
    %1924 = vmatpush1.msra.mxu0 0.0
    %1925 = vmatprep.subr.mxu0 0.0
    %1926 = vmatpush1.msra.mxu0 0.0
    %1927 = vmatprep.subr.mxu0 0.0
    %1928 = vmatpush1.msra.mxu0 0.0
    %1929 = vmatprep.subr.mxu0 0.0
    %1930 = vmatpush1.msra.mxu0 0.0
    %1931 = vmatprep.subr.mxu0 0.0
    %1932 = vmatpush1.msra.mxu0 0.0
    %1933 = vmatprep.subr.mxu0 0.0
    %1934 = vmatpush1.msra.mxu0 0.0
    %1935 = vmatprep.subr.mxu0 0.0
    %1936 = vmatpush1.msra.mxu0 0.0
    %1937 = vmatprep.subr.mxu0 0.0
    %1938 = vmatpush1.msra.mxu0 0.0
    %1939 = vmatprep.mubr.f32.mxu0 0.0
    %1940 = vmatmul.mubr.f32.gmra.mrb[0].mxu0 %v1867
    %v1941 = vpop.f32.mrb[0].mxu0
    %v1942 = vadd.f32 0.0, %v1941
    %v1943 = vpop.f32.mrb[0].mxu0
    %v1944 = vadd.f32 0.0, %v1943
    %1945 = vdwg.mxu0
    %1946 = vmatprep.subr.mxu0 %v154
    %1947 = vmatpush1.msra.mxu0 %v153
    %1948 = vmatprep.subr.mxu0 %v158
    %1949 = vmatpush1.msra.mxu0 %v157
    %1950 = vmatprep.subr.mxu0 %v162
    %1951 = vmatpush1.msra.mxu0 %v161
    %1952 = vmatprep.subr.mxu0 %v166
    %1953 = vmatpush1.msra.mxu0 %v165
    %1954 = vmatprep.subr.mxu0 %v170
    %1955 = vmatpush1.msra.mxu0 %v169
    %1956 = vmatprep.subr.mxu0 %v174
    %1957 = vmatpush1.msra.mxu0 %v173
    %1958 = vmatprep.subr.mxu0 %v178
    %1959 = vmatpush1.msra.mxu0 %v177
    %1960 = vmatprep.subr.mxu0 %v182
    %1961 = vmatpush1.msra.mxu0 %v181
    %1962 = vmatprep.subr.mxu0 %v186
    %1963 = vmatpush1.msra.mxu0 %v185
    %1964 = vmatprep.subr.mxu0 %v190
    %1965 = vmatpush1.msra.mxu0 %v189
    %1966 = vmatprep.subr.mxu0 %v194
    %1967 = vmatpush1.msra.mxu0 %v193
    %1968 = vmatprep.subr.mxu0 %v198
    %1969 = vmatpush1.msra.mxu0 %v197
    %1970 = vmatprep.subr.mxu0 %v202
    %1971 = vmatpush1.msra.mxu0 %v201
    %1972 = vmatprep.subr.mxu0 %v206
    %1973 = vmatpush1.msra.mxu0 %v205
    %1974 = vmatprep.subr.mxu0 %v210
    %1975 = vmatpush1.msra.mxu0 %v209
    %1976 = vmatprep.subr.mxu0 %v214
    %1977 = vmatpush1.msra.mxu0 %v213
    %1978 = vmatprep.subr.mxu0 0.0
    %1979 = vmatpush1.msra.mxu0 0.0
    %1980 = vmatprep.subr.mxu0 0.0
    %1981 = vmatpush1.msra.mxu0 0.0
    %1982 = vmatprep.subr.mxu0 0.0
    %1983 = vmatpush1.msra.mxu0 0.0
    %1984 = vmatprep.subr.mxu0 0.0
    %1985 = vmatpush1.msra.mxu0 0.0
    %1986 = vmatprep.subr.mxu0 0.0
    %1987 = vmatpush1.msra.mxu0 0.0
    %1988 = vmatprep.subr.mxu0 0.0
    %1989 = vmatpush1.msra.mxu0 0.0
    %1990 = vmatprep.subr.mxu0 0.0
    %1991 = vmatpush1.msra.mxu0 0.0
    %1992 = vmatprep.subr.mxu0 0.0
    %1993 = vmatpush1.msra.mxu0 0.0
    %1994 = vmatprep.subr.mxu0 0.0
    %1995 = vmatpush1.msra.mxu0 0.0
    %1996 = vmatprep.subr.mxu0 0.0
    %1997 = vmatpush1.msra.mxu0 0.0
    %1998 = vmatprep.subr.mxu0 0.0
    %1999 = vmatpush1.msra.mxu0 0.0
    %2000 = vmatprep.subr.mxu0 0.0
    %2001 = vmatpush1.msra.mxu0 0.0
    %2002 = vmatprep.subr.mxu0 0.0
    %2003 = vmatpush1.msra.mxu0 0.0
    %2004 = vmatprep.subr.mxu0 0.0
    %2005 = vmatpush1.msra.mxu0 0.0
    %2006 = vmatprep.subr.mxu0 0.0
    %2007 = vmatpush1.msra.mxu0 0.0
    %2008 = vmatprep.subr.mxu0 0.0
    %2009 = vmatpush1.msra.mxu0 0.0
    %2010 = vmatprep.mubr.f32.mxu0 0.0
    %2011 = vmatmul.mubr.f32.gmra.mrb[0].mxu0 %v1867
    %v2012 = vpop.f32.mrb[0].mxu0
    %v2013 = vadd.f32 0.0, %v2012
    %v2014 = vpop.f32.mrb[0].mxu0
    %v2015 = vadd.f32 0.0, %v2014
    %2016 = vdwg.mxu0
    %v2017 = vadd.f32 %v1871, %v1942
    %v2018 = vadd.f32 %v1872, %v1944
    %v2019 = vadd.f32 %v1873, %v2013
    %v2020 = vadd.f32 %v1874, %v2015
    %v2021 = vxor.u32 %v2017, 2147483648
    %v2022 = vmul.f32 %v2021, 1.442695
    %v2023 = vpow.pop %v2022
    %v2024 = vadd.f32 %v2023, 1.0
    %v2025 = vrcp.pop %v2024
    %v2026 = vmul.f32 1.0, %v2025
    %v2027 = vxor.u32 %v2018, 2147483648
    %v2028 = vmul.f32 %v2027, 1.442695
    %v2029 = vpow.pop %v2028
    %v2030 = vadd.f32 %v2029, 1.0
    %v2031 = vrcp.pop %v2030
    %v2032 = vmul.f32 1.0, %v2031
    %v2033 = vtanh.pop %v2019
    %v2034 = vxor.u32 %v2020, 2147483648
    %v2035 = vmul.f32 %v2034, 1.442695
    %v2036 = vpow.pop %v2035
    %v2037 = vadd.f32 %v2036, 1.0
    %v2038 = vrcp.pop %v2037
    %v2039 = vmul.f32 1.0, %v2038
    %v2040 = vmul.f32 %v2032, %v1865
    %v2041 = vmul.f32 %v2026, %v2033
    %v2042 = vadd.f32 %v2040, %v2041
    %v2043 = vtanh.pop %v2042
    %v2044 = vmul.f32 %v2039, %v2043
    %s2045 = smul.u32 6, 4
    %s2046 = smul.addr %s2045, 8
    %s2047 = scalar_lea.vmem [#allocation2], %s2046
    %v2048 = vld [vmem:[%s2047] sm:$0xff]
    %v2049 = vld [vmem:[%s2047 + $0x8] sm:$0xff]
    %v2050 = vld [vmem:[%s2047 + $0x10] sm:$0xff]
    %v2051 = vld [vmem:[%s2047 + $0x18] sm:$0xff]
    %2052 = vmatprep.subr.mxu0 %v152
    %2053 = vmatpush1.msra.mxu0 %v151
    %2054 = vmatprep.subr.mxu0 %v156
    %2055 = vmatpush1.msra.mxu0 %v155
    %2056 = vmatprep.subr.mxu0 %v160
    %2057 = vmatpush1.msra.mxu0 %v159
    %2058 = vmatprep.subr.mxu0 %v164
    %2059 = vmatpush1.msra.mxu0 %v163
    %2060 = vmatprep.subr.mxu0 %v168
    %2061 = vmatpush1.msra.mxu0 %v167
    %2062 = vmatprep.subr.mxu0 %v172
    %2063 = vmatpush1.msra.mxu0 %v171
    %2064 = vmatprep.subr.mxu0 %v176
    %2065 = vmatpush1.msra.mxu0 %v175
    %2066 = vmatprep.subr.mxu0 %v180
    %2067 = vmatpush1.msra.mxu0 %v179
    %2068 = vmatprep.subr.mxu0 %v184
    %2069 = vmatpush1.msra.mxu0 %v183
    %2070 = vmatprep.subr.mxu0 %v188
    %2071 = vmatpush1.msra.mxu0 %v187
    %2072 = vmatprep.subr.mxu0 %v192
    %2073 = vmatpush1.msra.mxu0 %v191
    %2074 = vmatprep.subr.mxu0 %v196
    %2075 = vmatpush1.msra.mxu0 %v195
    %2076 = vmatprep.subr.mxu0 %v200
    %2077 = vmatpush1.msra.mxu0 %v199
    %2078 = vmatprep.subr.mxu0 %v204
    %2079 = vmatpush1.msra.mxu0 %v203
    %2080 = vmatprep.subr.mxu0 %v208
    %2081 = vmatpush1.msra.mxu0 %v207
    %2082 = vmatprep.subr.mxu0 %v212
    %2083 = vmatpush1.msra.mxu0 %v211
    %2084 = vmatprep.subr.mxu0 0.0
    %2085 = vmatpush1.msra.mxu0 0.0
    %2086 = vmatprep.subr.mxu0 0.0
    %2087 = vmatpush1.msra.mxu0 0.0
    %2088 = vmatprep.subr.mxu0 0.0
    %2089 = vmatpush1.msra.mxu0 0.0
    %2090 = vmatprep.subr.mxu0 0.0
    %2091 = vmatpush1.msra.mxu0 0.0
    %2092 = vmatprep.subr.mxu0 0.0
    %2093 = vmatpush1.msra.mxu0 0.0
    %2094 = vmatprep.subr.mxu0 0.0
    %2095 = vmatpush1.msra.mxu0 0.0
    %2096 = vmatprep.subr.mxu0 0.0
    %2097 = vmatpush1.msra.mxu0 0.0
    %2098 = vmatprep.subr.mxu0 0.0
    %2099 = vmatpush1.msra.mxu0 0.0
    %2100 = vmatprep.subr.mxu0 0.0
    %2101 = vmatpush1.msra.mxu0 0.0
    %2102 = vmatprep.subr.mxu0 0.0
    %2103 = vmatpush1.msra.mxu0 0.0
    %2104 = vmatprep.subr.mxu0 0.0
    %2105 = vmatpush1.msra.mxu0 0.0
    %2106 = vmatprep.subr.mxu0 0.0
    %2107 = vmatpush1.msra.mxu0 0.0
    %2108 = vmatprep.subr.mxu0 0.0
    %2109 = vmatpush1.msra.mxu0 0.0
    %2110 = vmatprep.subr.mxu0 0.0
    %2111 = vmatpush1.msra.mxu0 0.0
    %2112 = vmatprep.subr.mxu0 0.0
    %2113 = vmatpush1.msra.mxu0 0.0
    %2114 = vmatprep.subr.mxu0 0.0
    %2115 = vmatpush1.msra.mxu0 0.0
    %2116 = vmatprep.mubr.f32.mxu0 0.0
    %2117 = vmatmul.mubr.f32.gmra.mrb[0].mxu0 %v2044
    %v2118 = vpop.f32.mrb[0].mxu0
    %v2119 = vadd.f32 0.0, %v2118
    %v2120 = vpop.f32.mrb[0].mxu0
    %v2121 = vadd.f32 0.0, %v2120
    %2122 = vdwg.mxu0
    %2123 = vmatprep.subr.mxu0 %v154
    %2124 = vmatpush1.msra.mxu0 %v153
    %2125 = vmatprep.subr.mxu0 %v158
    %2126 = vmatpush1.msra.mxu0 %v157
    %2127 = vmatprep.subr.mxu0 %v162
    %2128 = vmatpush1.msra.mxu0 %v161
    %2129 = vmatprep.subr.mxu0 %v166
    %2130 = vmatpush1.msra.mxu0 %v165
    %2131 = vmatprep.subr.mxu0 %v170
    %2132 = vmatpush1.msra.mxu0 %v169
    %2133 = vmatprep.subr.mxu0 %v174
    %2134 = vmatpush1.msra.mxu0 %v173
    %2135 = vmatprep.subr.mxu0 %v178
    %2136 = vmatpush1.msra.mxu0 %v177
    %2137 = vmatprep.subr.mxu0 %v182
    %2138 = vmatpush1.msra.mxu0 %v181
    %2139 = vmatprep.subr.mxu0 %v186
    %2140 = vmatpush1.msra.mxu0 %v185
    %2141 = vmatprep.subr.mxu0 %v190
    %2142 = vmatpush1.msra.mxu0 %v189
    %2143 = vmatprep.subr.mxu0 %v194
    %2144 = vmatpush1.msra.mxu0 %v193
    %2145 = vmatprep.subr.mxu0 %v198
    %2146 = vmatpush1.msra.mxu0 %v197
    %2147 = vmatprep.subr.mxu0 %v202
    %2148 = vmatpush1.msra.mxu0 %v201
    %2149 = vmatprep.subr.mxu0 %v206
    %2150 = vmatpush1.msra.mxu0 %v205
    %2151 = vmatprep.subr.mxu0 %v210
    %2152 = vmatpush1.msra.mxu0 %v209
    %2153 = vmatprep.subr.mxu0 %v214
    %2154 = vmatpush1.msra.mxu0 %v213
    %2155 = vmatprep.subr.mxu0 0.0
    %2156 = vmatpush1.msra.mxu0 0.0
    %2157 = vmatprep.subr.mxu0 0.0
    %2158 = vmatpush1.msra.mxu0 0.0
    %2159 = vmatprep.subr.mxu0 0.0
    %2160 = vmatpush1.msra.mxu0 0.0
    %2161 = vmatprep.subr.mxu0 0.0
    %2162 = vmatpush1.msra.mxu0 0.0
    %2163 = vmatprep.subr.mxu0 0.0
    %2164 = vmatpush1.msra.mxu0 0.0
    %2165 = vmatprep.subr.mxu0 0.0
    %2166 = vmatpush1.msra.mxu0 0.0
    %2167 = vmatprep.subr.mxu0 0.0
    %2168 = vmatpush1.msra.mxu0 0.0
    %2169 = vmatprep.subr.mxu0 0.0
    %2170 = vmatpush1.msra.mxu0 0.0
    %2171 = vmatprep.subr.mxu0 0.0
    %2172 = vmatpush1.msra.mxu0 0.0
    %2173 = vmatprep.subr.mxu0 0.0
    %2174 = vmatpush1.msra.mxu0 0.0
    %2175 = vmatprep.subr.mxu0 0.0
    %2176 = vmatpush1.msra.mxu0 0.0
    %2177 = vmatprep.subr.mxu0 0.0
    %2178 = vmatpush1.msra.mxu0 0.0
    %2179 = vmatprep.subr.mxu0 0.0
    %2180 = vmatpush1.msra.mxu0 0.0
    %2181 = vmatprep.subr.mxu0 0.0
    %2182 = vmatpush1.msra.mxu0 0.0
    %2183 = vmatprep.subr.mxu0 0.0
    %2184 = vmatpush1.msra.mxu0 0.0
    %2185 = vmatprep.subr.mxu0 0.0
    %2186 = vmatpush1.msra.mxu0 0.0
    %2187 = vmatprep.mubr.f32.mxu0 0.0
    %2188 = vmatmul.mubr.f32.gmra.mrb[0].mxu0 %v2044
    %v2189 = vpop.f32.mrb[0].mxu0
    %v2190 = vadd.f32 0.0, %v2189
    %v2191 = vpop.f32.mrb[0].mxu0
    %v2192 = vadd.f32 0.0, %v2191
    %2193 = vdwg.mxu0
    %v2194 = vadd.f32 %v2048, %v2119
    %v2195 = vadd.f32 %v2049, %v2121
    %v2196 = vadd.f32 %v2050, %v2190
    %v2197 = vadd.f32 %v2051, %v2192
    %v2198 = vxor.u32 %v2194, 2147483648
    %v2199 = vmul.f32 %v2198, 1.442695
    %v2200 = vpow.pop %v2199
    %v2201 = vadd.f32 %v2200, 1.0
    %v2202 = vrcp.pop %v2201
    %v2203 = vmul.f32 1.0, %v2202
    %v2204 = vxor.u32 %v2195, 2147483648
    %v2205 = vmul.f32 %v2204, 1.442695
    %v2206 = vpow.pop %v2205
    %v2207 = vadd.f32 %v2206, 1.0
    %v2208 = vrcp.pop %v2207
    %v2209 = vmul.f32 1.0, %v2208
    %v2210 = vtanh.pop %v2196
    %v2211 = vxor.u32 %v2197, 2147483648
    %v2212 = vmul.f32 %v2211, 1.442695
    %v2213 = vpow.pop %v2212
    %v2214 = vadd.f32 %v2213, 1.0
    %v2215 = vrcp.pop %v2214
    %v2216 = vmul.f32 1.0, %v2215
    %v2217 = vmul.f32 %v2209, %v2042
    %v2218 = vmul.f32 %v2203, %v2210
    %v2219 = vadd.f32 %v2217, %v2218
    %v2220 = vtanh.pop %v2219
    %v2221 = vmul.f32 %v2216, %v2220
    %s2222 = smul.u32 7, 4
    %s2223 = smul.addr %s2222, 8
    %s2224 = scalar_lea.vmem [#allocation2], %s2223
    %v2225 = vld [vmem:[%s2224] sm:$0xff]
    %v2226 = vld [vmem:[%s2224 + $0x8] sm:$0xff]
    %v2227 = vld [vmem:[%s2224 + $0x10] sm:$0xff]
    %v2228 = vld [vmem:[%s2224 + $0x18] sm:$0xff]
    %2229 = vmatprep.subr.mxu0 %v152
    %2230 = vmatpush1.msra.mxu0 %v151
    %2231 = vmatprep.subr.mxu0 %v156
    %2232 = vmatpush1.msra.mxu0 %v155
    %2233 = vmatprep.subr.mxu0 %v160
    %2234 = vmatpush1.msra.mxu0 %v159
    %2235 = vmatprep.subr.mxu0 %v164
    %2236 = vmatpush1.msra.mxu0 %v163
    %2237 = vmatprep.subr.mxu0 %v168
    %2238 = vmatpush1.msra.mxu0 %v167
    %2239 = vmatprep.subr.mxu0 %v172
    %2240 = vmatpush1.msra.mxu0 %v171
    %2241 = vmatprep.subr.mxu0 %v176
    %2242 = vmatpush1.msra.mxu0 %v175
    %2243 = vmatprep.subr.mxu0 %v180
    %2244 = vmatpush1.msra.mxu0 %v179
    %2245 = vmatprep.subr.mxu0 %v184
    %2246 = vmatpush1.msra.mxu0 %v183
    %2247 = vmatprep.subr.mxu0 %v188
    %2248 = vmatpush1.msra.mxu0 %v187
    %2249 = vmatprep.subr.mxu0 %v192
    %2250 = vmatpush1.msra.mxu0 %v191
    %2251 = vmatprep.subr.mxu0 %v196
    %2252 = vmatpush1.msra.mxu0 %v195
    %2253 = vmatprep.subr.mxu0 %v200
    %2254 = vmatpush1.msra.mxu0 %v199
    %2255 = vmatprep.subr.mxu0 %v204
    %2256 = vmatpush1.msra.mxu0 %v203
    %2257 = vmatprep.subr.mxu0 %v208
    %2258 = vmatpush1.msra.mxu0 %v207
    %2259 = vmatprep.subr.mxu0 %v212
    %2260 = vmatpush1.msra.mxu0 %v211
    %2261 = vmatprep.subr.mxu0 0.0
    %2262 = vmatpush1.msra.mxu0 0.0
    %2263 = vmatprep.subr.mxu0 0.0
    %2264 = vmatpush1.msra.mxu0 0.0
    %2265 = vmatprep.subr.mxu0 0.0
    %2266 = vmatpush1.msra.mxu0 0.0
    %2267 = vmatprep.subr.mxu0 0.0
    %2268 = vmatpush1.msra.mxu0 0.0
    %2269 = vmatprep.subr.mxu0 0.0
    %2270 = vmatpush1.msra.mxu0 0.0
    %2271 = vmatprep.subr.mxu0 0.0
    %2272 = vmatpush1.msra.mxu0 0.0
    %2273 = vmatprep.subr.mxu0 0.0
    %2274 = vmatpush1.msra.mxu0 0.0
    %2275 = vmatprep.subr.mxu0 0.0
    %2276 = vmatpush1.msra.mxu0 0.0
    %2277 = vmatprep.subr.mxu0 0.0
    %2278 = vmatpush1.msra.mxu0 0.0
    %2279 = vmatprep.subr.mxu0 0.0
    %2280 = vmatpush1.msra.mxu0 0.0
    %2281 = vmatprep.subr.mxu0 0.0
    %2282 = vmatpush1.msra.mxu0 0.0
    %2283 = vmatprep.subr.mxu0 0.0
    %2284 = vmatpush1.msra.mxu0 0.0
    %2285 = vmatprep.subr.mxu0 0.0
    %2286 = vmatpush1.msra.mxu0 0.0
    %2287 = vmatprep.subr.mxu0 0.0
    %2288 = vmatpush1.msra.mxu0 0.0
    %2289 = vmatprep.subr.mxu0 0.0
    %2290 = vmatpush1.msra.mxu0 0.0
    %2291 = vmatprep.subr.mxu0 0.0
    %2292 = vmatpush1.msra.mxu0 0.0
    %2293 = vmatprep.mubr.f32.mxu0 0.0
    %2294 = vmatmul.mubr.f32.gmra.mrb[0].mxu0 %v2221
    %v2295 = vpop.f32.mrb[0].mxu0
    %v2296 = vadd.f32 0.0, %v2295
    %v2297 = vpop.f32.mrb[0].mxu0
    %v2298 = vadd.f32 0.0, %v2297
    %2299 = vdwg.mxu0
    %2300 = vmatprep.subr.mxu0 %v154
    %2301 = vmatpush1.msra.mxu0 %v153
    %2302 = vmatprep.subr.mxu0 %v158
    %2303 = vmatpush1.msra.mxu0 %v157
    %2304 = vmatprep.subr.mxu0 %v162
    %2305 = vmatpush1.msra.mxu0 %v161
    %2306 = vmatprep.subr.mxu0 %v166
    %2307 = vmatpush1.msra.mxu0 %v165
    %2308 = vmatprep.subr.mxu0 %v170
    %2309 = vmatpush1.msra.mxu0 %v169
    %2310 = vmatprep.subr.mxu0 %v174
    %2311 = vmatpush1.msra.mxu0 %v173
    %2312 = vmatprep.subr.mxu0 %v178
    %2313 = vmatpush1.msra.mxu0 %v177
    %2314 = vmatprep.subr.mxu0 %v182
    %2315 = vmatpush1.msra.mxu0 %v181
    %2316 = vmatprep.subr.mxu0 %v186
    %2317 = vmatpush1.msra.mxu0 %v185
    %2318 = vmatprep.subr.mxu0 %v190
    %2319 = vmatpush1.msra.mxu0 %v189
    %2320 = vmatprep.subr.mxu0 %v194
    %2321 = vmatpush1.msra.mxu0 %v193
    %2322 = vmatprep.subr.mxu0 %v198
    %2323 = vmatpush1.msra.mxu0 %v197
    %2324 = vmatprep.subr.mxu0 %v202
    %2325 = vmatpush1.msra.mxu0 %v201
    %2326 = vmatprep.subr.mxu0 %v206
    %2327 = vmatpush1.msra.mxu0 %v205
    %2328 = vmatprep.subr.mxu0 %v210
    %2329 = vmatpush1.msra.mxu0 %v209
    %2330 = vmatprep.subr.mxu0 %v214
    %2331 = vmatpush1.msra.mxu0 %v213
    %2332 = vmatprep.subr.mxu0 0.0
    %2333 = vmatpush1.msra.mxu0 0.0
    %2334 = vmatprep.subr.mxu0 0.0
    %2335 = vmatpush1.msra.mxu0 0.0
    %2336 = vmatprep.subr.mxu0 0.0
    %2337 = vmatpush1.msra.mxu0 0.0
    %2338 = vmatprep.subr.mxu0 0.0
    %2339 = vmatpush1.msra.mxu0 0.0
    %2340 = vmatprep.subr.mxu0 0.0
    %2341 = vmatpush1.msra.mxu0 0.0
    %2342 = vmatprep.subr.mxu0 0.0
    %2343 = vmatpush1.msra.mxu0 0.0
    %2344 = vmatprep.subr.mxu0 0.0
    %2345 = vmatpush1.msra.mxu0 0.0
    %2346 = vmatprep.subr.mxu0 0.0
    %2347 = vmatpush1.msra.mxu0 0.0
    %2348 = vmatprep.subr.mxu0 0.0
    %2349 = vmatpush1.msra.mxu0 0.0
    %2350 = vmatprep.subr.mxu0 0.0
    %2351 = vmatpush1.msra.mxu0 0.0
    %2352 = vmatprep.subr.mxu0 0.0
    %2353 = vmatpush1.msra.mxu0 0.0
    %2354 = vmatprep.subr.mxu0 0.0
    %2355 = vmatpush1.msra.mxu0 0.0
    %2356 = vmatprep.subr.mxu0 0.0
    %2357 = vmatpush1.msra.mxu0 0.0
    %2358 = vmatprep.subr.mxu0 0.0
    %2359 = vmatpush1.msra.mxu0 0.0
    %2360 = vmatprep.subr.mxu0 0.0
    %2361 = vmatpush1.msra.mxu0 0.0
    %2362 = vmatprep.subr.mxu0 0.0
    %2363 = vmatpush1.msra.mxu0 0.0
    %2364 = vmatprep.mubr.f32.mxu0 0.0
    %2365 = vmatmul.mubr.f32.gmra.mrb[0].mxu0 %v2221
    %v2366 = vpop.f32.mrb[0].mxu0
    %v2367 = vadd.f32 0.0, %v2366
    %v2368 = vpop.f32.mrb[0].mxu0
    %v2369 = vadd.f32 0.0, %v2368
    %2370 = vdwg.mxu0
    %v2371 = vadd.f32 %v2225, %v2296
    %v2372 = vadd.f32 %v2226, %v2298
    %v2373 = vadd.f32 %v2227, %v2367
    %v2374 = vadd.f32 %v2228, %v2369
    %v2375 = vxor.u32 %v2371, 2147483648
    %v2376 = vmul.f32 %v2375, 1.442695
    %v2377 = vpow.pop %v2376
    %v2378 = vadd.f32 %v2377, 1.0
    %v2379 = vrcp.pop %v2378
    %v2380 = vmul.f32 1.0, %v2379
    %v2381 = vxor.u32 %v2372, 2147483648
    %v2382 = vmul.f32 %v2381, 1.442695
    %v2383 = vpow.pop %v2382
    %v2384 = vadd.f32 %v2383, 1.0
    %v2385 = vrcp.pop %v2384
    %v2386 = vmul.f32 1.0, %v2385
    %v2387 = vtanh.pop %v2373
    %v2388 = vxor.u32 %v2374, 2147483648
    %v2389 = vmul.f32 %v2388, 1.442695
    %v2390 = vpow.pop %v2389
    %v2391 = vadd.f32 %v2390, 1.0
    %v2392 = vrcp.pop %v2391
    %v2393 = vmul.f32 1.0, %v2392
    %v2394 = vmul.f32 %v2386, %v2219
    %v2395 = vmul.f32 %v2380, %v2387
    %v2396 = vadd.f32 %v2394, %v2395
    %v2397 = vtanh.pop %v2396
    %v2398 = vmul.f32 %v2393, %v2397
    %s2399 = smul.addr %s983, 8
    %s2400 = scalar_lea.vmem [#allocation3], %s2399
    %v2401 = vld [vmem:[%s2400] sm:$0xff]
    %v2402 = vld [vmem:[%s2400 + $0x8] sm:$0xff]
    %v2403 = vld [vmem:[%s2400 + $0x10] sm:$0xff]
    %v2404 = vld [vmem:[%s2400 + $0x18] sm:$0xff]
    %2405 = vmatprep.subr.mxu0 %v216
    %2406 = vmatpush1.msra.mxu0 %v215
    %2407 = vmatprep.subr.mxu0 %v220
    %2408 = vmatpush1.msra.mxu0 %v219
    %2409 = vmatprep.subr.mxu0 %v224
    %2410 = vmatpush1.msra.mxu0 %v223
    %2411 = vmatprep.subr.mxu0 %v228
    %2412 = vmatpush1.msra.mxu0 %v227
    %2413 = vmatprep.subr.mxu0 %v232
    %2414 = vmatpush1.msra.mxu0 %v231
    %2415 = vmatprep.subr.mxu0 %v236
    %2416 = vmatpush1.msra.mxu0 %v235
    %2417 = vmatprep.subr.mxu0 %v240
    %2418 = vmatpush1.msra.mxu0 %v239
    %2419 = vmatprep.subr.mxu0 %v244
    %2420 = vmatpush1.msra.mxu0 %v243
    %2421 = vmatprep.subr.mxu0 %v248
    %2422 = vmatpush1.msra.mxu0 %v247
    %2423 = vmatprep.subr.mxu0 %v252
    %2424 = vmatpush1.msra.mxu0 %v251
    %2425 = vmatprep.subr.mxu0 %v256
    %2426 = vmatpush1.msra.mxu0 %v255
    %2427 = vmatprep.subr.mxu0 %v260
    %2428 = vmatpush1.msra.mxu0 %v259
    %2429 = vmatprep.subr.mxu0 %v264
    %2430 = vmatpush1.msra.mxu0 %v263
    %2431 = vmatprep.subr.mxu0 %v268
    %2432 = vmatpush1.msra.mxu0 %v267
    %2433 = vmatprep.subr.mxu0 %v272
    %2434 = vmatpush1.msra.mxu0 %v271
    %2435 = vmatprep.subr.mxu0 %v276
    %2436 = vmatpush1.msra.mxu0 %v275
    %2437 = vmatprep.subr.mxu0 0.0
    %2438 = vmatpush1.msra.mxu0 0.0
    %2439 = vmatprep.subr.mxu0 0.0
    %2440 = vmatpush1.msra.mxu0 0.0
    %2441 = vmatprep.subr.mxu0 0.0
    %2442 = vmatpush1.msra.mxu0 0.0
    %2443 = vmatprep.subr.mxu0 0.0
    %2444 = vmatpush1.msra.mxu0 0.0
    %2445 = vmatprep.subr.mxu0 0.0
    %2446 = vmatpush1.msra.mxu0 0.0
    %2447 = vmatprep.subr.mxu0 0.0
    %2448 = vmatpush1.msra.mxu0 0.0
    %2449 = vmatprep.subr.mxu0 0.0
    %2450 = vmatpush1.msra.mxu0 0.0
    %2451 = vmatprep.subr.mxu0 0.0
    %2452 = vmatpush1.msra.mxu0 0.0
    %2453 = vmatprep.subr.mxu0 0.0
    %2454 = vmatpush1.msra.mxu0 0.0
    %2455 = vmatprep.subr.mxu0 0.0
    %2456 = vmatpush1.msra.mxu0 0.0
    %2457 = vmatprep.subr.mxu0 0.0
    %2458 = vmatpush1.msra.mxu0 0.0
    %2459 = vmatprep.subr.mxu0 0.0
    %2460 = vmatpush1.msra.mxu0 0.0
    %2461 = vmatprep.subr.mxu0 0.0
    %2462 = vmatpush1.msra.mxu0 0.0
    %2463 = vmatprep.subr.mxu0 0.0
    %2464 = vmatpush1.msra.mxu0 0.0
    %2465 = vmatprep.subr.mxu0 0.0
    %2466 = vmatpush1.msra.mxu0 0.0
    %2467 = vmatprep.subr.mxu0 0.0
    %2468 = vmatpush1.msra.mxu0 0.0
    %2469 = vmatprep.mubr.f32.mxu0 0.0
    %2470 = vmatmul.mubr.f32.gmra.mrb[0].mxu0 %v2398
    %v2471 = vpop.f32.mrb[0].mxu0
    %v2472 = vadd.f32 0.0, %v2471
    %v2473 = vpop.f32.mrb[0].mxu0
    %v2474 = vadd.f32 0.0, %v2473
    %2475 = vdwg.mxu0
    %2476 = vmatprep.subr.mxu0 %v218
    %2477 = vmatpush1.msra.mxu0 %v217
    %2478 = vmatprep.subr.mxu0 %v222
    %2479 = vmatpush1.msra.mxu0 %v221
    %2480 = vmatprep.subr.mxu0 %v226
    %2481 = vmatpush1.msra.mxu0 %v225
    %2482 = vmatprep.subr.mxu0 %v230
    %2483 = vmatpush1.msra.mxu0 %v229
    %2484 = vmatprep.subr.mxu0 %v234
    %2485 = vmatpush1.msra.mxu0 %v233
    %2486 = vmatprep.subr.mxu0 %v238
    %2487 = vmatpush1.msra.mxu0 %v237
    %2488 = vmatprep.subr.mxu0 %v242
    %2489 = vmatpush1.msra.mxu0 %v241
    %2490 = vmatprep.subr.mxu0 %v246
    %2491 = vmatpush1.msra.mxu0 %v245
    %2492 = vmatprep.subr.mxu0 %v250
    %2493 = vmatpush1.msra.mxu0 %v249
    %2494 = vmatprep.subr.mxu0 %v254
    %2495 = vmatpush1.msra.mxu0 %v253
    %2496 = vmatprep.subr.mxu0 %v258
    %2497 = vmatpush1.msra.mxu0 %v257
    %2498 = vmatprep.subr.mxu0 %v262
    %2499 = vmatpush1.msra.mxu0 %v261
    %2500 = vmatprep.subr.mxu0 %v266
    %2501 = vmatpush1.msra.mxu0 %v265
    %2502 = vmatprep.subr.mxu0 %v270
    %2503 = vmatpush1.msra.mxu0 %v269
    %2504 = vmatprep.subr.mxu0 %v274
    %2505 = vmatpush1.msra.mxu0 %v273
    %2506 = vmatprep.subr.mxu0 %v278
    %2507 = vmatpush1.msra.mxu0 %v277
    %2508 = vmatprep.subr.mxu0 0.0
    %2509 = vmatpush1.msra.mxu0 0.0
    %2510 = vmatprep.subr.mxu0 0.0
    %2511 = vmatpush1.msra.mxu0 0.0
    %2512 = vmatprep.subr.mxu0 0.0
    %2513 = vmatpush1.msra.mxu0 0.0
    %2514 = vmatprep.subr.mxu0 0.0
    %2515 = vmatpush1.msra.mxu0 0.0
    %2516 = vmatprep.subr.mxu0 0.0
    %2517 = vmatpush1.msra.mxu0 0.0
    %2518 = vmatprep.subr.mxu0 0.0
    %2519 = vmatpush1.msra.mxu0 0.0
    %2520 = vmatprep.subr.mxu0 0.0
    %2521 = vmatpush1.msra.mxu0 0.0
    %2522 = vmatprep.subr.mxu0 0.0
    %2523 = vmatpush1.msra.mxu0 0.0
    %2524 = vmatprep.subr.mxu0 0.0
    %2525 = vmatpush1.msra.mxu0 0.0
    %2526 = vmatprep.subr.mxu0 0.0
    %2527 = vmatpush1.msra.mxu0 0.0
    %2528 = vmatprep.subr.mxu0 0.0
    %2529 = vmatpush1.msra.mxu0 0.0
    %2530 = vmatprep.subr.mxu0 0.0
    %2531 = vmatpush1.msra.mxu0 0.0
    %2532 = vmatprep.subr.mxu0 0.0
    %2533 = vmatpush1.msra.mxu0 0.0
    %2534 = vmatprep.subr.mxu0 0.0
    %2535 = vmatpush1.msra.mxu0 0.0
    %2536 = vmatprep.subr.mxu0 0.0
    %2537 = vmatpush1.msra.mxu0 0.0
    %2538 = vmatprep.subr.mxu0 0.0
    %2539 = vmatpush1.msra.mxu0 0.0
    %2540 = vmatprep.mubr.f32.mxu0 0.0
    %2541 = vmatmul.mubr.f32.gmra.mrb[0].mxu0 %v2398
    %v2542 = vpop.f32.mrb[0].mxu0
    %v2543 = vadd.f32 0.0, %v2542
    %v2544 = vpop.f32.mrb[0].mxu0
    %v2545 = vadd.f32 0.0, %v2544
    %2546 = vdwg.mxu0
    %v2547 = vadd.f32 %v2401, %v2472
    %v2548 = vadd.f32 %v2402, %v2474
    %v2549 = vadd.f32 %v2403, %v2543
    %v2550 = vadd.f32 %v2404, %v2545
    %v2551 = vxor.u32 %v2547, 2147483648
    %v2552 = vmul.f32 %v2551, 1.442695
    %v2553 = vpow.pop %v2552
    %v2554 = vadd.f32 %v2553, 1.0
    %v2555 = vrcp.pop %v2554
    %v2556 = vmul.f32 1.0, %v2555
    %v2557 = vxor.u32 %v2548, 2147483648
    %v2558 = vmul.f32 %v2557, 1.442695
    %v2559 = vpow.pop %v2558
    %v2560 = vadd.f32 %v2559, 1.0
    %v2561 = vrcp.pop %v2560
    %v2562 = vmul.f32 1.0, %v2561
    %v2563 = vtanh.pop %v2549
    %v2564 = vxor.u32 %v2550, 2147483648
    %v2565 = vmul.f32 %v2564, 1.442695
    %v2566 = vpow.pop %v2565
    %v2567 = vadd.f32 %v2566, 1.0
    %v2568 = vrcp.pop %v2567
    %v2569 = vmul.f32 1.0, %v2568
    %v2570 = vmul.f32 %v2562, %v2396
    %v2571 = vmul.f32 %v2556, %v2563
    %v2572 = vadd.f32 %v2570, %v2571
    %v2573 = vtanh.pop %v2572
    %v2574 = vmul.f32 %v2569, %v2573
    %2575 = vst [vmem:[#allocation4] sm:$0xff] %v2574
    %s2576 = smul.addr %s1160, 8
    %s2577 = scalar_lea.vmem [#allocation3], %s2576
    %v2578 = vld [vmem:[%s2577] sm:$0xff]
    %v2579 = vld [vmem:[%s2577 + $0x8] sm:$0xff]
    %v2580 = vld [vmem:[%s2577 + $0x10] sm:$0xff]
    %v2581 = vld [vmem:[%s2577 + $0x18] sm:$0xff]
    %2582 = vmatprep.subr.mxu0 %v216
    %2583 = vmatpush1.msra.mxu0 %v215
    %2584 = vmatprep.subr.mxu0 %v220
    %2585 = vmatpush1.msra.mxu0 %v219
    %2586 = vmatprep.subr.mxu0 %v224
    %2587 = vmatpush1.msra.mxu0 %v223
    %2588 = vmatprep.subr.mxu0 %v228
    %2589 = vmatpush1.msra.mxu0 %v227
    %2590 = vmatprep.subr.mxu0 %v232
    %2591 = vmatpush1.msra.mxu0 %v231
    %2592 = vmatprep.subr.mxu0 %v236
    %2593 = vmatpush1.msra.mxu0 %v235
    %2594 = vmatprep.subr.mxu0 %v240
    %2595 = vmatpush1.msra.mxu0 %v239
    %2596 = vmatprep.subr.mxu0 %v244
    %2597 = vmatpush1.msra.mxu0 %v243
    %2598 = vmatprep.subr.mxu0 %v248
    %2599 = vmatpush1.msra.mxu0 %v247
    %2600 = vmatprep.subr.mxu0 %v252
    %2601 = vmatpush1.msra.mxu0 %v251
    %2602 = vmatprep.subr.mxu0 %v256
    %2603 = vmatpush1.msra.mxu0 %v255
    %2604 = vmatprep.subr.mxu0 %v260
    %2605 = vmatpush1.msra.mxu0 %v259
    %2606 = vmatprep.subr.mxu0 %v264
    %2607 = vmatpush1.msra.mxu0 %v263
    %2608 = vmatprep.subr.mxu0 %v268
    %2609 = vmatpush1.msra.mxu0 %v267
    %2610 = vmatprep.subr.mxu0 %v272
    %2611 = vmatpush1.msra.mxu0 %v271
    %2612 = vmatprep.subr.mxu0 %v276
    %2613 = vmatpush1.msra.mxu0 %v275
    %2614 = vmatprep.subr.mxu0 0.0
    %2615 = vmatpush1.msra.mxu0 0.0
    %2616 = vmatprep.subr.mxu0 0.0
    %2617 = vmatpush1.msra.mxu0 0.0
    %2618 = vmatprep.subr.mxu0 0.0
    %2619 = vmatpush1.msra.mxu0 0.0
    %2620 = vmatprep.subr.mxu0 0.0
    %2621 = vmatpush1.msra.mxu0 0.0
    %2622 = vmatprep.subr.mxu0 0.0
    %2623 = vmatpush1.msra.mxu0 0.0
    %2624 = vmatprep.subr.mxu0 0.0
    %2625 = vmatpush1.msra.mxu0 0.0
    %2626 = vmatprep.subr.mxu0 0.0
    %2627 = vmatpush1.msra.mxu0 0.0
    %2628 = vmatprep.subr.mxu0 0.0
    %2629 = vmatpush1.msra.mxu0 0.0
    %2630 = vmatprep.subr.mxu0 0.0
    %2631 = vmatpush1.msra.mxu0 0.0
    %2632 = vmatprep.subr.mxu0 0.0
    %2633 = vmatpush1.msra.mxu0 0.0
    %2634 = vmatprep.subr.mxu0 0.0
    %2635 = vmatpush1.msra.mxu0 0.0
    %2636 = vmatprep.subr.mxu0 0.0
    %2637 = vmatpush1.msra.mxu0 0.0
    %2638 = vmatprep.subr.mxu0 0.0
    %2639 = vmatpush1.msra.mxu0 0.0
    %2640 = vmatprep.subr.mxu0 0.0
    %2641 = vmatpush1.msra.mxu0 0.0
    %2642 = vmatprep.subr.mxu0 0.0
    %2643 = vmatpush1.msra.mxu0 0.0
    %2644 = vmatprep.subr.mxu0 0.0
    %2645 = vmatpush1.msra.mxu0 0.0
    %2646 = vmatprep.mubr.f32.mxu0 0.0
    %2647 = vmatmul.mubr.f32.gmra.mrb[0].mxu0 %v2574
    %v2648 = vpop.f32.mrb[0].mxu0
    %v2649 = vadd.f32 0.0, %v2648
    %v2650 = vpop.f32.mrb[0].mxu0
    %v2651 = vadd.f32 0.0, %v2650
    %2652 = vdwg.mxu0
    %2653 = vmatprep.subr.mxu0 %v218
    %2654 = vmatpush1.msra.mxu0 %v217
    %2655 = vmatprep.subr.mxu0 %v222
    %2656 = vmatpush1.msra.mxu0 %v221
    %2657 = vmatprep.subr.mxu0 %v226
    %2658 = vmatpush1.msra.mxu0 %v225
    %2659 = vmatprep.subr.mxu0 %v230
    %2660 = vmatpush1.msra.mxu0 %v229
    %2661 = vmatprep.subr.mxu0 %v234
    %2662 = vmatpush1.msra.mxu0 %v233
    %2663 = vmatprep.subr.mxu0 %v238
    %2664 = vmatpush1.msra.mxu0 %v237
    %2665 = vmatprep.subr.mxu0 %v242
    %2666 = vmatpush1.msra.mxu0 %v241
    %2667 = vmatprep.subr.mxu0 %v246
    %2668 = vmatpush1.msra.mxu0 %v245
    %2669 = vmatprep.subr.mxu0 %v250
    %2670 = vmatpush1.msra.mxu0 %v249
    %2671 = vmatprep.subr.mxu0 %v254
    %2672 = vmatpush1.msra.mxu0 %v253
    %2673 = vmatprep.subr.mxu0 %v258
    %2674 = vmatpush1.msra.mxu0 %v257
    %2675 = vmatprep.subr.mxu0 %v262
    %2676 = vmatpush1.msra.mxu0 %v261
    %2677 = vmatprep.subr.mxu0 %v266
    %2678 = vmatpush1.msra.mxu0 %v265
    %2679 = vmatprep.subr.mxu0 %v270
    %2680 = vmatpush1.msra.mxu0 %v269
    %2681 = vmatprep.subr.mxu0 %v274
    %2682 = vmatpush1.msra.mxu0 %v273
    %2683 = vmatprep.subr.mxu0 %v278
    %2684 = vmatpush1.msra.mxu0 %v277
    %2685 = vmatprep.subr.mxu0 0.0
    %2686 = vmatpush1.msra.mxu0 0.0
    %2687 = vmatprep.subr.mxu0 0.0
    %2688 = vmatpush1.msra.mxu0 0.0
    %2689 = vmatprep.subr.mxu0 0.0
    %2690 = vmatpush1.msra.mxu0 0.0
    %2691 = vmatprep.subr.mxu0 0.0
    %2692 = vmatpush1.msra.mxu0 0.0
    %2693 = vmatprep.subr.mxu0 0.0
    %2694 = vmatpush1.msra.mxu0 0.0
    %2695 = vmatprep.subr.mxu0 0.0
    %2696 = vmatpush1.msra.mxu0 0.0
    %2697 = vmatprep.subr.mxu0 0.0
    %2698 = vmatpush1.msra.mxu0 0.0
    %2699 = vmatprep.subr.mxu0 0.0
    %2700 = vmatpush1.msra.mxu0 0.0
    %2701 = vmatprep.subr.mxu0 0.0
    %2702 = vmatpush1.msra.mxu0 0.0
    %2703 = vmatprep.subr.mxu0 0.0
    %2704 = vmatpush1.msra.mxu0 0.0
    %2705 = vmatprep.subr.mxu0 0.0
    %2706 = vmatpush1.msra.mxu0 0.0
    %2707 = vmatprep.subr.mxu0 0.0
    %2708 = vmatpush1.msra.mxu0 0.0
    %2709 = vmatprep.subr.mxu0 0.0
    %2710 = vmatpush1.msra.mxu0 0.0
    %2711 = vmatprep.subr.mxu0 0.0
    %2712 = vmatpush1.msra.mxu0 0.0
    %2713 = vmatprep.subr.mxu0 0.0
    %2714 = vmatpush1.msra.mxu0 0.0
    %2715 = vmatprep.subr.mxu0 0.0
    %2716 = vmatpush1.msra.mxu0 0.0
    %2717 = vmatprep.mubr.f32.mxu0 0.0
    %2718 = vmatmul.mubr.f32.gmra.mrb[0].mxu0 %v2574
    %v2719 = vpop.f32.mrb[0].mxu0
    %v2720 = vadd.f32 0.0, %v2719
    %v2721 = vpop.f32.mrb[0].mxu0
    %v2722 = vadd.f32 0.0, %v2721
    %2723 = vdwg.mxu0
    %v2724 = vadd.f32 %v2578, %v2649
    %v2725 = vadd.f32 %v2579, %v2651
    %v2726 = vadd.f32 %v2580, %v2720
    %v2727 = vadd.f32 %v2581, %v2722
    %v2728 = vxor.u32 %v2724, 2147483648
    %v2729 = vmul.f32 %v2728, 1.442695
    %v2730 = vpow.pop %v2729
    %v2731 = vadd.f32 %v2730, 1.0
    %v2732 = vrcp.pop %v2731
    %v2733 = vmul.f32 1.0, %v2732
    %v2734 = vxor.u32 %v2725, 2147483648
    %v2735 = vmul.f32 %v2734, 1.442695
    %v2736 = vpow.pop %v2735
    %v2737 = vadd.f32 %v2736, 1.0
    %v2738 = vrcp.pop %v2737
    %v2739 = vmul.f32 1.0, %v2738
    %v2740 = vtanh.pop %v2726
    %v2741 = vxor.u32 %v2727, 2147483648
    %v2742 = vmul.f32 %v2741, 1.442695
    %v2743 = vpow.pop %v2742
    %v2744 = vadd.f32 %v2743, 1.0
    %v2745 = vrcp.pop %v2744
    %v2746 = vmul.f32 1.0, %v2745
    %v2747 = vmul.f32 %v2739, %v2572
    %v2748 = vmul.f32 %v2733, %v2740
    %v2749 = vadd.f32 %v2747, %v2748
    %v2750 = vtanh.pop %v2749
    %v2751 = vmul.f32 %v2746, %v2750
    %s2752 = scalar_lea.vmem [#allocation4], 8
    %2753 = vst [vmem:[%s2752] sm:$0xff] %v2751
    %s2754 = smul.addr %s1337, 8
    %s2755 = scalar_lea.vmem [#allocation3], %s2754
    %v2756 = vld [vmem:[%s2755] sm:$0xff]
    %v2757 = vld [vmem:[%s2755 + $0x8] sm:$0xff]
    %v2758 = vld [vmem:[%s2755 + $0x10] sm:$0xff]
    %v2759 = vld [vmem:[%s2755 + $0x18] sm:$0xff]
    %2760 = vmatprep.subr.mxu0 %v216
    %2761 = vmatpush1.msra.mxu0 %v215
    %2762 = vmatprep.subr.mxu0 %v220
    %2763 = vmatpush1.msra.mxu0 %v219
    %2764 = vmatprep.subr.mxu0 %v224
    %2765 = vmatpush1.msra.mxu0 %v223
    %2766 = vmatprep.subr.mxu0 %v228
    %2767 = vmatpush1.msra.mxu0 %v227
    %2768 = vmatprep.subr.mxu0 %v232
    %2769 = vmatpush1.msra.mxu0 %v231
    %2770 = vmatprep.subr.mxu0 %v236
    %2771 = vmatpush1.msra.mxu0 %v235
    %2772 = vmatprep.subr.mxu0 %v240
    %2773 = vmatpush1.msra.mxu0 %v239
    %2774 = vmatprep.subr.mxu0 %v244
    %2775 = vmatpush1.msra.mxu0 %v243
    %2776 = vmatprep.subr.mxu0 %v248
    %2777 = vmatpush1.msra.mxu0 %v247
    %2778 = vmatprep.subr.mxu0 %v252
    %2779 = vmatpush1.msra.mxu0 %v251
    %2780 = vmatprep.subr.mxu0 %v256
    %2781 = vmatpush1.msra.mxu0 %v255
    %2782 = vmatprep.subr.mxu0 %v260
    %2783 = vmatpush1.msra.mxu0 %v259
    %2784 = vmatprep.subr.mxu0 %v264
    %2785 = vmatpush1.msra.mxu0 %v263
    %2786 = vmatprep.subr.mxu0 %v268
    %2787 = vmatpush1.msra.mxu0 %v267
    %2788 = vmatprep.subr.mxu0 %v272
    %2789 = vmatpush1.msra.mxu0 %v271
    %2790 = vmatprep.subr.mxu0 %v276
    %2791 = vmatpush1.msra.mxu0 %v275
    %2792 = vmatprep.subr.mxu0 0.0
    %2793 = vmatpush1.msra.mxu0 0.0
    %2794 = vmatprep.subr.mxu0 0.0
    %2795 = vmatpush1.msra.mxu0 0.0
    %2796 = vmatprep.subr.mxu0 0.0
    %2797 = vmatpush1.msra.mxu0 0.0
    %2798 = vmatprep.subr.mxu0 0.0
    %2799 = vmatpush1.msra.mxu0 0.0
    %2800 = vmatprep.subr.mxu0 0.0
    %2801 = vmatpush1.msra.mxu0 0.0
    %2802 = vmatprep.subr.mxu0 0.0
    %2803 = vmatpush1.msra.mxu0 0.0
    %2804 = vmatprep.subr.mxu0 0.0
    %2805 = vmatpush1.msra.mxu0 0.0
    %2806 = vmatprep.subr.mxu0 0.0
    %2807 = vmatpush1.msra.mxu0 0.0
    %2808 = vmatprep.subr.mxu0 0.0
    %2809 = vmatpush1.msra.mxu0 0.0
    %2810 = vmatprep.subr.mxu0 0.0
    %2811 = vmatpush1.msra.mxu0 0.0
    %2812 = vmatprep.subr.mxu0 0.0
    %2813 = vmatpush1.msra.mxu0 0.0
    %2814 = vmatprep.subr.mxu0 0.0
    %2815 = vmatpush1.msra.mxu0 0.0
    %2816 = vmatprep.subr.mxu0 0.0
    %2817 = vmatpush1.msra.mxu0 0.0
    %2818 = vmatprep.subr.mxu0 0.0
    %2819 = vmatpush1.msra.mxu0 0.0
    %2820 = vmatprep.subr.mxu0 0.0
    %2821 = vmatpush1.msra.mxu0 0.0
    %2822 = vmatprep.subr.mxu0 0.0
    %2823 = vmatpush1.msra.mxu0 0.0
    %2824 = vmatprep.mubr.f32.mxu0 0.0
    %2825 = vmatmul.mubr.f32.gmra.mrb[0].mxu0 %v2751
    %v2826 = vpop.f32.mrb[0].mxu0
    %v2827 = vadd.f32 0.0, %v2826
    %v2828 = vpop.f32.mrb[0].mxu0
    %v2829 = vadd.f32 0.0, %v2828
    %2830 = vdwg.mxu0
    %2831 = vmatprep.subr.mxu0 %v218
    %2832 = vmatpush1.msra.mxu0 %v217
    %2833 = vmatprep.subr.mxu0 %v222
    %2834 = vmatpush1.msra.mxu0 %v221
    %2835 = vmatprep.subr.mxu0 %v226
    %2836 = vmatpush1.msra.mxu0 %v225
    %2837 = vmatprep.subr.mxu0 %v230
    %2838 = vmatpush1.msra.mxu0 %v229
    %2839 = vmatprep.subr.mxu0 %v234
    %2840 = vmatpush1.msra.mxu0 %v233
    %2841 = vmatprep.subr.mxu0 %v238
    %2842 = vmatpush1.msra.mxu0 %v237
    %2843 = vmatprep.subr.mxu0 %v242
    %2844 = vmatpush1.msra.mxu0 %v241
    %2845 = vmatprep.subr.mxu0 %v246
    %2846 = vmatpush1.msra.mxu0 %v245
    %2847 = vmatprep.subr.mxu0 %v250
    %2848 = vmatpush1.msra.mxu0 %v249
    %2849 = vmatprep.subr.mxu0 %v254
    %2850 = vmatpush1.msra.mxu0 %v253
    %2851 = vmatprep.subr.mxu0 %v258
    %2852 = vmatpush1.msra.mxu0 %v257
    %2853 = vmatprep.subr.mxu0 %v262
    %2854 = vmatpush1.msra.mxu0 %v261
    %2855 = vmatprep.subr.mxu0 %v266
    %2856 = vmatpush1.msra.mxu0 %v265
    %2857 = vmatprep.subr.mxu0 %v270
    %2858 = vmatpush1.msra.mxu0 %v269
    %2859 = vmatprep.subr.mxu0 %v274
    %2860 = vmatpush1.msra.mxu0 %v273
    %2861 = vmatprep.subr.mxu0 %v278
    %2862 = vmatpush1.msra.mxu0 %v277
    %2863 = vmatprep.subr.mxu0 0.0
    %2864 = vmatpush1.msra.mxu0 0.0
    %2865 = vmatprep.subr.mxu0 0.0
    %2866 = vmatpush1.msra.mxu0 0.0
    %2867 = vmatprep.subr.mxu0 0.0
    %2868 = vmatpush1.msra.mxu0 0.0
    %2869 = vmatprep.subr.mxu0 0.0
    %2870 = vmatpush1.msra.mxu0 0.0
    %2871 = vmatprep.subr.mxu0 0.0
    %2872 = vmatpush1.msra.mxu0 0.0
    %2873 = vmatprep.subr.mxu0 0.0
    %2874 = vmatpush1.msra.mxu0 0.0
    %2875 = vmatprep.subr.mxu0 0.0
    %2876 = vmatpush1.msra.mxu0 0.0
    %2877 = vmatprep.subr.mxu0 0.0
    %2878 = vmatpush1.msra.mxu0 0.0
    %2879 = vmatprep.subr.mxu0 0.0
    %2880 = vmatpush1.msra.mxu0 0.0
    %2881 = vmatprep.subr.mxu0 0.0
    %2882 = vmatpush1.msra.mxu0 0.0
    %2883 = vmatprep.subr.mxu0 0.0
    %2884 = vmatpush1.msra.mxu0 0.0
    %2885 = vmatprep.subr.mxu0 0.0
    %2886 = vmatpush1.msra.mxu0 0.0
    %2887 = vmatprep.subr.mxu0 0.0
    %2888 = vmatpush1.msra.mxu0 0.0
    %2889 = vmatprep.subr.mxu0 0.0
    %2890 = vmatpush1.msra.mxu0 0.0
    %2891 = vmatprep.subr.mxu0 0.0
    %2892 = vmatpush1.msra.mxu0 0.0
    %2893 = vmatprep.subr.mxu0 0.0
    %2894 = vmatpush1.msra.mxu0 0.0
    %2895 = vmatprep.mubr.f32.mxu0 0.0
    %2896 = vmatmul.mubr.f32.gmra.mrb[0].mxu0 %v2751
    %v2897 = vpop.f32.mrb[0].mxu0
    %v2898 = vadd.f32 0.0, %v2897
    %v2899 = vpop.f32.mrb[0].mxu0
    %v2900 = vadd.f32 0.0, %v2899
    %2901 = vdwg.mxu0
    %v2902 = vadd.f32 %v2756, %v2827
    %v2903 = vadd.f32 %v2757, %v2829
    %v2904 = vadd.f32 %v2758, %v2898
    %v2905 = vadd.f32 %v2759, %v2900
    %v2906 = vxor.u32 %v2902, 2147483648
    %v2907 = vmul.f32 %v2906, 1.442695
    %v2908 = vpow.pop %v2907
    %v2909 = vadd.f32 %v2908, 1.0
    %v2910 = vrcp.pop %v2909
    %v2911 = vmul.f32 1.0, %v2910
    %v2912 = vxor.u32 %v2903, 2147483648
    %v2913 = vmul.f32 %v2912, 1.442695
    %v2914 = vpow.pop %v2913
    %v2915 = vadd.f32 %v2914, 1.0
    %v2916 = vrcp.pop %v2915
    %v2917 = vmul.f32 1.0, %v2916
    %v2918 = vtanh.pop %v2904
    %v2919 = vxor.u32 %v2905, 2147483648
    %v2920 = vmul.f32 %v2919, 1.442695
    %v2921 = vpow.pop %v2920
    %v2922 = vadd.f32 %v2921, 1.0
    %v2923 = vrcp.pop %v2922
    %v2924 = vmul.f32 1.0, %v2923
    %v2925 = vmul.f32 %v2917, %v2749
    %v2926 = vmul.f32 %v2911, %v2918
    %v2927 = vadd.f32 %v2925, %v2926
    %v2928 = vtanh.pop %v2927
    %v2929 = vmul.f32 %v2924, %v2928
    %s2930 = scalar_lea.vmem [#allocation4], 16
    %2931 = vst [vmem:[%s2930] sm:$0xff] %v2929
    %s2932 = smul.addr %s1514, 8
    %s2933 = scalar_lea.vmem [#allocation3], %s2932
    %v2934 = vld [vmem:[%s2933] sm:$0xff]
    %v2935 = vld [vmem:[%s2933 + $0x8] sm:$0xff]
    %v2936 = vld [vmem:[%s2933 + $0x10] sm:$0xff]
    %v2937 = vld [vmem:[%s2933 + $0x18] sm:$0xff]
    %2938 = vmatprep.subr.mxu0 %v216
    %2939 = vmatpush1.msra.mxu0 %v215
    %2940 = vmatprep.subr.mxu0 %v220
    %2941 = vmatpush1.msra.mxu0 %v219
    %2942 = vmatprep.subr.mxu0 %v224
    %2943 = vmatpush1.msra.mxu0 %v223
    %2944 = vmatprep.subr.mxu0 %v228
    %2945 = vmatpush1.msra.mxu0 %v227
    %2946 = vmatprep.subr.mxu0 %v232
    %2947 = vmatpush1.msra.mxu0 %v231
    %2948 = vmatprep.subr.mxu0 %v236
    %2949 = vmatpush1.msra.mxu0 %v235
    %2950 = vmatprep.subr.mxu0 %v240
    %2951 = vmatpush1.msra.mxu0 %v239
    %2952 = vmatprep.subr.mxu0 %v244
    %2953 = vmatpush1.msra.mxu0 %v243
    %2954 = vmatprep.subr.mxu0 %v248
    %2955 = vmatpush1.msra.mxu0 %v247
    %2956 = vmatprep.subr.mxu0 %v252
    %2957 = vmatpush1.msra.mxu0 %v251
    %2958 = vmatprep.subr.mxu0 %v256
    %2959 = vmatpush1.msra.mxu0 %v255
    %2960 = vmatprep.subr.mxu0 %v260
    %2961 = vmatpush1.msra.mxu0 %v259
    %2962 = vmatprep.subr.mxu0 %v264
    %2963 = vmatpush1.msra.mxu0 %v263
    %2964 = vmatprep.subr.mxu0 %v268
    %2965 = vmatpush1.msra.mxu0 %v267
    %2966 = vmatprep.subr.mxu0 %v272
    %2967 = vmatpush1.msra.mxu0 %v271
    %2968 = vmatprep.subr.mxu0 %v276
    %2969 = vmatpush1.msra.mxu0 %v275
    %2970 = vmatprep.subr.mxu0 0.0
    %2971 = vmatpush1.msra.mxu0 0.0
    %2972 = vmatprep.subr.mxu0 0.0
    %2973 = vmatpush1.msra.mxu0 0.0
    %2974 = vmatprep.subr.mxu0 0.0
    %2975 = vmatpush1.msra.mxu0 0.0
    %2976 = vmatprep.subr.mxu0 0.0
    %2977 = vmatpush1.msra.mxu0 0.0
    %2978 = vmatprep.subr.mxu0 0.0
    %2979 = vmatpush1.msra.mxu0 0.0
    %2980 = vmatprep.subr.mxu0 0.0
    %2981 = vmatpush1.msra.mxu0 0.0
    %2982 = vmatprep.subr.mxu0 0.0
    %2983 = vmatpush1.msra.mxu0 0.0
    %2984 = vmatprep.subr.mxu0 0.0
    %2985 = vmatpush1.msra.mxu0 0.0
    %2986 = vmatprep.subr.mxu0 0.0
    %2987 = vmatpush1.msra.mxu0 0.0
    %2988 = vmatprep.subr.mxu0 0.0
    %2989 = vmatpush1.msra.mxu0 0.0
    %2990 = vmatprep.subr.mxu0 0.0
    %2991 = vmatpush1.msra.mxu0 0.0
    %2992 = vmatprep.subr.mxu0 0.0
    %2993 = vmatpush1.msra.mxu0 0.0
    %2994 = vmatprep.subr.mxu0 0.0
    %2995 = vmatpush1.msra.mxu0 0.0
    %2996 = vmatprep.subr.mxu0 0.0
    %2997 = vmatpush1.msra.mxu0 0.0
    %2998 = vmatprep.subr.mxu0 0.0
    %2999 = vmatpush1.msra.mxu0 0.0
    %3000 = vmatprep.subr.mxu0 0.0
    %3001 = vmatpush1.msra.mxu0 0.0
    %3002 = vmatprep.mubr.f32.mxu0 0.0
    %3003 = vmatmul.mubr.f32.gmra.mrb[0].mxu0 %v2929
    %v3004 = vpop.f32.mrb[0].mxu0
    %v3005 = vadd.f32 0.0, %v3004
    %v3006 = vpop.f32.mrb[0].mxu0
    %v3007 = vadd.f32 0.0, %v3006
    %3008 = vdwg.mxu0
    %3009 = vmatprep.subr.mxu0 %v218
    %3010 = vmatpush1.msra.mxu0 %v217
    %3011 = vmatprep.subr.mxu0 %v222
    %3012 = vmatpush1.msra.mxu0 %v221
    %3013 = vmatprep.subr.mxu0 %v226
    %3014 = vmatpush1.msra.mxu0 %v225
    %3015 = vmatprep.subr.mxu0 %v230
    %3016 = vmatpush1.msra.mxu0 %v229
    %3017 = vmatprep.subr.mxu0 %v234
    %3018 = vmatpush1.msra.mxu0 %v233
    %3019 = vmatprep.subr.mxu0 %v238
    %3020 = vmatpush1.msra.mxu0 %v237
    %3021 = vmatprep.subr.mxu0 %v242
    %3022 = vmatpush1.msra.mxu0 %v241
    %3023 = vmatprep.subr.mxu0 %v246
    %3024 = vmatpush1.msra.mxu0 %v245
    %3025 = vmatprep.subr.mxu0 %v250
    %3026 = vmatpush1.msra.mxu0 %v249
    %3027 = vmatprep.subr.mxu0 %v254
    %3028 = vmatpush1.msra.mxu0 %v253
    %3029 = vmatprep.subr.mxu0 %v258
    %3030 = vmatpush1.msra.mxu0 %v257
    %3031 = vmatprep.subr.mxu0 %v262
    %3032 = vmatpush1.msra.mxu0 %v261
    %3033 = vmatprep.subr.mxu0 %v266
    %3034 = vmatpush1.msra.mxu0 %v265
    %3035 = vmatprep.subr.mxu0 %v270
    %3036 = vmatpush1.msra.mxu0 %v269
    %3037 = vmatprep.subr.mxu0 %v274
    %3038 = vmatpush1.msra.mxu0 %v273
    %3039 = vmatprep.subr.mxu0 %v278
    %3040 = vmatpush1.msra.mxu0 %v277
    %3041 = vmatprep.subr.mxu0 0.0
    %3042 = vmatpush1.msra.mxu0 0.0
    %3043 = vmatprep.subr.mxu0 0.0
    %3044 = vmatpush1.msra.mxu0 0.0
    %3045 = vmatprep.subr.mxu0 0.0
    %3046 = vmatpush1.msra.mxu0 0.0
    %3047 = vmatprep.subr.mxu0 0.0
    %3048 = vmatpush1.msra.mxu0 0.0
    %3049 = vmatprep.subr.mxu0 0.0
    %3050 = vmatpush1.msra.mxu0 0.0
    %3051 = vmatprep.subr.mxu0 0.0
    %3052 = vmatpush1.msra.mxu0 0.0
    %3053 = vmatprep.subr.mxu0 0.0
    %3054 = vmatpush1.msra.mxu0 0.0
    %3055 = vmatprep.subr.mxu0 0.0
    %3056 = vmatpush1.msra.mxu0 0.0
    %3057 = vmatprep.subr.mxu0 0.0
    %3058 = vmatpush1.msra.mxu0 0.0
    %3059 = vmatprep.subr.mxu0 0.0
    %3060 = vmatpush1.msra.mxu0 0.0
    %3061 = vmatprep.subr.mxu0 0.0
    %3062 = vmatpush1.msra.mxu0 0.0
    %3063 = vmatprep.subr.mxu0 0.0
    %3064 = vmatpush1.msra.mxu0 0.0
    %3065 = vmatprep.subr.mxu0 0.0
    %3066 = vmatpush1.msra.mxu0 0.0
    %3067 = vmatprep.subr.mxu0 0.0
    %3068 = vmatpush1.msra.mxu0 0.0
    %3069 = vmatprep.subr.mxu0 0.0
    %3070 = vmatpush1.msra.mxu0 0.0
    %3071 = vmatprep.subr.mxu0 0.0
    %3072 = vmatpush1.msra.mxu0 0.0
    %3073 = vmatprep.mubr.f32.mxu0 0.0
    %3074 = vmatmul.mubr.f32.gmra.mrb[0].mxu0 %v2929
    %v3075 = vpop.f32.mrb[0].mxu0
    %v3076 = vadd.f32 0.0, %v3075
    %v3077 = vpop.f32.mrb[0].mxu0
    %v3078 = vadd.f32 0.0, %v3077
    %3079 = vdwg.mxu0
    %v3080 = vadd.f32 %v2934, %v3005
    %v3081 = vadd.f32 %v2935, %v3007
    %v3082 = vadd.f32 %v2936, %v3076
    %v3083 = vadd.f32 %v2937, %v3078
    %v3084 = vxor.u32 %v3080, 2147483648
    %v3085 = vmul.f32 %v3084, 1.442695
    %v3086 = vpow.pop %v3085
    %v3087 = vadd.f32 %v3086, 1.0
    %v3088 = vrcp.pop %v3087
    %v3089 = vmul.f32 1.0, %v3088
    %v3090 = vxor.u32 %v3081, 2147483648
    %v3091 = vmul.f32 %v3090, 1.442695
    %v3092 = vpow.pop %v3091
    %v3093 = vadd.f32 %v3092, 1.0
    %v3094 = vrcp.pop %v3093
    %v3095 = vmul.f32 1.0, %v3094
    %v3096 = vtanh.pop %v3082
    %v3097 = vxor.u32 %v3083, 2147483648
    %v3098 = vmul.f32 %v3097, 1.442695
    %v3099 = vpow.pop %v3098
    %v3100 = vadd.f32 %v3099, 1.0
    %v3101 = vrcp.pop %v3100
    %v3102 = vmul.f32 1.0, %v3101
    %v3103 = vmul.f32 %v3095, %v2927
    %v3104 = vmul.f32 %v3089, %v3096
    %v3105 = vadd.f32 %v3103, %v3104
    %v3106 = vtanh.pop %v3105
    %v3107 = vmul.f32 %v3102, %v3106
    %s3108 = scalar_lea.vmem [#allocation4], 24
    %3109 = vst [vmem:[%s3108] sm:$0xff] %v3107
    %s3110 = smul.addr %s1691, 8
    %s3111 = scalar_lea.vmem [#allocation3], %s3110
    %v3112 = vld [vmem:[%s3111] sm:$0xff]
    %v3113 = vld [vmem:[%s3111 + $0x8] sm:$0xff]
    %v3114 = vld [vmem:[%s3111 + $0x10] sm:$0xff]
    %v3115 = vld [vmem:[%s3111 + $0x18] sm:$0xff]
    %3116 = vmatprep.subr.mxu0 %v216
    %3117 = vmatpush1.msra.mxu0 %v215
    %3118 = vmatprep.subr.mxu0 %v220
    %3119 = vmatpush1.msra.mxu0 %v219
    %3120 = vmatprep.subr.mxu0 %v224
    %3121 = vmatpush1.msra.mxu0 %v223
    %3122 = vmatprep.subr.mxu0 %v228
    %3123 = vmatpush1.msra.mxu0 %v227
    %3124 = vmatprep.subr.mxu0 %v232
    %3125 = vmatpush1.msra.mxu0 %v231
    %3126 = vmatprep.subr.mxu0 %v236
    %3127 = vmatpush1.msra.mxu0 %v235
    %3128 = vmatprep.subr.mxu0 %v240
    %3129 = vmatpush1.msra.mxu0 %v239
    %3130 = vmatprep.subr.mxu0 %v244
    %3131 = vmatpush1.msra.mxu0 %v243
    %3132 = vmatprep.subr.mxu0 %v248
    %3133 = vmatpush1.msra.mxu0 %v247
    %3134 = vmatprep.subr.mxu0 %v252
    %3135 = vmatpush1.msra.mxu0 %v251
    %3136 = vmatprep.subr.mxu0 %v256
    %3137 = vmatpush1.msra.mxu0 %v255
    %3138 = vmatprep.subr.mxu0 %v260
    %3139 = vmatpush1.msra.mxu0 %v259
    %3140 = vmatprep.subr.mxu0 %v264
    %3141 = vmatpush1.msra.mxu0 %v263
    %3142 = vmatprep.subr.mxu0 %v268
    %3143 = vmatpush1.msra.mxu0 %v267
    %3144 = vmatprep.subr.mxu0 %v272
    %3145 = vmatpush1.msra.mxu0 %v271
    %3146 = vmatprep.subr.mxu0 %v276
    %3147 = vmatpush1.msra.mxu0 %v275
    %3148 = vmatprep.subr.mxu0 0.0
    %3149 = vmatpush1.msra.mxu0 0.0
    %3150 = vmatprep.subr.mxu0 0.0
    %3151 = vmatpush1.msra.mxu0 0.0
    %3152 = vmatprep.subr.mxu0 0.0
    %3153 = vmatpush1.msra.mxu0 0.0
    %3154 = vmatprep.subr.mxu0 0.0
    %3155 = vmatpush1.msra.mxu0 0.0
    %3156 = vmatprep.subr.mxu0 0.0
    %3157 = vmatpush1.msra.mxu0 0.0
    %3158 = vmatprep.subr.mxu0 0.0
    %3159 = vmatpush1.msra.mxu0 0.0
    %3160 = vmatprep.subr.mxu0 0.0
    %3161 = vmatpush1.msra.mxu0 0.0
    %3162 = vmatprep.subr.mxu0 0.0
    %3163 = vmatpush1.msra.mxu0 0.0
    %3164 = vmatprep.subr.mxu0 0.0
    %3165 = vmatpush1.msra.mxu0 0.0
    %3166 = vmatprep.subr.mxu0 0.0
    %3167 = vmatpush1.msra.mxu0 0.0
    %3168 = vmatprep.subr.mxu0 0.0
    %3169 = vmatpush1.msra.mxu0 0.0
    %3170 = vmatprep.subr.mxu0 0.0
    %3171 = vmatpush1.msra.mxu0 0.0
    %3172 = vmatprep.subr.mxu0 0.0
    %3173 = vmatpush1.msra.mxu0 0.0
    %3174 = vmatprep.subr.mxu0 0.0
    %3175 = vmatpush1.msra.mxu0 0.0
    %3176 = vmatprep.subr.mxu0 0.0
    %3177 = vmatpush1.msra.mxu0 0.0
    %3178 = vmatprep.subr.mxu0 0.0
    %3179 = vmatpush1.msra.mxu0 0.0
    %3180 = vmatprep.mubr.f32.mxu0 0.0
    %3181 = vmatmul.mubr.f32.gmra.mrb[0].mxu0 %v3107
    %v3182 = vpop.f32.mrb[0].mxu0
    %v3183 = vadd.f32 0.0, %v3182
    %v3184 = vpop.f32.mrb[0].mxu0
    %v3185 = vadd.f32 0.0, %v3184
    %3186 = vdwg.mxu0
    %3187 = vmatprep.subr.mxu0 %v218
    %3188 = vmatpush1.msra.mxu0 %v217
    %3189 = vmatprep.subr.mxu0 %v222
    %3190 = vmatpush1.msra.mxu0 %v221
    %3191 = vmatprep.subr.mxu0 %v226
    %3192 = vmatpush1.msra.mxu0 %v225
    %3193 = vmatprep.subr.mxu0 %v230
    %3194 = vmatpush1.msra.mxu0 %v229
    %3195 = vmatprep.subr.mxu0 %v234
    %3196 = vmatpush1.msra.mxu0 %v233
    %3197 = vmatprep.subr.mxu0 %v238
    %3198 = vmatpush1.msra.mxu0 %v237
    %3199 = vmatprep.subr.mxu0 %v242
    %3200 = vmatpush1.msra.mxu0 %v241
    %3201 = vmatprep.subr.mxu0 %v246
    %3202 = vmatpush1.msra.mxu0 %v245
    %3203 = vmatprep.subr.mxu0 %v250
    %3204 = vmatpush1.msra.mxu0 %v249
    %3205 = vmatprep.subr.mxu0 %v254
    %3206 = vmatpush1.msra.mxu0 %v253
    %3207 = vmatprep.subr.mxu0 %v258
    %3208 = vmatpush1.msra.mxu0 %v257
    %3209 = vmatprep.subr.mxu0 %v262
    %3210 = vmatpush1.msra.mxu0 %v261
    %3211 = vmatprep.subr.mxu0 %v266
    %3212 = vmatpush1.msra.mxu0 %v265
    %3213 = vmatprep.subr.mxu0 %v270
    %3214 = vmatpush1.msra.mxu0 %v269
    %3215 = vmatprep.subr.mxu0 %v274
    %3216 = vmatpush1.msra.mxu0 %v273
    %3217 = vmatprep.subr.mxu0 %v278
    %3218 = vmatpush1.msra.mxu0 %v277
    %3219 = vmatprep.subr.mxu0 0.0
    %3220 = vmatpush1.msra.mxu0 0.0
    %3221 = vmatprep.subr.mxu0 0.0
    %3222 = vmatpush1.msra.mxu0 0.0
    %3223 = vmatprep.subr.mxu0 0.0
    %3224 = vmatpush1.msra.mxu0 0.0
    %3225 = vmatprep.subr.mxu0 0.0
    %3226 = vmatpush1.msra.mxu0 0.0
    %3227 = vmatprep.subr.mxu0 0.0
    %3228 = vmatpush1.msra.mxu0 0.0
    %3229 = vmatprep.subr.mxu0 0.0
    %3230 = vmatpush1.msra.mxu0 0.0
    %3231 = vmatprep.subr.mxu0 0.0
    %3232 = vmatpush1.msra.mxu0 0.0
    %3233 = vmatprep.subr.mxu0 0.0
    %3234 = vmatpush1.msra.mxu0 0.0
    %3235 = vmatprep.subr.mxu0 0.0
    %3236 = vmatpush1.msra.mxu0 0.0
    %3237 = vmatprep.subr.mxu0 0.0
    %3238 = vmatpush1.msra.mxu0 0.0
    %3239 = vmatprep.subr.mxu0 0.0
    %3240 = vmatpush1.msra.mxu0 0.0
    %3241 = vmatprep.subr.mxu0 0.0
    %3242 = vmatpush1.msra.mxu0 0.0
    %3243 = vmatprep.subr.mxu0 0.0
    %3244 = vmatpush1.msra.mxu0 0.0
    %3245 = vmatprep.subr.mxu0 0.0
    %3246 = vmatpush1.msra.mxu0 0.0
    %3247 = vmatprep.subr.mxu0 0.0
    %3248 = vmatpush1.msra.mxu0 0.0
    %3249 = vmatprep.subr.mxu0 0.0
    %3250 = vmatpush1.msra.mxu0 0.0
    %3251 = vmatprep.mubr.f32.mxu0 0.0
    %3252 = vmatmul.mubr.f32.gmra.mrb[0].mxu0 %v3107
    %v3253 = vpop.f32.mrb[0].mxu0
    %v3254 = vadd.f32 0.0, %v3253
    %v3255 = vpop.f32.mrb[0].mxu0
    %v3256 = vadd.f32 0.0, %v3255
    %3257 = vdwg.mxu0
    %v3258 = vadd.f32 %v3112, %v3183
    %v3259 = vadd.f32 %v3113, %v3185
    %v3260 = vadd.f32 %v3114, %v3254
    %v3261 = vadd.f32 %v3115, %v3256
    %v3262 = vxor.u32 %v3258, 2147483648
    %v3263 = vmul.f32 %v3262, 1.442695
    %v3264 = vpow.pop %v3263
    %v3265 = vadd.f32 %v3264, 1.0
    %v3266 = vrcp.pop %v3265
    %v3267 = vmul.f32 1.0, %v3266
    %v3268 = vxor.u32 %v3259, 2147483648
    %v3269 = vmul.f32 %v3268, 1.442695
    %v3270 = vpow.pop %v3269
    %v3271 = vadd.f32 %v3270, 1.0
    %v3272 = vrcp.pop %v3271
    %v3273 = vmul.f32 1.0, %v3272
    %v3274 = vtanh.pop %v3260
    %v3275 = vxor.u32 %v3261, 2147483648
    %v3276 = vmul.f32 %v3275, 1.442695
    %v3277 = vpow.pop %v3276
    %v3278 = vadd.f32 %v3277, 1.0
    %v3279 = vrcp.pop %v3278
    %v3280 = vmul.f32 1.0, %v3279
    %v3281 = vmul.f32 %v3273, %v3105
    %v3282 = vmul.f32 %v3267, %v3274
    %v3283 = vadd.f32 %v3281, %v3282
    %v3284 = vtanh.pop %v3283
    %v3285 = vmul.f32 %v3280, %v3284
    %s3286 = scalar_lea.vmem [#allocation4], 32
    %3287 = vst [vmem:[%s3286] sm:$0xff] %v3285
    %s3288 = smul.addr %s1868, 8
    %s3289 = scalar_lea.vmem [#allocation3], %s3288
    %v3290 = vld [vmem:[%s3289] sm:$0xff]
    %v3291 = vld [vmem:[%s3289 + $0x8] sm:$0xff]
    %v3292 = vld [vmem:[%s3289 + $0x10] sm:$0xff]
    %v3293 = vld [vmem:[%s3289 + $0x18] sm:$0xff]
    %3294 = vmatprep.subr.mxu0 %v216
    %3295 = vmatpush1.msra.mxu0 %v215
    %3296 = vmatprep.subr.mxu0 %v220
    %3297 = vmatpush1.msra.mxu0 %v219
    %3298 = vmatprep.subr.mxu0 %v224
    %3299 = vmatpush1.msra.mxu0 %v223
    %3300 = vmatprep.subr.mxu0 %v228
    %3301 = vmatpush1.msra.mxu0 %v227
    %3302 = vmatprep.subr.mxu0 %v232
    %3303 = vmatpush1.msra.mxu0 %v231
    %3304 = vmatprep.subr.mxu0 %v236
    %3305 = vmatpush1.msra.mxu0 %v235
    %3306 = vmatprep.subr.mxu0 %v240
    %3307 = vmatpush1.msra.mxu0 %v239
    %3308 = vmatprep.subr.mxu0 %v244
    %3309 = vmatpush1.msra.mxu0 %v243
    %3310 = vmatprep.subr.mxu0 %v248
    %3311 = vmatpush1.msra.mxu0 %v247
    %3312 = vmatprep.subr.mxu0 %v252
    %3313 = vmatpush1.msra.mxu0 %v251
    %3314 = vmatprep.subr.mxu0 %v256
    %3315 = vmatpush1.msra.mxu0 %v255
    %3316 = vmatprep.subr.mxu0 %v260
    %3317 = vmatpush1.msra.mxu0 %v259
    %3318 = vmatprep.subr.mxu0 %v264
    %3319 = vmatpush1.msra.mxu0 %v263
    %3320 = vmatprep.subr.mxu0 %v268
    %3321 = vmatpush1.msra.mxu0 %v267
    %3322 = vmatprep.subr.mxu0 %v272
    %3323 = vmatpush1.msra.mxu0 %v271
    %3324 = vmatprep.subr.mxu0 %v276
    %3325 = vmatpush1.msra.mxu0 %v275
    %3326 = vmatprep.subr.mxu0 0.0
    %3327 = vmatpush1.msra.mxu0 0.0
    %3328 = vmatprep.subr.mxu0 0.0
    %3329 = vmatpush1.msra.mxu0 0.0
    %3330 = vmatprep.subr.mxu0 0.0
    %3331 = vmatpush1.msra.mxu0 0.0
    %3332 = vmatprep.subr.mxu0 0.0
    %3333 = vmatpush1.msra.mxu0 0.0
    %3334 = vmatprep.subr.mxu0 0.0
    %3335 = vmatpush1.msra.mxu0 0.0
    %3336 = vmatprep.subr.mxu0 0.0
    %3337 = vmatpush1.msra.mxu0 0.0
    %3338 = vmatprep.subr.mxu0 0.0
    %3339 = vmatpush1.msra.mxu0 0.0
    %3340 = vmatprep.subr.mxu0 0.0
    %3341 = vmatpush1.msra.mxu0 0.0
    %3342 = vmatprep.subr.mxu0 0.0
    %3343 = vmatpush1.msra.mxu0 0.0
    %3344 = vmatprep.subr.mxu0 0.0
    %3345 = vmatpush1.msra.mxu0 0.0
    %3346 = vmatprep.subr.mxu0 0.0
    %3347 = vmatpush1.msra.mxu0 0.0
    %3348 = vmatprep.subr.mxu0 0.0
    %3349 = vmatpush1.msra.mxu0 0.0
    %3350 = vmatprep.subr.mxu0 0.0
    %3351 = vmatpush1.msra.mxu0 0.0
    %3352 = vmatprep.subr.mxu0 0.0
    %3353 = vmatpush1.msra.mxu0 0.0
    %3354 = vmatprep.subr.mxu0 0.0
    %3355 = vmatpush1.msra.mxu0 0.0
    %3356 = vmatprep.subr.mxu0 0.0
    %3357 = vmatpush1.msra.mxu0 0.0
    %3358 = vmatprep.mubr.f32.mxu0 0.0
    %3359 = vmatmul.mubr.f32.gmra.mrb[0].mxu0 %v3285
    %v3360 = vpop.f32.mrb[0].mxu0
    %v3361 = vadd.f32 0.0, %v3360
    %v3362 = vpop.f32.mrb[0].mxu0
    %v3363 = vadd.f32 0.0, %v3362
    %3364 = vdwg.mxu0
    %3365 = vmatprep.subr.mxu0 %v218
    %3366 = vmatpush1.msra.mxu0 %v217
    %3367 = vmatprep.subr.mxu0 %v222
    %3368 = vmatpush1.msra.mxu0 %v221
    %3369 = vmatprep.subr.mxu0 %v226
    %3370 = vmatpush1.msra.mxu0 %v225
    %3371 = vmatprep.subr.mxu0 %v230
    %3372 = vmatpush1.msra.mxu0 %v229
    %3373 = vmatprep.subr.mxu0 %v234
    %3374 = vmatpush1.msra.mxu0 %v233
    %3375 = vmatprep.subr.mxu0 %v238
    %3376 = vmatpush1.msra.mxu0 %v237
    %3377 = vmatprep.subr.mxu0 %v242
    %3378 = vmatpush1.msra.mxu0 %v241
    %3379 = vmatprep.subr.mxu0 %v246
    %3380 = vmatpush1.msra.mxu0 %v245
    %3381 = vmatprep.subr.mxu0 %v250
    %3382 = vmatpush1.msra.mxu0 %v249
    %3383 = vmatprep.subr.mxu0 %v254
    %3384 = vmatpush1.msra.mxu0 %v253
    %3385 = vmatprep.subr.mxu0 %v258
    %3386 = vmatpush1.msra.mxu0 %v257
    %3387 = vmatprep.subr.mxu0 %v262
    %3388 = vmatpush1.msra.mxu0 %v261
    %3389 = vmatprep.subr.mxu0 %v266
    %3390 = vmatpush1.msra.mxu0 %v265
    %3391 = vmatprep.subr.mxu0 %v270
    %3392 = vmatpush1.msra.mxu0 %v269
    %3393 = vmatprep.subr.mxu0 %v274
    %3394 = vmatpush1.msra.mxu0 %v273
    %3395 = vmatprep.subr.mxu0 %v278
    %3396 = vmatpush1.msra.mxu0 %v277
    %3397 = vmatprep.subr.mxu0 0.0
    %3398 = vmatpush1.msra.mxu0 0.0
    %3399 = vmatprep.subr.mxu0 0.0
    %3400 = vmatpush1.msra.mxu0 0.0
    %3401 = vmatprep.subr.mxu0 0.0
    %3402 = vmatpush1.msra.mxu0 0.0
    %3403 = vmatprep.subr.mxu0 0.0
    %3404 = vmatpush1.msra.mxu0 0.0
    %3405 = vmatprep.subr.mxu0 0.0
    %3406 = vmatpush1.msra.mxu0 0.0
    %3407 = vmatprep.subr.mxu0 0.0
    %3408 = vmatpush1.msra.mxu0 0.0
    %3409 = vmatprep.subr.mxu0 0.0
    %3410 = vmatpush1.msra.mxu0 0.0
    %3411 = vmatprep.subr.mxu0 0.0
    %3412 = vmatpush1.msra.mxu0 0.0
    %3413 = vmatprep.subr.mxu0 0.0
    %3414 = vmatpush1.msra.mxu0 0.0
    %3415 = vmatprep.subr.mxu0 0.0
    %3416 = vmatpush1.msra.mxu0 0.0
    %3417 = vmatprep.subr.mxu0 0.0
    %3418 = vmatpush1.msra.mxu0 0.0
    %3419 = vmatprep.subr.mxu0 0.0
    %3420 = vmatpush1.msra.mxu0 0.0
    %3421 = vmatprep.subr.mxu0 0.0
    %3422 = vmatpush1.msra.mxu0 0.0
    %3423 = vmatprep.subr.mxu0 0.0
    %3424 = vmatpush1.msra.mxu0 0.0
    %3425 = vmatprep.subr.mxu0 0.0
    %3426 = vmatpush1.msra.mxu0 0.0
    %3427 = vmatprep.subr.mxu0 0.0
    %3428 = vmatpush1.msra.mxu0 0.0
    %3429 = vmatprep.mubr.f32.mxu0 0.0
    %3430 = vmatmul.mubr.f32.gmra.mrb[0].mxu0 %v3285
    %v3431 = vpop.f32.mrb[0].mxu0
    %v3432 = vadd.f32 0.0, %v3431
    %v3433 = vpop.f32.mrb[0].mxu0
    %v3434 = vadd.f32 0.0, %v3433
    %3435 = vdwg.mxu0
    %v3436 = vadd.f32 %v3290, %v3361
    %v3437 = vadd.f32 %v3291, %v3363
    %v3438 = vadd.f32 %v3292, %v3432
    %v3439 = vadd.f32 %v3293, %v3434
    %v3440 = vxor.u32 %v3436, 2147483648
    %v3441 = vmul.f32 %v3440, 1.442695
    %v3442 = vpow.pop %v3441
    %v3443 = vadd.f32 %v3442, 1.0
    %v3444 = vrcp.pop %v3443
    %v3445 = vmul.f32 1.0, %v3444
    %v3446 = vxor.u32 %v3437, 2147483648
    %v3447 = vmul.f32 %v3446, 1.442695
    %v3448 = vpow.pop %v3447
    %v3449 = vadd.f32 %v3448, 1.0
    %v3450 = vrcp.pop %v3449
    %v3451 = vmul.f32 1.0, %v3450
    %v3452 = vtanh.pop %v3438
    %v3453 = vxor.u32 %v3439, 2147483648
    %v3454 = vmul.f32 %v3453, 1.442695
    %v3455 = vpow.pop %v3454
    %v3456 = vadd.f32 %v3455, 1.0
    %v3457 = vrcp.pop %v3456
    %v3458 = vmul.f32 1.0, %v3457
    %v3459 = vmul.f32 %v3451, %v3283
    %v3460 = vmul.f32 %v3445, %v3452
    %v3461 = vadd.f32 %v3459, %v3460
    %v3462 = vtanh.pop %v3461
    %v3463 = vmul.f32 %v3458, %v3462
    %s3464 = scalar_lea.vmem [#allocation4], 40
    %3465 = vst [vmem:[%s3464] sm:$0xff] %v3463
    %s3466 = smul.addr %s2045, 8
    %s3467 = scalar_lea.vmem [#allocation3], %s3466
    %v3468 = vld [vmem:[%s3467] sm:$0xff]
    %v3469 = vld [vmem:[%s3467 + $0x8] sm:$0xff]
    %v3470 = vld [vmem:[%s3467 + $0x10] sm:$0xff]
    %v3471 = vld [vmem:[%s3467 + $0x18] sm:$0xff]
    %3472 = vmatprep.subr.mxu0 %v216
    %3473 = vmatpush1.msra.mxu0 %v215
    %3474 = vmatprep.subr.mxu0 %v220
    %3475 = vmatpush1.msra.mxu0 %v219
    %3476 = vmatprep.subr.mxu0 %v224
    %3477 = vmatpush1.msra.mxu0 %v223
    %3478 = vmatprep.subr.mxu0 %v228
    %3479 = vmatpush1.msra.mxu0 %v227
    %3480 = vmatprep.subr.mxu0 %v232
    %3481 = vmatpush1.msra.mxu0 %v231
    %3482 = vmatprep.subr.mxu0 %v236
    %3483 = vmatpush1.msra.mxu0 %v235
    %3484 = vmatprep.subr.mxu0 %v240
    %3485 = vmatpush1.msra.mxu0 %v239
    %3486 = vmatprep.subr.mxu0 %v244
    %3487 = vmatpush1.msra.mxu0 %v243
    %3488 = vmatprep.subr.mxu0 %v248
    %3489 = vmatpush1.msra.mxu0 %v247
    %3490 = vmatprep.subr.mxu0 %v252
    %3491 = vmatpush1.msra.mxu0 %v251
    %3492 = vmatprep.subr.mxu0 %v256
    %3493 = vmatpush1.msra.mxu0 %v255
    %3494 = vmatprep.subr.mxu0 %v260
    %3495 = vmatpush1.msra.mxu0 %v259
    %3496 = vmatprep.subr.mxu0 %v264
    %3497 = vmatpush1.msra.mxu0 %v263
    %3498 = vmatprep.subr.mxu0 %v268
    %3499 = vmatpush1.msra.mxu0 %v267
    %3500 = vmatprep.subr.mxu0 %v272
    %3501 = vmatpush1.msra.mxu0 %v271
    %3502 = vmatprep.subr.mxu0 %v276
    %3503 = vmatpush1.msra.mxu0 %v275
    %3504 = vmatprep.subr.mxu0 0.0
    %3505 = vmatpush1.msra.mxu0 0.0
    %3506 = vmatprep.subr.mxu0 0.0
    %3507 = vmatpush1.msra.mxu0 0.0
    %3508 = vmatprep.subr.mxu0 0.0
    %3509 = vmatpush1.msra.mxu0 0.0
    %3510 = vmatprep.subr.mxu0 0.0
    %3511 = vmatpush1.msra.mxu0 0.0
    %3512 = vmatprep.subr.mxu0 0.0
    %3513 = vmatpush1.msra.mxu0 0.0
    %3514 = vmatprep.subr.mxu0 0.0
    %3515 = vmatpush1.msra.mxu0 0.0
    %3516 = vmatprep.subr.mxu0 0.0
    %3517 = vmatpush1.msra.mxu0 0.0
    %3518 = vmatprep.subr.mxu0 0.0
    %3519 = vmatpush1.msra.mxu0 0.0
    %3520 = vmatprep.subr.mxu0 0.0
    %3521 = vmatpush1.msra.mxu0 0.0
    %3522 = vmatprep.subr.mxu0 0.0
    %3523 = vmatpush1.msra.mxu0 0.0
    %3524 = vmatprep.subr.mxu0 0.0
    %3525 = vmatpush1.msra.mxu0 0.0
    %3526 = vmatprep.subr.mxu0 0.0
    %3527 = vmatpush1.msra.mxu0 0.0
    %3528 = vmatprep.subr.mxu0 0.0
    %3529 = vmatpush1.msra.mxu0 0.0
    %3530 = vmatprep.subr.mxu0 0.0
    %3531 = vmatpush1.msra.mxu0 0.0
    %3532 = vmatprep.subr.mxu0 0.0
    %3533 = vmatpush1.msra.mxu0 0.0
    %3534 = vmatprep.subr.mxu0 0.0
    %3535 = vmatpush1.msra.mxu0 0.0
    %3536 = vmatprep.mubr.f32.mxu0 0.0
    %3537 = vmatmul.mubr.f32.gmra.mrb[0].mxu0 %v3463
    %v3538 = vpop.f32.mrb[0].mxu0
    %v3539 = vadd.f32 0.0, %v3538
    %v3540 = vpop.f32.mrb[0].mxu0
    %v3541 = vadd.f32 0.0, %v3540
    %3542 = vdwg.mxu0
    %3543 = vmatprep.subr.mxu0 %v218
    %3544 = vmatpush1.msra.mxu0 %v217
    %3545 = vmatprep.subr.mxu0 %v222
    %3546 = vmatpush1.msra.mxu0 %v221
    %3547 = vmatprep.subr.mxu0 %v226
    %3548 = vmatpush1.msra.mxu0 %v225
    %3549 = vmatprep.subr.mxu0 %v230
    %3550 = vmatpush1.msra.mxu0 %v229
    %3551 = vmatprep.subr.mxu0 %v234
    %3552 = vmatpush1.msra.mxu0 %v233
    %3553 = vmatprep.subr.mxu0 %v238
    %3554 = vmatpush1.msra.mxu0 %v237
    %3555 = vmatprep.subr.mxu0 %v242
    %3556 = vmatpush1.msra.mxu0 %v241
    %3557 = vmatprep.subr.mxu0 %v246
    %3558 = vmatpush1.msra.mxu0 %v245
    %3559 = vmatprep.subr.mxu0 %v250
    %3560 = vmatpush1.msra.mxu0 %v249
    %3561 = vmatprep.subr.mxu0 %v254
    %3562 = vmatpush1.msra.mxu0 %v253
    %3563 = vmatprep.subr.mxu0 %v258
    %3564 = vmatpush1.msra.mxu0 %v257
    %3565 = vmatprep.subr.mxu0 %v262
    %3566 = vmatpush1.msra.mxu0 %v261
    %3567 = vmatprep.subr.mxu0 %v266
    %3568 = vmatpush1.msra.mxu0 %v265
    %3569 = vmatprep.subr.mxu0 %v270
    %3570 = vmatpush1.msra.mxu0 %v269
    %3571 = vmatprep.subr.mxu0 %v274
    %3572 = vmatpush1.msra.mxu0 %v273
    %3573 = vmatprep.subr.mxu0 %v278
    %3574 = vmatpush1.msra.mxu0 %v277
    %3575 = vmatprep.subr.mxu0 0.0
    %3576 = vmatpush1.msra.mxu0 0.0
    %3577 = vmatprep.subr.mxu0 0.0
    %3578 = vmatpush1.msra.mxu0 0.0
    %3579 = vmatprep.subr.mxu0 0.0
    %3580 = vmatpush1.msra.mxu0 0.0
    %3581 = vmatprep.subr.mxu0 0.0
    %3582 = vmatpush1.msra.mxu0 0.0
    %3583 = vmatprep.subr.mxu0 0.0
    %3584 = vmatpush1.msra.mxu0 0.0
    %3585 = vmatprep.subr.mxu0 0.0
    %3586 = vmatpush1.msra.mxu0 0.0
    %3587 = vmatprep.subr.mxu0 0.0
    %3588 = vmatpush1.msra.mxu0 0.0
    %3589 = vmatprep.subr.mxu0 0.0
    %3590 = vmatpush1.msra.mxu0 0.0
    %3591 = vmatprep.subr.mxu0 0.0
    %3592 = vmatpush1.msra.mxu0 0.0
    %3593 = vmatprep.subr.mxu0 0.0
    %3594 = vmatpush1.msra.mxu0 0.0
    %3595 = vmatprep.subr.mxu0 0.0
    %3596 = vmatpush1.msra.mxu0 0.0
    %3597 = vmatprep.subr.mxu0 0.0
    %3598 = vmatpush1.msra.mxu0 0.0
    %3599 = vmatprep.subr.mxu0 0.0
    %3600 = vmatpush1.msra.mxu0 0.0
    %3601 = vmatprep.subr.mxu0 0.0
    %3602 = vmatpush1.msra.mxu0 0.0
    %3603 = vmatprep.subr.mxu0 0.0
    %3604 = vmatpush1.msra.mxu0 0.0
    %3605 = vmatprep.subr.mxu0 0.0
    %3606 = vmatpush1.msra.mxu0 0.0
    %3607 = vmatprep.mubr.f32.mxu0 0.0
    %3608 = vmatmul.mubr.f32.gmra.mrb[0].mxu0 %v3463
    %v3609 = vpop.f32.mrb[0].mxu0
    %v3610 = vadd.f32 0.0, %v3609
    %v3611 = vpop.f32.mrb[0].mxu0
    %v3612 = vadd.f32 0.0, %v3611
    %3613 = vdwg.mxu0
    %v3614 = vadd.f32 %v3468, %v3539
    %v3615 = vadd.f32 %v3469, %v3541
    %v3616 = vadd.f32 %v3470, %v3610
    %v3617 = vadd.f32 %v3471, %v3612
    %v3618 = vxor.u32 %v3614, 2147483648
    %v3619 = vmul.f32 %v3618, 1.442695
    %v3620 = vpow.pop %v3619
    %v3621 = vadd.f32 %v3620, 1.0
    %v3622 = vrcp.pop %v3621
    %v3623 = vmul.f32 1.0, %v3622
    %v3624 = vxor.u32 %v3615, 2147483648
    %v3625 = vmul.f32 %v3624, 1.442695
    %v3626 = vpow.pop %v3625
    %v3627 = vadd.f32 %v3626, 1.0
    %v3628 = vrcp.pop %v3627
    %v3629 = vmul.f32 1.0, %v3628
    %v3630 = vtanh.pop %v3616
    %v3631 = vxor.u32 %v3617, 2147483648
    %v3632 = vmul.f32 %v3631, 1.442695
    %v3633 = vpow.pop %v3632
    %v3634 = vadd.f32 %v3633, 1.0
    %v3635 = vrcp.pop %v3634
    %v3636 = vmul.f32 1.0, %v3635
    %v3637 = vmul.f32 %v3629, %v3461
    %v3638 = vmul.f32 %v3623, %v3630
    %v3639 = vadd.f32 %v3637, %v3638
    %v3640 = vtanh.pop %v3639
    %v3641 = vmul.f32 %v3636, %v3640
    %s3642 = scalar_lea.vmem [#allocation4], 48
    %3643 = vst [vmem:[%s3642] sm:$0xff] %v3641
    %s3644 = smul.addr %s2222, 8
    %s3645 = scalar_lea.vmem [#allocation3], %s3644
    %v3646 = vld [vmem:[%s3645] sm:$0xff]
    %v3647 = vld [vmem:[%s3645 + $0x8] sm:$0xff]
    %v3648 = vld [vmem:[%s3645 + $0x10] sm:$0xff]
    %v3649 = vld [vmem:[%s3645 + $0x18] sm:$0xff]
    %3650 = vmatprep.subr.mxu0 %v216
    %3651 = vmatpush1.msra.mxu0 %v215
    %3652 = vmatprep.subr.mxu0 %v220
    %3653 = vmatpush1.msra.mxu0 %v219
    %3654 = vmatprep.subr.mxu0 %v224
    %3655 = vmatpush1.msra.mxu0 %v223
    %3656 = vmatprep.subr.mxu0 %v228
    %3657 = vmatpush1.msra.mxu0 %v227
    %3658 = vmatprep.subr.mxu0 %v232
    %3659 = vmatpush1.msra.mxu0 %v231
    %3660 = vmatprep.subr.mxu0 %v236
    %3661 = vmatpush1.msra.mxu0 %v235
    %3662 = vmatprep.subr.mxu0 %v240
    %3663 = vmatpush1.msra.mxu0 %v239
    %3664 = vmatprep.subr.mxu0 %v244
    %3665 = vmatpush1.msra.mxu0 %v243
    %3666 = vmatprep.subr.mxu0 %v248
    %3667 = vmatpush1.msra.mxu0 %v247
    %3668 = vmatprep.subr.mxu0 %v252
    %3669 = vmatpush1.msra.mxu0 %v251
    %3670 = vmatprep.subr.mxu0 %v256
    %3671 = vmatpush1.msra.mxu0 %v255
    %3672 = vmatprep.subr.mxu0 %v260
    %3673 = vmatpush1.msra.mxu0 %v259
    %3674 = vmatprep.subr.mxu0 %v264
    %3675 = vmatpush1.msra.mxu0 %v263
    %3676 = vmatprep.subr.mxu0 %v268
    %3677 = vmatpush1.msra.mxu0 %v267
    %3678 = vmatprep.subr.mxu0 %v272
    %3679 = vmatpush1.msra.mxu0 %v271
    %3680 = vmatprep.subr.mxu0 %v276
    %3681 = vmatpush1.msra.mxu0 %v275
    %3682 = vmatprep.subr.mxu0 0.0
    %3683 = vmatpush1.msra.mxu0 0.0
    %3684 = vmatprep.subr.mxu0 0.0
    %3685 = vmatpush1.msra.mxu0 0.0
    %3686 = vmatprep.subr.mxu0 0.0
    %3687 = vmatpush1.msra.mxu0 0.0
    %3688 = vmatprep.subr.mxu0 0.0
    %3689 = vmatpush1.msra.mxu0 0.0
    %3690 = vmatprep.subr.mxu0 0.0
    %3691 = vmatpush1.msra.mxu0 0.0
    %3692 = vmatprep.subr.mxu0 0.0
    %3693 = vmatpush1.msra.mxu0 0.0
    %3694 = vmatprep.subr.mxu0 0.0
    %3695 = vmatpush1.msra.mxu0 0.0
    %3696 = vmatprep.subr.mxu0 0.0
    %3697 = vmatpush1.msra.mxu0 0.0
    %3698 = vmatprep.subr.mxu0 0.0
    %3699 = vmatpush1.msra.mxu0 0.0
    %3700 = vmatprep.subr.mxu0 0.0
    %3701 = vmatpush1.msra.mxu0 0.0
    %3702 = vmatprep.subr.mxu0 0.0
    %3703 = vmatpush1.msra.mxu0 0.0
    %3704 = vmatprep.subr.mxu0 0.0
    %3705 = vmatpush1.msra.mxu0 0.0
    %3706 = vmatprep.subr.mxu0 0.0
    %3707 = vmatpush1.msra.mxu0 0.0
    %3708 = vmatprep.subr.mxu0 0.0
    %3709 = vmatpush1.msra.mxu0 0.0
    %3710 = vmatprep.subr.mxu0 0.0
    %3711 = vmatpush1.msra.mxu0 0.0
    %3712 = vmatprep.subr.mxu0 0.0
    %3713 = vmatpush1.msra.mxu0 0.0
    %3714 = vmatprep.mubr.f32.mxu0 0.0
    %3715 = vmatmul.mubr.f32.gmra.mrb[0].mxu0 %v3641
    %v3716 = vpop.f32.mrb[0].mxu0
    %v3717 = vadd.f32 0.0, %v3716
    %v3718 = vpop.f32.mrb[0].mxu0
    %v3719 = vadd.f32 0.0, %v3718
    %3720 = vdwg.mxu0
    %3721 = vmatprep.subr.mxu0 %v218
    %3722 = vmatpush1.msra.mxu0 %v217
    %3723 = vmatprep.subr.mxu0 %v222
    %3724 = vmatpush1.msra.mxu0 %v221
    %3725 = vmatprep.subr.mxu0 %v226
    %3726 = vmatpush1.msra.mxu0 %v225
    %3727 = vmatprep.subr.mxu0 %v230
    %3728 = vmatpush1.msra.mxu0 %v229
    %3729 = vmatprep.subr.mxu0 %v234
    %3730 = vmatpush1.msra.mxu0 %v233
    %3731 = vmatprep.subr.mxu0 %v238
    %3732 = vmatpush1.msra.mxu0 %v237
    %3733 = vmatprep.subr.mxu0 %v242
    %3734 = vmatpush1.msra.mxu0 %v241
    %3735 = vmatprep.subr.mxu0 %v246
    %3736 = vmatpush1.msra.mxu0 %v245
    %3737 = vmatprep.subr.mxu0 %v250
    %3738 = vmatpush1.msra.mxu0 %v249
    %3739 = vmatprep.subr.mxu0 %v254
    %3740 = vmatpush1.msra.mxu0 %v253
    %3741 = vmatprep.subr.mxu0 %v258
    %3742 = vmatpush1.msra.mxu0 %v257
    %3743 = vmatprep.subr.mxu0 %v262
    %3744 = vmatpush1.msra.mxu0 %v261
    %3745 = vmatprep.subr.mxu0 %v266
    %3746 = vmatpush1.msra.mxu0 %v265
    %3747 = vmatprep.subr.mxu0 %v270
    %3748 = vmatpush1.msra.mxu0 %v269
    %3749 = vmatprep.subr.mxu0 %v274
    %3750 = vmatpush1.msra.mxu0 %v273
    %3751 = vmatprep.subr.mxu0 %v278
    %3752 = vmatpush1.msra.mxu0 %v277
    %3753 = vmatprep.subr.mxu0 0.0
    %3754 = vmatpush1.msra.mxu0 0.0
    %3755 = vmatprep.subr.mxu0 0.0
    %3756 = vmatpush1.msra.mxu0 0.0
    %3757 = vmatprep.subr.mxu0 0.0
    %3758 = vmatpush1.msra.mxu0 0.0
    %3759 = vmatprep.subr.mxu0 0.0
    %3760 = vmatpush1.msra.mxu0 0.0
    %3761 = vmatprep.subr.mxu0 0.0
    %3762 = vmatpush1.msra.mxu0 0.0
    %3763 = vmatprep.subr.mxu0 0.0
    %3764 = vmatpush1.msra.mxu0 0.0
    %3765 = vmatprep.subr.mxu0 0.0
    %3766 = vmatpush1.msra.mxu0 0.0
    %3767 = vmatprep.subr.mxu0 0.0
    %3768 = vmatpush1.msra.mxu0 0.0
    %3769 = vmatprep.subr.mxu0 0.0
    %3770 = vmatpush1.msra.mxu0 0.0
    %3771 = vmatprep.subr.mxu0 0.0
    %3772 = vmatpush1.msra.mxu0 0.0
    %3773 = vmatprep.subr.mxu0 0.0
    %3774 = vmatpush1.msra.mxu0 0.0
    %3775 = vmatprep.subr.mxu0 0.0
    %3776 = vmatpush1.msra.mxu0 0.0
    %3777 = vmatprep.subr.mxu0 0.0
    %3778 = vmatpush1.msra.mxu0 0.0
    %3779 = vmatprep.subr.mxu0 0.0
    %3780 = vmatpush1.msra.mxu0 0.0
    %3781 = vmatprep.subr.mxu0 0.0
    %3782 = vmatpush1.msra.mxu0 0.0
    %3783 = vmatprep.subr.mxu0 0.0
    %3784 = vmatpush1.msra.mxu0 0.0
    %3785 = vmatprep.mubr.f32.mxu0 0.0
    %3786 = vmatmul.mubr.f32.gmra.mrb[0].mxu0 %v3641
    %v3787 = vpop.f32.mrb[0].mxu0
    %v3788 = vadd.f32 0.0, %v3787
    %v3789 = vpop.f32.mrb[0].mxu0
    %v3790 = vadd.f32 0.0, %v3789
    %3791 = vdwg.mxu0
    %v3792 = vadd.f32 %v3646, %v3717
    %v3793 = vadd.f32 %v3647, %v3719
    %v3794 = vadd.f32 %v3648, %v3788
    %v3795 = vadd.f32 %v3649, %v3790
    %v3796 = vxor.u32 %v3792, 2147483648
    %v3797 = vmul.f32 %v3796, 1.442695
    %v3798 = vpow.pop %v3797
    %v3799 = vadd.f32 %v3798, 1.0
    %v3800 = vrcp.pop %v3799
    %v3801 = vmul.f32 1.0, %v3800
    %v3802 = vxor.u32 %v3793, 2147483648
    %v3803 = vmul.f32 %v3802, 1.442695
    %v3804 = vpow.pop %v3803
    %v3805 = vadd.f32 %v3804, 1.0
    %v3806 = vrcp.pop %v3805
    %v3807 = vmul.f32 1.0, %v3806
    %v3808 = vtanh.pop %v3794
    %v3809 = vxor.u32 %v3795, 2147483648
    %v3810 = vmul.f32 %v3809, 1.442695
    %v3811 = vpow.pop %v3810
    %v3812 = vadd.f32 %v3811, 1.0
    %v3813 = vrcp.pop %v3812
    %v3814 = vmul.f32 1.0, %v3813
    %v3815 = vmul.f32 %v3807, %v3639
    %v3816 = vmul.f32 %v3801, %v3808
    %v3817 = vadd.f32 %v3815, %v3816
    %v3818 = vtanh.pop %v3817
    %v3819 = vmul.f32 %v3814, %v3818
    %s3820 = scalar_lea.vmem [#allocation4], 56
    %3821 = vst [vmem:[%s3820] sm:$0xff] %v3819
    %v3822 = vld [vmem:[#allocation4] sm:$0xff]
    %v3823 = vld [vmem:[#allocation4 + $0x8] sm:$0xff]
    %v3824 = vld [vmem:[#allocation4 + $0x10] sm:$0xff]
    %v3825 = vld [vmem:[#allocation4 + $0x18] sm:$0xff]
    %v3826 = vld [vmem:[#allocation4 + $0x20] sm:$0xff]
    %v3827 = vld [vmem:[#allocation4 + $0x28] sm:$0xff]
    %v3828 = vld [vmem:[#allocation4 + $0x30] sm:$0xff]
    %v3829 = vld [vmem:[#allocation4 + $0x38] sm:$0xff]
    %v3830 = vld [vmem:[#allocation16] sm:$0xff]
    %v3831 = vld [vmem:[#allocation16 + $0x8] sm:$0xff]
    %v3832 = vld [vmem:[#allocation16 + $0x10] sm:$0xff]
    %v3833 = vld [vmem:[#allocation16 + $0x18] sm:$0xff]
    %v3834 = vld [vmem:[#allocation16 + $0x20] sm:$0xff]
    %v3835 = vld [vmem:[#allocation16 + $0x28] sm:$0xff]
    %v3836 = vld [vmem:[#allocation16 + $0x30] sm:$0xff]
    %v3837 = vld [vmem:[#allocation16 + $0x38] sm:$0xff]
    %v3838 = vld [vmem:[#allocation16 + $0x40] sm:$0xff]
    %v3839 = vld [vmem:[#allocation16 + $0x48] sm:$0xff]
    %v3840 = vld [vmem:[#allocation16 + $0x50] sm:$0xff]
    %v3841 = vld [vmem:[#allocation16 + $0x58] sm:$0xff]
    %v3842 = vld [vmem:[#allocation16 + $0x60] sm:$0xff]
    %v3843 = vld [vmem:[#allocation16 + $0x68] sm:$0xff]
    %v3844 = vld [vmem:[#allocation16 + $0x70] sm:$0xff]
    %v3845 = vld [vmem:[#allocation16 + $0x78] sm:$0xff]
    %v3846 = vld [vmem:[%s9] sm:$0x1]
    %v3848 = vlaneseq
    %v3849 = vshrl.u32 %v3848, 7
    %v3850 = vsub.s32 0, %v3849
    %v3851 = vrot.slane %v3846, %v3850
    %3853 = vmatprep.subr.mxu0 0.0
    %3854 = vmatpush1.msra.mxu0 %v3830
    %3855 = vmatprep.subr.mxu0 0.0
    %3856 = vmatpush1.msra.mxu0 %v3831
    %3857 = vmatprep.subr.mxu0 0.0
    %3858 = vmatpush1.msra.mxu0 %v3832
    %3859 = vmatprep.subr.mxu0 0.0
    %3860 = vmatpush1.msra.mxu0 %v3833
    %3861 = vmatprep.subr.mxu0 0.0
    %3862 = vmatpush1.msra.mxu0 %v3834
    %3863 = vmatprep.subr.mxu0 0.0
    %3864 = vmatpush1.msra.mxu0 %v3835
    %3865 = vmatprep.subr.mxu0 0.0
    %3866 = vmatpush1.msra.mxu0 %v3836
    %3867 = vmatprep.subr.mxu0 0.0
    %3868 = vmatpush1.msra.mxu0 %v3837
    %3869 = vmatprep.subr.mxu0 0.0
    %3870 = vmatpush1.msra.mxu0 %v3838
    %3871 = vmatprep.subr.mxu0 0.0
    %3872 = vmatpush1.msra.mxu0 %v3839
    %3873 = vmatprep.subr.mxu0 0.0
    %3874 = vmatpush1.msra.mxu0 %v3840
    %3875 = vmatprep.subr.mxu0 0.0
    %3876 = vmatpush1.msra.mxu0 %v3841
    %3877 = vmatprep.subr.mxu0 0.0
    %3878 = vmatpush1.msra.mxu0 %v3842
    %3879 = vmatprep.subr.mxu0 0.0
    %3880 = vmatpush1.msra.mxu0 %v3843
    %3881 = vmatprep.subr.mxu0 0.0
    %3882 = vmatpush1.msra.mxu0 %v3844
    %3883 = vmatprep.subr.mxu0 0.0
    %3884 = vmatpush1.msra.mxu0 %v3845
    %3885 = vmatprep.subr.mxu0 0.0
    %3886 = vmatpush1.msra.mxu0 0.0
    %3887 = vmatprep.subr.mxu0 0.0
    %3888 = vmatpush1.msra.mxu0 0.0
    %3889 = vmatprep.subr.mxu0 0.0
    %3890 = vmatpush1.msra.mxu0 0.0
    %3891 = vmatprep.subr.mxu0 0.0
    %3892 = vmatpush1.msra.mxu0 0.0
    %3893 = vmatprep.subr.mxu0 0.0
    %3894 = vmatpush1.msra.mxu0 0.0
    %3895 = vmatprep.subr.mxu0 0.0
    %3896 = vmatpush1.msra.mxu0 0.0
    %3897 = vmatprep.subr.mxu0 0.0
    %3898 = vmatpush1.msra.mxu0 0.0
    %3899 = vmatprep.subr.mxu0 0.0
    %3900 = vmatpush1.msra.mxu0 0.0
    %3901 = vmatprep.subr.mxu0 0.0
    %3902 = vmatpush1.msra.mxu0 0.0
    %3903 = vmatprep.subr.mxu0 0.0
    %3904 = vmatpush1.msra.mxu0 0.0
    %3905 = vmatprep.subr.mxu0 0.0
    %3906 = vmatpush1.msra.mxu0 0.0
    %3907 = vmatprep.subr.mxu0 0.0
    %3908 = vmatpush1.msra.mxu0 0.0
    %3909 = vmatprep.subr.mxu0 0.0
    %3910 = vmatpush1.msra.mxu0 0.0
    %3911 = vmatprep.subr.mxu0 0.0
    %3912 = vmatpush1.msra.mxu0 0.0
    %3913 = vmatprep.subr.mxu0 0.0
    %3914 = vmatpush1.msra.mxu0 0.0
    %3915 = vmatprep.subr.mxu0 0.0
    %3916 = vmatpush1.msra.mxu0 0.0
    %3917 = vmatprep.mubr.f32.mxu0 0.0
    %3918 = vmatmul.mubr.f32.gmra.mrb[0].mxu0 %v3822
    %v3919 = vpop.f32.mrb[0].mxu0
    %v3920 = vadd.f32 %v3851, %v3919
    %v3921 = vpop.f32.mrb[0].mxu0
    %3922 = vmatprep.mubr.f32.mxu0 0.0
    %3923 = vmatmul.mubr.f32.gmra.mrb[0].mxu0 %v3823
    %v3924 = vpop.f32.mrb[0].mxu0
    %v3925 = vadd.f32 %v3851, %v3924
    %v3926 = vpop.f32.mrb[0].mxu0
    %3927 = vmatprep.mubr.f32.mxu0 0.0
    %3928 = vmatmul.mubr.f32.gmra.mrb[0].mxu0 %v3824
    %v3929 = vpop.f32.mrb[0].mxu0
    %v3930 = vadd.f32 %v3851, %v3929
    %v3931 = vpop.f32.mrb[0].mxu0
    %3932 = vmatprep.mubr.f32.mxu0 0.0
    %3933 = vmatmul.mubr.f32.gmra.mrb[0].mxu0 %v3825
    %v3934 = vpop.f32.mrb[0].mxu0
    %v3935 = vadd.f32 %v3851, %v3934
    %v3936 = vpop.f32.mrb[0].mxu0
    %3937 = vmatprep.mubr.f32.mxu0 0.0
    %3938 = vmatmul.mubr.f32.gmra.mrb[0].mxu0 %v3826
    %v3939 = vpop.f32.mrb[0].mxu0
    %v3940 = vadd.f32 %v3851, %v3939
    %v3941 = vpop.f32.mrb[0].mxu0
    %3942 = vmatprep.mubr.f32.mxu0 0.0
    %3943 = vmatmul.mubr.f32.gmra.mrb[0].mxu0 %v3827
    %v3944 = vpop.f32.mrb[0].mxu0
    %v3945 = vadd.f32 %v3851, %v3944
    %v3946 = vpop.f32.mrb[0].mxu0
    %3947 = vmatprep.mubr.f32.mxu0 0.0
    %3948 = vmatmul.mubr.f32.gmra.mrb[0].mxu0 %v3828
    %v3949 = vpop.f32.mrb[0].mxu0
    %v3950 = vadd.f32 %v3851, %v3949
    %v3951 = vpop.f32.mrb[0].mxu0
    %3952 = vmatprep.mubr.f32.mxu0 0.0
    %3953 = vmatmul.mubr.f32.gmra.mrb[0].mxu0 %v3829
    %v3954 = vpop.f32.mrb[0].mxu0
    %v3955 = vadd.f32 %v3851, %v3954
    %v3956 = vpop.f32.mrb[0].mxu0
    %3957 = vdwg.mxu0
    %v3958 = vtanh.pop %v3920
    %v3959 = vtanh.pop %v3925
    %v3960 = vtanh.pop %v3930
    %v3961 = vtanh.pop %v3935
    %v3962 = vtanh.pop %v3940
    %v3963 = vtanh.pop %v3945
    %v3964 = vtanh.pop %v3950
    %v3965 = vtanh.pop %v3955
    %v3966 = vld [vmem:[#allocation17] sm:$0xff]
    %v3967 = vld [vmem:[#allocation17 + $0x8] sm:$0xff]
    %v3968 = vld [vmem:[#allocation17 + $0x10] sm:$0xff]
    %v3969 = vld [vmem:[#allocation17 + $0x18] sm:$0xff]
    %v3970 = vld [vmem:[#allocation17 + $0x20] sm:$0xff]
    %v3971 = vld [vmem:[#allocation17 + $0x28] sm:$0xff]
    %v3972 = vld [vmem:[#allocation17 + $0x30] sm:$0xff]
    %v3973 = vld [vmem:[#allocation17 + $0x38] sm:$0xff]
    %v3974 = vld [vmem:[#allocation17 + $0x40] sm:$0xff]
    %v3975 = vld [vmem:[#allocation17 + $0x48] sm:$0xff]
    %v3976 = vld [vmem:[#allocation17 + $0x50] sm:$0xff]
    %v3977 = vld [vmem:[#allocation17 + $0x58] sm:$0xff]
    %v3978 = vld [vmem:[#allocation17 + $0x60] sm:$0xff]
    %v3979 = vld [vmem:[#allocation17 + $0x68] sm:$0xff]
    %v3980 = vld [vmem:[#allocation17 + $0x70] sm:$0xff]
    %v3981 = vld [vmem:[#allocation17 + $0x78] sm:$0xff]
    %v3982 = vld [vmem:[%s11] sm:$0x1]
    %v3984 = vlaneseq
    %v3985 = vshrl.u32 %v3984, 7
    %v3986 = vsub.s32 0, %v3985
    %v3987 = vrot.slane %v3982, %v3986
    %3989 = vmatprep.subr.mxu0 0.0
    %3990 = vmatpush1.msra.mxu0 %v3966
    %3991 = vmatprep.subr.mxu0 0.0
    %3992 = vmatpush1.msra.mxu0 %v3967
    %3993 = vmatprep.subr.mxu0 0.0
    %3994 = vmatpush1.msra.mxu0 %v3968
    %3995 = vmatprep.subr.mxu0 0.0
    %3996 = vmatpush1.msra.mxu0 %v3969
    %3997 = vmatprep.subr.mxu0 0.0
    %3998 = vmatpush1.msra.mxu0 %v3970
    %3999 = vmatprep.subr.mxu0 0.0
    %4000 = vmatpush1.msra.mxu0 %v3971
    %4001 = vmatprep.subr.mxu0 0.0
    %4002 = vmatpush1.msra.mxu0 %v3972
    %4003 = vmatprep.subr.mxu0 0.0
    %4004 = vmatpush1.msra.mxu0 %v3973
    %4005 = vmatprep.subr.mxu0 0.0
    %4006 = vmatpush1.msra.mxu0 %v3974
    %4007 = vmatprep.subr.mxu0 0.0
    %4008 = vmatpush1.msra.mxu0 %v3975
    %4009 = vmatprep.subr.mxu0 0.0
    %4010 = vmatpush1.msra.mxu0 %v3976
    %4011 = vmatprep.subr.mxu0 0.0
    %4012 = vmatpush1.msra.mxu0 %v3977
    %4013 = vmatprep.subr.mxu0 0.0
    %4014 = vmatpush1.msra.mxu0 %v3978
    %4015 = vmatprep.subr.mxu0 0.0
    %4016 = vmatpush1.msra.mxu0 %v3979
    %4017 = vmatprep.subr.mxu0 0.0
    %4018 = vmatpush1.msra.mxu0 %v3980
    %4019 = vmatprep.subr.mxu0 0.0
    %4020 = vmatpush1.msra.mxu0 %v3981
    %4021 = vmatprep.subr.mxu0 0.0
    %4022 = vmatpush1.msra.mxu0 0.0
    %4023 = vmatprep.subr.mxu0 0.0
    %4024 = vmatpush1.msra.mxu0 0.0
    %4025 = vmatprep.subr.mxu0 0.0
    %4026 = vmatpush1.msra.mxu0 0.0
    %4027 = vmatprep.subr.mxu0 0.0
    %4028 = vmatpush1.msra.mxu0 0.0
    %4029 = vmatprep.subr.mxu0 0.0
    %4030 = vmatpush1.msra.mxu0 0.0
    %4031 = vmatprep.subr.mxu0 0.0
    %4032 = vmatpush1.msra.mxu0 0.0
    %4033 = vmatprep.subr.mxu0 0.0
    %4034 = vmatpush1.msra.mxu0 0.0
    %4035 = vmatprep.subr.mxu0 0.0
    %4036 = vmatpush1.msra.mxu0 0.0
    %4037 = vmatprep.subr.mxu0 0.0
    %4038 = vmatpush1.msra.mxu0 0.0
    %4039 = vmatprep.subr.mxu0 0.0
    %4040 = vmatpush1.msra.mxu0 0.0
    %4041 = vmatprep.subr.mxu0 0.0
    %4042 = vmatpush1.msra.mxu0 0.0
    %4043 = vmatprep.subr.mxu0 0.0
    %4044 = vmatpush1.msra.mxu0 0.0
    %4045 = vmatprep.subr.mxu0 0.0
    %4046 = vmatpush1.msra.mxu0 0.0
    %4047 = vmatprep.subr.mxu0 0.0
    %4048 = vmatpush1.msra.mxu0 0.0
    %4049 = vmatprep.subr.mxu0 0.0
    %4050 = vmatpush1.msra.mxu0 0.0
    %4051 = vmatprep.subr.mxu0 0.0
    %4052 = vmatpush1.msra.mxu0 0.0
    %4053 = vmatprep.mubr.f32.mxu0 0.0
    %4054 = vmatmul.mubr.f32.gmra.mrb[0].mxu0 %v3958
    %v4055 = vpop.f32.mrb[0].mxu0
    %v4056 = vadd.f32 %v3987, %v4055
    %v4057 = vpop.f32.mrb[0].mxu0
    %4058 = vmatprep.mubr.f32.mxu0 0.0
    %4059 = vmatmul.mubr.f32.gmra.mrb[0].mxu0 %v3959
    %v4060 = vpop.f32.mrb[0].mxu0
    %v4061 = vadd.f32 %v3987, %v4060
    %v4062 = vpop.f32.mrb[0].mxu0
    %4063 = vmatprep.mubr.f32.mxu0 0.0
    %4064 = vmatmul.mubr.f32.gmra.mrb[0].mxu0 %v3960
    %v4065 = vpop.f32.mrb[0].mxu0
    %v4066 = vadd.f32 %v3987, %v4065
    %v4067 = vpop.f32.mrb[0].mxu0
    %4068 = vmatprep.mubr.f32.mxu0 0.0
    %4069 = vmatmul.mubr.f32.gmra.mrb[0].mxu0 %v3961
    %v4070 = vpop.f32.mrb[0].mxu0
    %v4071 = vadd.f32 %v3987, %v4070
    %v4072 = vpop.f32.mrb[0].mxu0
    %4073 = vmatprep.mubr.f32.mxu0 0.0
    %4074 = vmatmul.mubr.f32.gmra.mrb[0].mxu0 %v3962
    %v4075 = vpop.f32.mrb[0].mxu0
    %v4076 = vadd.f32 %v3987, %v4075
    %v4077 = vpop.f32.mrb[0].mxu0
    %4078 = vmatprep.mubr.f32.mxu0 0.0
    %4079 = vmatmul.mubr.f32.gmra.mrb[0].mxu0 %v3963
    %v4080 = vpop.f32.mrb[0].mxu0
    %v4081 = vadd.f32 %v3987, %v4080
    %v4082 = vpop.f32.mrb[0].mxu0
    %4083 = vmatprep.mubr.f32.mxu0 0.0
    %4084 = vmatmul.mubr.f32.gmra.mrb[0].mxu0 %v3964
    %v4085 = vpop.f32.mrb[0].mxu0
    %v4086 = vadd.f32 %v3987, %v4085
    %v4087 = vpop.f32.mrb[0].mxu0
    %4088 = vmatprep.mubr.f32.mxu0 0.0
    %4089 = vmatmul.mubr.f32.gmra.mrb[0].mxu0 %v3965
    %v4090 = vpop.f32.mrb[0].mxu0
    %v4091 = vadd.f32 %v3987, %v4090
    %v4092 = vpop.f32.mrb[0].mxu0
    %4093 = vdwg.mxu0
    %4094 = vst [vmem:[#allocation19] sm:$0xff] %v4056
    %4095 = vst [vmem:[#allocation19 + $0x8] sm:$0xff] %v4061
    %4096 = vst [vmem:[#allocation19 + $0x10] sm:$0xff] %v4066
    %4097 = vst [vmem:[#allocation19 + $0x18] sm:$0xff] %v4071
    %4098 = vst [vmem:[#allocation19 + $0x20] sm:$0xff] %v4076
    %4099 = vst [vmem:[#allocation19 + $0x28] sm:$0xff] %v4081
    %4100 = vst [vmem:[#allocation19 + $0x30] sm:$0xff] %v4086
    %4101 = vst [vmem:[#allocation19 + $0x38] sm:$0xff] %v4091
    // Predicated region
    $region82: #{tpu_custom_call.1} parent=1 // pred_check
      _
    $region83: #{tpu_custom_call.1} parent=1 // pred_check_branch
      %4103 = sbr.rel (0) target = $region85
    $region84: #{tpu_custom_call.1} parent=1 // pred_region
      %s4105 = ssub.s32 1024, 1024
      %4106 = vsyncadd [#allocation7], %s4105
      %s4107 = sshll.u32 [#allocation19], 4
      %s4108 = int_to_ptr.vmem [resolvable:$true] %s4107
      %4113 = dma.vmem_to_hbm [thread:$0]  %s4108, 1024, %s12, [#allocation7], 128, 128, 8
    $region85: #{tpu_custom_call.1} parent=1 // pred_fallthru
      _
    // Predicated region
    $region86: #{tpu_custom_call.1} parent=1 // pred_check
      _
    $region87: #{tpu_custom_call.1} parent=1 // pred_check_branch
      %4115 = sbr.rel (0) target = $region89
    $region88: #{tpu_custom_call.1} parent=1 // pred_region
      %4116 = dma.done [#allocation7], 1024
    $region89: #{tpu_custom_call.1} parent=1 // pred_fallthru
      _
    %4117 = vsyncpa [#allocation6], 1
    %4118 = vsyncpa [#allocation9], 1
    %4119 = vsyncpa [#allocation12], 1
    %4120 = vsyncpa [#allocation15], 1
    %4121 = vsyncpa [#allocation18], 1
    %4122 = vsyncpa [#allocation7], 1

</llo_original>
